<compile_context>
chip_gen: v6e
topology: v6e:2x2x1
jax: 0.10.0
libtpu: 0.0.40
codegen_flags: <defaults>
</compile_context>

<pallas_src>
import numpy as np
import jax
import jax.numpy as jnp
from jax import lax
from jax.experimental import pallas as pl
from jax.experimental.pallas import tpu as pltpu

# ----------------------------- configuration --------------------------------
D_MODEL = 32
N_HEAD = 4
D_K = 8
D_V = 8
D_FF = 64
N_LAYERS = 2
BATCH = 2
MAX_NODES = 8     # seq length (max nodes per graph)
VOCAB = 10        # number of node types (grammar size), id 0 == PAD
LN_EPS = 1e-5
NEG_INF = -1e9
BS = BATCH * MAX_NODES   # fused "rows" dimension (all graphs stacked)

# dot_general dimension numbers (forms proven to lower on Mosaic)
TN = (((0,), (0,)), ((), ()))   # contract first dims : lhs^T @ rhs
NT = (((1,), (1,)), ((), ()))   # contract last dims  : lhs @ rhs^T


# ------------------------------ Pallas kernel --------------------------------
def fused_graph_encoder_kernel(
    ids_ref,     # (BS, 1)       int32 node-type ids (0 == PAD), graphs stacked
    embed_ref,   # (VOCAB, D)    node-type embedding table
    bias_ref,    # (BS, BS)      precomputed block-diag + key-pad additive bias
    wqkvT_ref,   # (L, 3D, D)    fused QKV weights, pre-transposed
    bqkv_ref,    # (L, 3D, 1)    fused QKV bias as a column
    w1_ref,      # (L, D, D_FF)  FFN first linear
    ow2_ref,     # (L, D+D_FF, D) rows [0:D) = Wo, rows [D:) = W2
    vec_ref,     # (L, 7, D_FF)  rows = [b1, bo, ln1_g, ln1_b, b2, ln2_g, ln2_b]
    o_ref,       # (BS, D)       output activations
):
    n = ids_ref.shape[0]

    # ---- GraphEmbedder: gather as a one-hot MXU matmul + in-kernel masks ----
    ids = ids_ref[...]                                           # (BS, 1)
    npad = (ids != 0).astype(jnp.float32)                        # (BS, 1)
    vocab_iota = lax.broadcasted_iota(jnp.int32, (n, VOCAB), 1)
    one_hot = (ids == vocab_iota).astype(jnp.float32)            # (BS, VOCAB)
    x = jnp.dot(one_hot, embed_ref[...],
                preferred_element_type=jnp.float32)              # (BS, D)
    x = x * npad                                                 # zero PAD rows

    bias = bias_ref[...]                                         # (BS, BS)
    scale = np.float32(1.0 / np.sqrt(D_K))

    for l in range(N_LAYERS):            # static unroll; x stays VMEM-resident
        # ---- fused QKV projection, produced transposed: (3D, BS) -----------
        qkvT = lax.dot_general(wqkvT_ref[l], x, NT,
                               preferred_element_type=jnp.float32)
        qkvT = qkvT + bqkv_ref[l]        # (3D, 1) column broadcast over lanes

        ow2 = ow2_ref[l]                 # (D + D_FF, D)
        wo = ow2[:D_MODEL, :]            # (D, D)     sublane slice (free)
        vec = vec_ref[l]                 # (7, D_FF)
        b1 = vec[0:1, :]                 # (1, D_FF)
        bo = vec[1:2, :D_MODEL]
        ln1_g = vec[2:3, :D_MODEL]
        ln1_b = vec[3:4, :D_MODEL]

        # ---- multi-head attention: all head slices sublane-aligned ---------
        attn = None
        for h in range(N_HEAD):
            qhT = qkvT[h * D_K:(h + 1) * D_K, :]                          # (D_K, BS)
            khT = qkvT[D_MODEL + h * D_K:D_MODEL + (h + 1) * D_K, :]      # (D_K, BS)
            vhT = qkvT[2 * D_MODEL + h * D_V:2 * D_MODEL + (h + 1) * D_V, :]
            logits = lax.dot_general(qhT, khT, TN,
                                     preferred_element_type=jnp.float32)
            logits = logits * scale + bias                                # (BS, BS)
            m = jnp.max(logits, axis=-1, keepdims=True)
            e = jnp.exp(logits - m)
            p = e * pl.reciprocal(jnp.sum(e, axis=-1, keepdims=True), approx=True)
            pv = lax.dot_general(p, vhT, NT,
                                 preferred_element_type=jnp.float32)      # (BS, D_V)
            contrib = jnp.dot(pv, wo[h * D_V:(h + 1) * D_V, :],
                              preferred_element_type=jnp.float32)         # (BS, D)
            attn = contrib if attn is None else attn + contrib
        attn = attn + bo

        # ---- residual + post-LN + non-pad masking ---------------------------
        y = attn + x
        mu = jnp.mean(y, axis=-1, keepdims=True)
        var = jnp.mean((y - mu) ** 2, axis=-1, keepdims=True)
        y = (y - mu) * lax.rsqrt(var + LN_EPS)
        y = y * ln1_g + ln1_b
        y = y * npad

        # ---- position-wise feed-forward -------------------------------------
        w2 = ow2[D_MODEL:, :]            # (D_FF, D)  sublane slice (free)
        b2 = vec[4:5, :D_MODEL]
        ln2_g = vec[5:6, :D_MODEL]
        ln2_b = vec[6:7, :D_MODEL]

        h1 = jnp.dot(y, w1_ref[l], preferred_element_type=jnp.float32) + b1
        h1 = jnp.maximum(h1, 0.0)
        h2 = jnp.dot(h1, w2, preferred_element_type=jnp.float32) + b2

        z = h2 + y
        mu2 = jnp.mean(z, axis=-1, keepdims=True)
        var2 = jnp.mean((z - mu2) ** 2, axis=-1, keepdims=True)
        z = (z - mu2) * lax.rsqrt(var2 + LN_EPS)
        z = z * ln2_g + ln2_b
        x = z * npad

    o_ref[...] = x


def _full_spec(shape):
    """BlockSpec passing the whole array (block == full array)."""
    nd = len(shape)
    return pl.BlockSpec(shape, lambda i, _nd=nd: (0,) * _nd)


# --------------------------- parameter packing --------------------------------
def pack_params(layers):
    """Pack the 16 per-layer params into 5 stacked buffers (leading layer axis)."""
    wqkvT, bqkv, w1, ow2, vec = [], [], [], [], []
    for (wq, bq, wk, bk, wv, bv, wo_, bo,
         ln1_g, ln1_b, w1_, b1_, w2_, b2, ln2_g, ln2_b) in layers:
        wqkvT.append(jnp.concatenate([wq, wk, wv], axis=1).T)        # (3D, D)
        bqkv.append(jnp.concatenate([bq, bk, bv], axis=1).T)         # (3D, 1)
        w1.append(w1_)                                               # (D, D_FF)
        ow2.append(jnp.concatenate([wo_, w2_], axis=0))              # (D+D_FF, D)
        pad = lambda r: jnp.pad(r, ((0, 0), (0, D_FF - r.shape[1])))
        vec.append(jnp.concatenate(
            [b1_, pad(bo), pad(ln1_g), pad(ln1_b),
             pad(b2), pad(ln2_g), pad(ln2_b)], axis=0))              # (7, D_FF)
    return (jnp.stack(wqkvT), jnp.stack(bqkv), jnp.stack(w1),
            jnp.stack(ow2), jnp.stack(vec))


# ------------------------------ glue / wrapper --------------------------------
def graph_encoder_forward(node_ids, embed, layers):
    """node_ids: (B, S) int32, 0 == PAD. Returns (B, S, D_MODEL) float32."""
    B, S = node_ids.shape
    n = B * S
    ids = node_ids.reshape(n, 1).astype(jnp.int32)

    # Block-diagonal + key-padding additive bias (BS, BS).  The graph-block
    # structure is a compile-time constant; only the key-valid AND depends on
    # data.  1 KB input; replaces any in-kernel mask construction.
    block = np.kron(np.eye(B, dtype=np.bool_), np.ones((S, S), dtype=np.bool_))
    key_ok = (node_ids != 0).reshape(1, n)
    allowed = jnp.logical_and(jnp.asarray(block), key_ok)
    bias = jnp.where(allowed, 0.0, NEG_INF).astype(jnp.float32)

    packed = pack_params(layers)
    inputs = (ids, embed.astype(jnp.float32), bias) + packed

    out = pl.pallas_call(
        fused_graph_encoder_kernel,
        out_shape=jax.ShapeDtypeStruct((n, D_MODEL), jnp.float32),
        grid=(1,),                                   # single fused program
        in_specs=[_full_spec(a.shape) for a in inputs],
        out_specs=_full_spec((n, D_MODEL)),
        compiler_params=pltpu.CompilerParams(dimension_semantics=("arbitrary",)),
    )(*inputs)
    return out.reshape(B, S, D_MODEL)


# --------------------------- parameter init -----------------------------------
def init_params(key):
    """Deterministic parameter init (shapes follow the PyTorch module)."""
    ks = jax.random.split(key, 64)
    it = iter(range(64))

    def nrm(k, shape, scale=0.02):
        return (scale * jax.random.normal(k, shape)).astype(jnp.float32)

    embed = nrm(ks[next(it)], (VOCAB, D_MODEL), 0.1)

    layers = []
    for _ in range(N_LAYERS):
        wq = nrm(ks[next(it)], (D_MODEL, N_HEAD * D_K)); bq = nrm(ks[next(it)], (1, N_HEAD * D_K), 0.01)
        wk = nrm(ks[next(it)], (D_MODEL, N_HEAD * D_K)); bk = nrm(ks[next(it)], (1, N_HEAD * D_K), 0.01)
        wv = nrm(ks[next(it)], (D_MODEL, N_HEAD * D_V)); bv = nrm(ks[next(it)], (1, N_HEAD * D_V), 0.01)
        wo = nrm(ks[next(it)], (N_HEAD * D_V, D_MODEL)); bo = nrm(ks[next(it)], (1, D_MODEL), 0.01)
        ln1_g = 1.0 + nrm(ks[next(it)], (1, D_MODEL), 0.05)
        ln1_b = nrm(ks[next(it)], (1, D_MODEL), 0.01)
        w1 = nrm(ks[next(it)], (D_MODEL, D_FF)); b1 = nrm(ks[next(it)], (1, D_FF), 0.01)
        w2 = nrm(ks[next(it)], (D_FF, D_MODEL)); b2 = nrm(ks[next(it)], (1, D_MODEL), 0.01)
        ln2_g = 1.0 + nrm(ks[next(it)], (1, D_MODEL), 0.05)
        ln2_b = nrm(ks[next(it)], (1, D_MODEL), 0.01)
        layers.append((wq, bq, wk, bk, wv, bv, wo, bo,
                       ln1_g, ln1_b, w1, b1, w2, b2, ln2_g, ln2_b))
    return embed, layers


# ----------------------------- pure-JAX reference -----------------------------
def _reference_layer(x, attn_bias, non_pad, params):
    (wq, bq, wk, bk, wv, bv, wo, bo,
     ln1_g, ln1_b, w1, b1, w2, b2, ln2_g, ln2_b) = params
    B, S, D = x.shape
    q = x @ wq + bq; k = x @ wk + bk; v = x @ wv + bv
    q = q.reshape(B, S, N_HEAD, D_K).transpose(0, 2, 1, 3)
    k = k.reshape(B, S, N_HEAD, D_K).transpose(0, 2, 1, 3)
    v = v.reshape(B, S, N_HEAD, D_V).transpose(0, 2, 1, 3)
    logits = jnp.einsum('bhqd,bhkd->bhqk', q, k) / np.sqrt(D_K) + attn_bias[:, None]
    p = jax.nn.softmax(logits, axis=-1)
    attn = jnp.einsum('bhqk,bhkd->bhqd', p, v).transpose(0, 2, 1, 3).reshape(B, S, -1)
    attn = attn @ wo + bo
    y = attn + x
    y = (y - y.mean(-1, keepdims=True)) * jax.lax.rsqrt(y.var(-1, keepdims=True) + LN_EPS)
    y = y * ln1_g + ln1_b
    y = y * non_pad
    h = jnp.maximum(y @ w1 + b1, 0.0) @ w2 + b2
    z = h + y
    z = (z - z.mean(-1, keepdims=True)) * jax.lax.rsqrt(z.var(-1, keepdims=True) + LN_EPS)
    z = z * ln2_g + ln2_b
    return z * non_pad


def reference_forward(node_ids, embed, layers):
    B, S = node_ids.shape
    x = jnp.take(embed, node_ids, axis=0).astype(jnp.float32)
    valid = (node_ids != 0).astype(jnp.float32)
    non_pad = valid[:, :, None]
    attn_bias = jnp.broadcast_to((1.0 - valid)[:, None, :] * NEG_INF,
                                 (B, S, S)).astype(jnp.float32)
    x = x * non_pad
    for params in layers:
        x = _reference_layer(x, attn_bias, non_pad, params)
    return x


# ---------------------------------- main --------------------------------------
if __name__ == "__main__":
    key = jax.random.PRNGKey(0)
    k_param, k_ids = jax.random.split(key)

    embed, layers = init_params(k_param)

    # synthetic "graphs": node-type ids per graph, 0 == PAD; graph 1 has 5 nodes
    node_ids = jax.random.randint(k_ids, (BATCH, MAX_NODES), 1, VOCAB, dtype=jnp.int32)
    pad_pos = jnp.arange(MAX_NODES)[None, :] >= jnp.array([MAX_NODES, 5])[:, None]
    node_ids = jnp.where(pad_pos, 0, node_ids)

    out = graph_encoder_forward(node_ids, embed, layers)
    out = jax.block_until_ready(out)

    ref = reference_forward(node_ids, embed, layers)
    # approx reciprocal in the softmax denominator adds a tiny (<~1e-5 rel)
    # deviation vs. the exact-division reference.
    np.testing.assert_allclose(np.asarray(out), np.asarray(ref), atol=3e-4, rtol=3e-4)
    assert out.shape == (BATCH, MAX_NODES, D_MODEL) and out.dtype == jnp.float32

    print("KERNEL_OK")
</pallas_src>

<mosaic_0001>
module attributes {stable_mosaic.version = 11 : i64} {
  func.func @fused_graph_encoder_kernel(%arg0: i32, %arg1: memref<16x1xi32, #tpu.memory_space<vmem>>, %arg2: memref<10x32xf32, #tpu.memory_space<vmem>>, %arg3: memref<16x16xf32, #tpu.memory_space<vmem>>, %arg4: memref<2x96x32xf32, #tpu.memory_space<vmem>>, %arg5: memref<2x96x1xf32, #tpu.memory_space<vmem>>, %arg6: memref<2x32x64xf32, #tpu.memory_space<vmem>>, %arg7: memref<2x96x32xf32, #tpu.memory_space<vmem>>, %arg8: memref<2x7x64xf32, #tpu.memory_space<vmem>>, %arg9: memref<16x32xf32, #tpu.memory_space<vmem>>) attributes {dimension_semantics = [#tpu.dimension_semantics<arbitrary>], iteration_bounds = array<i64: 1>, scalar_prefetch = 0 : i64, scratch_operands = 0 : i64, tpu.core_type = #tpu.core_type<tc>, window_params = [{pipeline_mode = #tpu.pipeline_mode<synchronous>, transform_indices = @transform_0, window_bounds = array<i64: 16, 1>}, {pipeline_mode = #tpu.pipeline_mode<synchronous>, transform_indices = @transform_1, window_bounds = array<i64: 10, 32>}, {pipeline_mode = #tpu.pipeline_mode<synchronous>, transform_indices = @transform_2, window_bounds = array<i64: 16, 16>}, {pipeline_mode = #tpu.pipeline_mode<synchronous>, transform_indices = @transform_3, window_bounds = array<i64: 2, 96, 32>}, {pipeline_mode = #tpu.pipeline_mode<synchronous>, transform_indices = @transform_4, window_bounds = array<i64: 2, 96, 1>}, {pipeline_mode = #tpu.pipeline_mode<synchronous>, transform_indices = @transform_5, window_bounds = array<i64: 2, 32, 64>}, {pipeline_mode = #tpu.pipeline_mode<synchronous>, transform_indices = @transform_6, window_bounds = array<i64: 2, 96, 32>}, {pipeline_mode = #tpu.pipeline_mode<synchronous>, transform_indices = @transform_7, window_bounds = array<i64: 2, 7, 64>}, {pipeline_mode = #tpu.pipeline_mode<synchronous>, transform_indices = @transform_8, window_bounds = array<i64: 16, 32>}]} {
    %c0 = arith.constant 0 : index
    %c0_0 = arith.constant 0 : index
    %0 = vector.load %arg1[%c0, %c0_0] : memref<16x1xi32, #tpu.memory_space<vmem>>, vector<16x1xi32>
    %c0_i32 = arith.constant 0 : i32
    %1 = vector.broadcast %c0_i32 : i32 to vector<16x1xi32>
    %2 = arith.cmpi ne, %0, %1 : vector<16x1xi32>
    %3 = arith.extui %2 : vector<16x1xi1> to vector<16x1xi32>
    %4 = arith.sitofp %3 : vector<16x1xi32> to vector<16x1xf32>
    %5 = tpu.iota {dimensions = array<i32: 1>} : vector<16x10xi32>
    %6 = vector.broadcast %0 : vector<16x1xi32> to vector<16x10xi32>
    %7 = arith.cmpi eq, %6, %5 : vector<16x10xi32>
    %8 = arith.extui %7 : vector<16x10xi1> to vector<16x10xi32>
    %9 = arith.sitofp %8 : vector<16x10xi32> to vector<16x10xf32>
    %c0_1 = arith.constant 0 : index
    %c0_2 = arith.constant 0 : index
    %10 = vector.load %arg2[%c0_1, %c0_2] : memref<10x32xf32, #tpu.memory_space<vmem>>, vector<10x32xf32>
    %cst = arith.constant dense<0.000000e+00> : vector<16x32xf32>
    %11 = tpu.matmul %9, %10, %cst {dimension_numbers = #tpu.dot_dimension_numbers<[1], [0], [0], [1], [0, 0, 1, 1], [], []>} : vector<16x10xf32>, vector<10x32xf32>, vector<16x32xf32> -> vector<16x32xf32>
    %12 = vector.broadcast %4 : vector<16x1xf32> to vector<16x32xf32>
    %13 = arith.mulf %11, %12 : vector<16x32xf32>
    %c0_3 = arith.constant 0 : index
    %c0_4 = arith.constant 0 : index
    %14 = vector.load %arg3[%c0_3, %c0_4] : memref<16x16xf32, #tpu.memory_space<vmem>>, vector<16x16xf32>
    %c0_5 = arith.constant 0 : index
    %c0_6 = arith.constant 0 : index
    %c0_7 = arith.constant 0 : index
    %15 = vector.load %arg4[%c0_5, %c0_6, %c0_7] : memref<2x96x32xf32, #tpu.memory_space<vmem>>, vector<1x96x32xf32>
    %16 = vector.shape_cast %15 : vector<1x96x32xf32> to vector<96x32xf32>
    %cst_8 = arith.constant dense<0.000000e+00> : vector<96x16xf32>
    %17 = tpu.matmul %16, %13, %cst_8 {dimension_numbers = #tpu.dot_dimension_numbers<[1], [1], [0], [0], [0, 0, 1, 0], [], []>} : vector<96x32xf32>, vector<16x32xf32>, vector<96x16xf32> -> vector<96x16xf32>
    %c0_9 = arith.constant 0 : index
    %c0_10 = arith.constant 0 : index
    %c0_11 = arith.constant 0 : index
    %18 = vector.load %arg5[%c0_9, %c0_10, %c0_11] : memref<2x96x1xf32, #tpu.memory_space<vmem>>, vector<1x96x1xf32>
    %19 = vector.shape_cast %18 : vector<1x96x1xf32> to vector<96x1xf32>
    %20 = vector.broadcast %19 : vector<96x1xf32> to vector<96x16xf32>
    %21 = arith.addf %17, %20 : vector<96x16xf32>
    %c0_12 = arith.constant 0 : index
    %c0_13 = arith.constant 0 : index
    %c0_14 = arith.constant 0 : index
    %22 = vector.load %arg7[%c0_12, %c0_13, %c0_14] : memref<2x96x32xf32, #tpu.memory_space<vmem>>, vector<1x96x32xf32>
    %23 = vector.shape_cast %22 : vector<1x96x32xf32> to vector<96x32xf32>
    %24 = vector.extract_strided_slice %23 {offsets = [0, 0], sizes = [32, 32], strides = [1, 1]} : vector<96x32xf32> to vector<32x32xf32>
    %c0_15 = arith.constant 0 : index
    %c0_16 = arith.constant 0 : index
    %c0_17 = arith.constant 0 : index
    %25 = vector.load %arg8[%c0_15, %c0_16, %c0_17] : memref<2x7x64xf32, #tpu.memory_space<vmem>>, vector<1x7x64xf32>
    %26 = vector.shape_cast %25 : vector<1x7x64xf32> to vector<7x64xf32>
    %27 = vector.extract_strided_slice %26 {offsets = [0, 0], sizes = [1, 64], strides = [1, 1]} : vector<7x64xf32> to vector<1x64xf32>
    %28 = vector.extract_strided_slice %26 {offsets = [1, 0], sizes = [1, 32], strides = [1, 1]} : vector<7x64xf32> to vector<1x32xf32>
    %29 = vector.extract_strided_slice %26 {offsets = [2, 0], sizes = [1, 32], strides = [1, 1]} : vector<7x64xf32> to vector<1x32xf32>
    %30 = vector.extract_strided_slice %26 {offsets = [3, 0], sizes = [1, 32], strides = [1, 1]} : vector<7x64xf32> to vector<1x32xf32>
    %31 = vector.extract_strided_slice %21 {offsets = [0, 0], sizes = [8, 16], strides = [1, 1]} : vector<96x16xf32> to vector<8x16xf32>
    %32 = vector.extract_strided_slice %21 {offsets = [32, 0], sizes = [8, 16], strides = [1, 1]} : vector<96x16xf32> to vector<8x16xf32>
    %33 = vector.extract_strided_slice %21 {offsets = [64, 0], sizes = [8, 16], strides = [1, 1]} : vector<96x16xf32> to vector<8x16xf32>
    %cst_18 = arith.constant dense<0.000000e+00> : vector<16x16xf32>
    %34 = tpu.matmul %31, %32, %cst_18 {dimension_numbers = #tpu.dot_dimension_numbers<[0], [0], [1], [1], [0, 1, 1, 1], [], []>} : vector<8x16xf32>, vector<8x16xf32>, vector<16x16xf32> -> vector<16x16xf32>
    %cst_19 = arith.constant 0.353553385 : f32
    %35 = vector.broadcast %cst_19 : f32 to vector<16x16xf32>
    %36 = arith.mulf %34, %35 : vector<16x16xf32>
    %37 = arith.addf %36, %14 : vector<16x16xf32>
    %cst_20 = arith.constant dense<0xFF800000> : vector<16xf32>
    %38 = vector.multi_reduction <maximumf>, %37, %cst_20 [1] : vector<16x16xf32> to vector<16xf32>
    %39 = vector.shape_cast %38 : vector<16xf32> to vector<16x1xf32>
    %40 = vector.broadcast %39 : vector<16x1xf32> to vector<16x16xf32>
    %41 = arith.subf %37, %40 : vector<16x16xf32>
    %42 = math.exp %41 : vector<16x16xf32>
    %cst_21 = arith.constant dense<0.000000e+00> : vector<16xf32>
    %43 = vector.multi_reduction <add>, %42, %cst_21 [1] : vector<16x16xf32> to vector<16xf32>
    %44 = vector.shape_cast %43 : vector<16xf32> to vector<16x1xf32>
    %45 = tpu.reciprocal %44 {approx = true} : vector<16x1xf32> -> vector<16x1xf32>
    %46 = vector.broadcast %45 : vector<16x1xf32> to vector<16x16xf32>
    %47 = arith.mulf %42, %46 : vector<16x16xf32>
    %cst_22 = arith.constant dense<0.000000e+00> : vector<16x8xf32>
    %48 = tpu.matmul %47, %33, %cst_22 {dimension_numbers = #tpu.dot_dimension_numbers<[1], [1], [0], [0], [0, 0, 1, 0], [], []>} : vector<16x16xf32>, vector<8x16xf32>, vector<16x8xf32> -> vector<16x8xf32>
    %49 = vector.extract_strided_slice %24 {offsets = [0, 0], sizes = [8, 32], strides = [1, 1]} : vector<32x32xf32> to vector<8x32xf32>
    %cst_23 = arith.constant dense<0.000000e+00> : vector<16x32xf32>
    %50 = tpu.matmul %48, %49, %cst_23 {dimension_numbers = #tpu.dot_dimension_numbers<[1], [0], [0], [1], [0, 0, 1, 1], [], []>} : vector<16x8xf32>, vector<8x32xf32>, vector<16x32xf32> -> vector<16x32xf32>
    %51 = vector.extract_strided_slice %21 {offsets = [8, 0], sizes = [8, 16], strides = [1, 1]} : vector<96x16xf32> to vector<8x16xf32>
    %52 = vector.extract_strided_slice %21 {offsets = [40, 0], sizes = [8, 16], strides = [1, 1]} : vector<96x16xf32> to vector<8x16xf32>
    %53 = vector.extract_strided_slice %21 {offsets = [72, 0], sizes = [8, 16], strides = [1, 1]} : vector<96x16xf32> to vector<8x16xf32>
    %cst_24 = arith.constant dense<0.000000e+00> : vector<16x16xf32>
    %54 = tpu.matmul %51, %52, %cst_24 {dimension_numbers = #tpu.dot_dimension_numbers<[0], [0], [1], [1], [0, 1, 1, 1], [], []>} : vector<8x16xf32>, vector<8x16xf32>, vector<16x16xf32> -> vector<16x16xf32>
    %cst_25 = arith.constant 0.353553385 : f32
    %55 = vector.broadcast %cst_25 : f32 to vector<16x16xf32>
    %56 = arith.mulf %54, %55 : vector<16x16xf32>
    %57 = arith.addf %56, %14 : vector<16x16xf32>
    %cst_26 = arith.constant dense<0xFF800000> : vector<16xf32>
    %58 = vector.multi_reduction <maximumf>, %57, %cst_26 [1] : vector<16x16xf32> to vector<16xf32>
    %59 = vector.shape_cast %58 : vector<16xf32> to vector<16x1xf32>
    %60 = vector.broadcast %59 : vector<16x1xf32> to vector<16x16xf32>
    %61 = arith.subf %57, %60 : vector<16x16xf32>
    %62 = math.exp %61 : vector<16x16xf32>
    %cst_27 = arith.constant dense<0.000000e+00> : vector<16xf32>
    %63 = vector.multi_reduction <add>, %62, %cst_27 [1] : vector<16x16xf32> to vector<16xf32>
    %64 = vector.shape_cast %63 : vector<16xf32> to vector<16x1xf32>
    %65 = tpu.reciprocal %64 {approx = true} : vector<16x1xf32> -> vector<16x1xf32>
    %66 = vector.broadcast %65 : vector<16x1xf32> to vector<16x16xf32>
    %67 = arith.mulf %62, %66 : vector<16x16xf32>
    %cst_28 = arith.constant dense<0.000000e+00> : vector<16x8xf32>
    %68 = tpu.matmul %67, %53, %cst_28 {dimension_numbers = #tpu.dot_dimension_numbers<[1], [1], [0], [0], [0, 0, 1, 0], [], []>} : vector<16x16xf32>, vector<8x16xf32>, vector<16x8xf32> -> vector<16x8xf32>
    %69 = vector.extract_strided_slice %24 {offsets = [8, 0], sizes = [8, 32], strides = [1, 1]} : vector<32x32xf32> to vector<8x32xf32>
    %cst_29 = arith.constant dense<0.000000e+00> : vector<16x32xf32>
    %70 = tpu.matmul %68, %69, %cst_29 {dimension_numbers = #tpu.dot_dimension_numbers<[1], [0], [0], [1], [0, 0, 1, 1], [], []>} : vector<16x8xf32>, vector<8x32xf32>, vector<16x32xf32> -> vector<16x32xf32>
    %71 = arith.addf %50, %70 : vector<16x32xf32>
    %72 = vector.extract_strided_slice %21 {offsets = [16, 0], sizes = [8, 16], strides = [1, 1]} : vector<96x16xf32> to vector<8x16xf32>
    %73 = vector.extract_strided_slice %21 {offsets = [48, 0], sizes = [8, 16], strides = [1, 1]} : vector<96x16xf32> to vector<8x16xf32>
    %74 = vector.extract_strided_slice %21 {offsets = [80, 0], sizes = [8, 16], strides = [1, 1]} : vector<96x16xf32> to vector<8x16xf32>
    %cst_30 = arith.constant dense<0.000000e+00> : vector<16x16xf32>
    %75 = tpu.matmul %72, %73, %cst_30 {dimension_numbers = #tpu.dot_dimension_numbers<[0], [0], [1], [1], [0, 1, 1, 1], [], []>} : vector<8x16xf32>, vector<8x16xf32>, vector<16x16xf32> -> vector<16x16xf32>
    %cst_31 = arith.constant 0.353553385 : f32
    %76 = vector.broadcast %cst_31 : f32 to vector<16x16xf32>
    %77 = arith.mulf %75, %76 : vector<16x16xf32>
    %78 = arith.addf %77, %14 : vector<16x16xf32>
    %cst_32 = arith.constant dense<0xFF800000> : vector<16xf32>
    %79 = vector.multi_reduction <maximumf>, %78, %cst_32 [1] : vector<16x16xf32> to vector<16xf32>
    %80 = vector.shape_cast %79 : vector<16xf32> to vector<16x1xf32>
    %81 = vector.broadcast %80 : vector<16x1xf32> to vector<16x16xf32>
    %82 = arith.subf %78, %81 : vector<16x16xf32>
    %83 = math.exp %82 : vector<16x16xf32>
    %cst_33 = arith.constant dense<0.000000e+00> : vector<16xf32>
    %84 = vector.multi_reduction <add>, %83, %cst_33 [1] : vector<16x16xf32> to vector<16xf32>
    %85 = vector.shape_cast %84 : vector<16xf32> to vector<16x1xf32>
    %86 = tpu.reciprocal %85 {approx = true} : vector<16x1xf32> -> vector<16x1xf32>
    %87 = vector.broadcast %86 : vector<16x1xf32> to vector<16x16xf32>
    %88 = arith.mulf %83, %87 : vector<16x16xf32>
    %cst_34 = arith.constant dense<0.000000e+00> : vector<16x8xf32>
    %89 = tpu.matmul %88, %74, %cst_34 {dimension_numbers = #tpu.dot_dimension_numbers<[1], [1], [0], [0], [0, 0, 1, 0], [], []>} : vector<16x16xf32>, vector<8x16xf32>, vector<16x8xf32> -> vector<16x8xf32>
    %90 = vector.extract_strided_slice %24 {offsets = [16, 0], sizes = [8, 32], strides = [1, 1]} : vector<32x32xf32> to vector<8x32xf32>
    %cst_35 = arith.constant dense<0.000000e+00> : vector<16x32xf32>
    %91 = tpu.matmul %89, %90, %cst_35 {dimension_numbers = #tpu.dot_dimension_numbers<[1], [0], [0], [1], [0, 0, 1, 1], [], []>} : vector<16x8xf32>, vector<8x32xf32>, vector<16x32xf32> -> vector<16x32xf32>
    %92 = arith.addf %71, %91 : vector<16x32xf32>
    %93 = vector.extract_strided_slice %21 {offsets = [24, 0], sizes = [8, 16], strides = [1, 1]} : vector<96x16xf32> to vector<8x16xf32>
    %94 = vector.extract_strided_slice %21 {offsets = [56, 0], sizes = [8, 16], strides = [1, 1]} : vector<96x16xf32> to vector<8x16xf32>
    %95 = vector.extract_strided_slice %21 {offsets = [88, 0], sizes = [8, 16], strides = [1, 1]} : vector<96x16xf32> to vector<8x16xf32>
    %cst_36 = arith.constant dense<0.000000e+00> : vector<16x16xf32>
    %96 = tpu.matmul %93, %94, %cst_36 {dimension_numbers = #tpu.dot_dimension_numbers<[0], [0], [1], [1], [0, 1, 1, 1], [], []>} : vector<8x16xf32>, vector<8x16xf32>, vector<16x16xf32> -> vector<16x16xf32>
    %cst_37 = arith.constant 0.353553385 : f32
    %97 = vector.broadcast %cst_37 : f32 to vector<16x16xf32>
    %98 = arith.mulf %96, %97 : vector<16x16xf32>
    %99 = arith.addf %98, %14 : vector<16x16xf32>
    %cst_38 = arith.constant dense<0xFF800000> : vector<16xf32>
    %100 = vector.multi_reduction <maximumf>, %99, %cst_38 [1] : vector<16x16xf32> to vector<16xf32>
    %101 = vector.shape_cast %100 : vector<16xf32> to vector<16x1xf32>
    %102 = vector.broadcast %101 : vector<16x1xf32> to vector<16x16xf32>
    %103 = arith.subf %99, %102 : vector<16x16xf32>
    %104 = math.exp %103 : vector<16x16xf32>
    %cst_39 = arith.constant dense<0.000000e+00> : vector<16xf32>
    %105 = vector.multi_reduction <add>, %104, %cst_39 [1] : vector<16x16xf32> to vector<16xf32>
    %106 = vector.shape_cast %105 : vector<16xf32> to vector<16x1xf32>
    %107 = tpu.reciprocal %106 {approx = true} : vector<16x1xf32> -> vector<16x1xf32>
    %108 = vector.broadcast %107 : vector<16x1xf32> to vector<16x16xf32>
    %109 = arith.mulf %104, %108 : vector<16x16xf32>
    %cst_40 = arith.constant dense<0.000000e+00> : vector<16x8xf32>
    %110 = tpu.matmul %109, %95, %cst_40 {dimension_numbers = #tpu.dot_dimension_numbers<[1], [1], [0], [0], [0, 0, 1, 0], [], []>} : vector<16x16xf32>, vector<8x16xf32>, vector<16x8xf32> -> vector<16x8xf32>
    %111 = vector.extract_strided_slice %24 {offsets = [24, 0], sizes = [8, 32], strides = [1, 1]} : vector<32x32xf32> to vector<8x32xf32>
    %cst_41 = arith.constant dense<0.000000e+00> : vector<16x32xf32>
    %112 = tpu.matmul %110, %111, %cst_41 {dimension_numbers = #tpu.dot_dimension_numbers<[1], [0], [0], [1], [0, 0, 1, 1], [], []>} : vector<16x8xf32>, vector<8x32xf32>, vector<16x32xf32> -> vector<16x32xf32>
    %113 = arith.addf %92, %112 : vector<16x32xf32>
    %114 = vector.broadcast %28 : vector<1x32xf32> to vector<16x32xf32>
    %115 = arith.addf %113, %114 : vector<16x32xf32>
    %116 = arith.addf %115, %13 : vector<16x32xf32>
    %cst_42 = arith.constant dense<0.000000e+00> : vector<16xf32>
    %117 = vector.multi_reduction <add>, %116, %cst_42 [1] : vector<16x32xf32> to vector<16xf32>
    %118 = vector.shape_cast %117 : vector<16xf32> to vector<16x1xf32>
    %cst_43 = arith.constant 3.200000e+01 : f32
    %119 = vector.broadcast %cst_43 : f32 to vector<16x1xf32>
    %120 = arith.divf %118, %119 : vector<16x1xf32>
    %121 = vector.broadcast %120 : vector<16x1xf32> to vector<16x32xf32>
    %122 = arith.subf %116, %121 : vector<16x32xf32>
    %123 = arith.mulf %122, %122 : vector<16x32xf32>
    %cst_44 = arith.constant dense<0.000000e+00> : vector<16xf32>
    %124 = vector.multi_reduction <add>, %123, %cst_44 [1] : vector<16x32xf32> to vector<16xf32>
    %125 = vector.shape_cast %124 : vector<16xf32> to vector<16x1xf32>
    %cst_45 = arith.constant 3.200000e+01 : f32
    %126 = vector.broadcast %cst_45 : f32 to vector<16x1xf32>
    %127 = arith.divf %125, %126 : vector<16x1xf32>
    %128 = vector.broadcast %120 : vector<16x1xf32> to vector<16x32xf32>
    %129 = arith.subf %116, %128 : vector<16x32xf32>
    %cst_46 = arith.constant 9.99999974E-6 : f32
    %130 = vector.broadcast %cst_46 : f32 to vector<16x1xf32>
    %131 = arith.addf %127, %130 : vector<16x1xf32>
    %132 = math.rsqrt %131 : vector<16x1xf32>
    %133 = vector.broadcast %132 : vector<16x1xf32> to vector<16x32xf32>
    %134 = arith.mulf %129, %133 : vector<16x32xf32>
    %135 = vector.broadcast %29 : vector<1x32xf32> to vector<16x32xf32>
    %136 = arith.mulf %134, %135 : vector<16x32xf32>
    %137 = vector.broadcast %30 : vector<1x32xf32> to vector<16x32xf32>
    %138 = arith.addf %136, %137 : vector<16x32xf32>
    %139 = vector.broadcast %4 : vector<16x1xf32> to vector<16x32xf32>
    %140 = arith.mulf %138, %139 : vector<16x32xf32>
    %141 = vector.extract_strided_slice %23 {offsets = [32, 0], sizes = [64, 32], strides = [1, 1]} : vector<96x32xf32> to vector<64x32xf32>
    %142 = vector.extract_strided_slice %26 {offsets = [4, 0], sizes = [1, 32], strides = [1, 1]} : vector<7x64xf32> to vector<1x32xf32>
    %143 = vector.extract_strided_slice %26 {offsets = [5, 0], sizes = [1, 32], strides = [1, 1]} : vector<7x64xf32> to vector<1x32xf32>
    %144 = vector.extract_strided_slice %26 {offsets = [6, 0], sizes = [1, 32], strides = [1, 1]} : vector<7x64xf32> to vector<1x32xf32>
    %c0_47 = arith.constant 0 : index
    %c0_48 = arith.constant 0 : index
    %c0_49 = arith.constant 0 : index
    %145 = vector.load %arg6[%c0_47, %c0_48, %c0_49] : memref<2x32x64xf32, #tpu.memory_space<vmem>>, vector<1x32x64xf32>
    %146 = vector.shape_cast %145 : vector<1x32x64xf32> to vector<32x64xf32>
    %cst_50 = arith.constant dense<0.000000e+00> : vector<16x64xf32>
    %147 = tpu.matmul %140, %146, %cst_50 {dimension_numbers = #tpu.dot_dimension_numbers<[1], [0], [0], [1], [0, 0, 1, 1], [], []>} : vector<16x32xf32>, vector<32x64xf32>, vector<16x64xf32> -> vector<16x64xf32>
    %148 = vector.broadcast %27 : vector<1x64xf32> to vector<16x64xf32>
    %149 = arith.addf %147, %148 : vector<16x64xf32>
    %cst_51 = arith.constant 0.000000e+00 : f32
    %150 = vector.broadcast %cst_51 : f32 to vector<16x64xf32>
    %151 = arith.maximumf %149, %150 : vector<16x64xf32>
    %cst_52 = arith.constant dense<0.000000e+00> : vector<16x32xf32>
    %152 = tpu.matmul %151, %141, %cst_52 {dimension_numbers = #tpu.dot_dimension_numbers<[1], [0], [0], [1], [0, 0, 1, 1], [], []>} : vector<16x64xf32>, vector<64x32xf32>, vector<16x32xf32> -> vector<16x32xf32>
    %153 = vector.broadcast %142 : vector<1x32xf32> to vector<16x32xf32>
    %154 = arith.addf %152, %153 : vector<16x32xf32>
    %155 = arith.addf %154, %140 : vector<16x32xf32>
    %cst_53 = arith.constant dense<0.000000e+00> : vector<16xf32>
    %156 = vector.multi_reduction <add>, %155, %cst_53 [1] : vector<16x32xf32> to vector<16xf32>
    %157 = vector.shape_cast %156 : vector<16xf32> to vector<16x1xf32>
    %cst_54 = arith.constant 3.200000e+01 : f32
    %158 = vector.broadcast %cst_54 : f32 to vector<16x1xf32>
    %159 = arith.divf %157, %158 : vector<16x1xf32>
    %160 = vector.broadcast %159 : vector<16x1xf32> to vector<16x32xf32>
    %161 = arith.subf %155, %160 : vector<16x32xf32>
    %162 = arith.mulf %161, %161 : vector<16x32xf32>
    %cst_55 = arith.constant dense<0.000000e+00> : vector<16xf32>
    %163 = vector.multi_reduction <add>, %162, %cst_55 [1] : vector<16x32xf32> to vector<16xf32>
    %164 = vector.shape_cast %163 : vector<16xf32> to vector<16x1xf32>
    %cst_56 = arith.constant 3.200000e+01 : f32
    %165 = vector.broadcast %cst_56 : f32 to vector<16x1xf32>
    %166 = arith.divf %164, %165 : vector<16x1xf32>
    %167 = vector.broadcast %159 : vector<16x1xf32> to vector<16x32xf32>
    %168 = arith.subf %155, %167 : vector<16x32xf32>
    %cst_57 = arith.constant 9.99999974E-6 : f32
    %169 = vector.broadcast %cst_57 : f32 to vector<16x1xf32>
    %170 = arith.addf %166, %169 : vector<16x1xf32>
    %171 = math.rsqrt %170 : vector<16x1xf32>
    %172 = vector.broadcast %171 : vector<16x1xf32> to vector<16x32xf32>
    %173 = arith.mulf %168, %172 : vector<16x32xf32>
    %174 = vector.broadcast %143 : vector<1x32xf32> to vector<16x32xf32>
    %175 = arith.mulf %173, %174 : vector<16x32xf32>
    %176 = vector.broadcast %144 : vector<1x32xf32> to vector<16x32xf32>
    %177 = arith.addf %175, %176 : vector<16x32xf32>
    %178 = vector.broadcast %4 : vector<16x1xf32> to vector<16x32xf32>
    %179 = arith.mulf %177, %178 : vector<16x32xf32>
    %c1 = arith.constant 1 : index
    %c0_58 = arith.constant 0 : index
    %c0_59 = arith.constant 0 : index
    %180 = vector.load %arg4[%c1, %c0_58, %c0_59] : memref<2x96x32xf32, #tpu.memory_space<vmem>>, vector<1x96x32xf32>
    %181 = vector.shape_cast %180 : vector<1x96x32xf32> to vector<96x32xf32>
    %cst_60 = arith.constant dense<0.000000e+00> : vector<96x16xf32>
    %182 = tpu.matmul %181, %179, %cst_60 {dimension_numbers = #tpu.dot_dimension_numbers<[1], [1], [0], [0], [0, 0, 1, 0], [], []>} : vector<96x32xf32>, vector<16x32xf32>, vector<96x16xf32> -> vector<96x16xf32>
    %c1_61 = arith.constant 1 : index
    %c0_62 = arith.constant 0 : index
    %c0_63 = arith.constant 0 : index
    %183 = vector.load %arg5[%c1_61, %c0_62, %c0_63] : memref<2x96x1xf32, #tpu.memory_space<vmem>>, vector<1x96x1xf32>
    %184 = vector.shape_cast %183 : vector<1x96x1xf32> to vector<96x1xf32>
    %185 = vector.broadcast %184 : vector<96x1xf32> to vector<96x16xf32>
    %186 = arith.addf %182, %185 : vector<96x16xf32>
    %c1_64 = arith.constant 1 : index
    %c0_65 = arith.constant 0 : index
    %c0_66 = arith.constant 0 : index
    %187 = vector.load %arg7[%c1_64, %c0_65, %c0_66] : memref<2x96x32xf32, #tpu.memory_space<vmem>>, vector<1x96x32xf32>
    %188 = vector.shape_cast %187 : vector<1x96x32xf32> to vector<96x32xf32>
    %189 = vector.extract_strided_slice %188 {offsets = [0, 0], sizes = [32, 32], strides = [1, 1]} : vector<96x32xf32> to vector<32x32xf32>
    %c1_67 = arith.constant 1 : index
    %c0_68 = arith.constant 0 : index
    %c0_69 = arith.constant 0 : index
    %190 = vector.load %arg8[%c1_67, %c0_68, %c0_69] : memref<2x7x64xf32, #tpu.memory_space<vmem>>, vector<1x7x64xf32>
    %191 = vector.shape_cast %190 : vector<1x7x64xf32> to vector<7x64xf32>
    %192 = vector.extract_strided_slice %191 {offsets = [0, 0], sizes = [1, 64], strides = [1, 1]} : vector<7x64xf32> to vector<1x64xf32>
    %193 = vector.extract_strided_slice %191 {offsets = [1, 0], sizes = [1, 32], strides = [1, 1]} : vector<7x64xf32> to vector<1x32xf32>
    %194 = vector.extract_strided_slice %191 {offsets = [2, 0], sizes = [1, 32], strides = [1, 1]} : vector<7x64xf32> to vector<1x32xf32>
    %195 = vector.extract_strided_slice %191 {offsets = [3, 0], sizes = [1, 32], strides = [1, 1]} : vector<7x64xf32> to vector<1x32xf32>
    %196 = vector.extract_strided_slice %186 {offsets = [0, 0], sizes = [8, 16], strides = [1, 1]} : vector<96x16xf32> to vector<8x16xf32>
    %197 = vector.extract_strided_slice %186 {offsets = [32, 0], sizes = [8, 16], strides = [1, 1]} : vector<96x16xf32> to vector<8x16xf32>
    %198 = vector.extract_strided_slice %186 {offsets = [64, 0], sizes = [8, 16], strides = [1, 1]} : vector<96x16xf32> to vector<8x16xf32>
    %cst_70 = arith.constant dense<0.000000e+00> : vector<16x16xf32>
    %199 = tpu.matmul %196, %197, %cst_70 {dimension_numbers = #tpu.dot_dimension_numbers<[0], [0], [1], [1], [0, 1, 1, 1], [], []>} : vector<8x16xf32>, vector<8x16xf32>, vector<16x16xf32> -> vector<16x16xf32>
    %cst_71 = arith.constant 0.353553385 : f32
    %200 = vector.broadcast %cst_71 : f32 to vector<16x16xf32>
    %201 = arith.mulf %199, %200 : vector<16x16xf32>
    %202 = arith.addf %201, %14 : vector<16x16xf32>
    %cst_72 = arith.constant dense<0xFF800000> : vector<16xf32>
    %203 = vector.multi_reduction <maximumf>, %202, %cst_72 [1] : vector<16x16xf32> to vector<16xf32>
    %204 = vector.shape_cast %203 : vector<16xf32> to vector<16x1xf32>
    %205 = vector.broadcast %204 : vector<16x1xf32> to vector<16x16xf32>
    %206 = arith.subf %202, %205 : vector<16x16xf32>
    %207 = math.exp %206 : vector<16x16xf32>
    %cst_73 = arith.constant dense<0.000000e+00> : vector<16xf32>
    %208 = vector.multi_reduction <add>, %207, %cst_73 [1] : vector<16x16xf32> to vector<16xf32>
    %209 = vector.shape_cast %208 : vector<16xf32> to vector<16x1xf32>
    %210 = tpu.reciprocal %209 {approx = true} : vector<16x1xf32> -> vector<16x1xf32>
    %211 = vector.broadcast %210 : vector<16x1xf32> to vector<16x16xf32>
    %212 = arith.mulf %207, %211 : vector<16x16xf32>
    %cst_74 = arith.constant dense<0.000000e+00> : vector<16x8xf32>
    %213 = tpu.matmul %212, %198, %cst_74 {dimension_numbers = #tpu.dot_dimension_numbers<[1], [1], [0], [0], [0, 0, 1, 0], [], []>} : vector<16x16xf32>, vector<8x16xf32>, vector<16x8xf32> -> vector<16x8xf32>
    %214 = vector.extract_strided_slice %189 {offsets = [0, 0], sizes = [8, 32], strides = [1, 1]} : vector<32x32xf32> to vector<8x32xf32>
    %cst_75 = arith.constant dense<0.000000e+00> : vector<16x32xf32>
    %215 = tpu.matmul %213, %214, %cst_75 {dimension_numbers = #tpu.dot_dimension_numbers<[1], [0], [0], [1], [0, 0, 1, 1], [], []>} : vector<16x8xf32>, vector<8x32xf32>, vector<16x32xf32> -> vector<16x32xf32>
    %216 = vector.extract_strided_slice %186 {offsets = [8, 0], sizes = [8, 16], strides = [1, 1]} : vector<96x16xf32> to vector<8x16xf32>
    %217 = vector.extract_strided_slice %186 {offsets = [40, 0], sizes = [8, 16], strides = [1, 1]} : vector<96x16xf32> to vector<8x16xf32>
    %218 = vector.extract_strided_slice %186 {offsets = [72, 0], sizes = [8, 16], strides = [1, 1]} : vector<96x16xf32> to vector<8x16xf32>
    %cst_76 = arith.constant dense<0.000000e+00> : vector<16x16xf32>
    %219 = tpu.matmul %216, %217, %cst_76 {dimension_numbers = #tpu.dot_dimension_numbers<[0], [0], [1], [1], [0, 1, 1, 1], [], []>} : vector<8x16xf32>, vector<8x16xf32>, vector<16x16xf32> -> vector<16x16xf32>
    %cst_77 = arith.constant 0.353553385 : f32
    %220 = vector.broadcast %cst_77 : f32 to vector<16x16xf32>
    %221 = arith.mulf %219, %220 : vector<16x16xf32>
    %222 = arith.addf %221, %14 : vector<16x16xf32>
    %cst_78 = arith.constant dense<0xFF800000> : vector<16xf32>
    %223 = vector.multi_reduction <maximumf>, %222, %cst_78 [1] : vector<16x16xf32> to vector<16xf32>
    %224 = vector.shape_cast %223 : vector<16xf32> to vector<16x1xf32>
    %225 = vector.broadcast %224 : vector<16x1xf32> to vector<16x16xf32>
    %226 = arith.subf %222, %225 : vector<16x16xf32>
    %227 = math.exp %226 : vector<16x16xf32>
    %cst_79 = arith.constant dense<0.000000e+00> : vector<16xf32>
    %228 = vector.multi_reduction <add>, %227, %cst_79 [1] : vector<16x16xf32> to vector<16xf32>
    %229 = vector.shape_cast %228 : vector<16xf32> to vector<16x1xf32>
    %230 = tpu.reciprocal %229 {approx = true} : vector<16x1xf32> -> vector<16x1xf32>
    %231 = vector.broadcast %230 : vector<16x1xf32> to vector<16x16xf32>
    %232 = arith.mulf %227, %231 : vector<16x16xf32>
    %cst_80 = arith.constant dense<0.000000e+00> : vector<16x8xf32>
    %233 = tpu.matmul %232, %218, %cst_80 {dimension_numbers = #tpu.dot_dimension_numbers<[1], [1], [0], [0], [0, 0, 1, 0], [], []>} : vector<16x16xf32>, vector<8x16xf32>, vector<16x8xf32> -> vector<16x8xf32>
    %234 = vector.extract_strided_slice %189 {offsets = [8, 0], sizes = [8, 32], strides = [1, 1]} : vector<32x32xf32> to vector<8x32xf32>
    %cst_81 = arith.constant dense<0.000000e+00> : vector<16x32xf32>
    %235 = tpu.matmul %233, %234, %cst_81 {dimension_numbers = #tpu.dot_dimension_numbers<[1], [0], [0], [1], [0, 0, 1, 1], [], []>} : vector<16x8xf32>, vector<8x32xf32>, vector<16x32xf32> -> vector<16x32xf32>
    %236 = arith.addf %215, %235 : vector<16x32xf32>
    %237 = vector.extract_strided_slice %186 {offsets = [16, 0], sizes = [8, 16], strides = [1, 1]} : vector<96x16xf32> to vector<8x16xf32>
    %238 = vector.extract_strided_slice %186 {offsets = [48, 0], sizes = [8, 16], strides = [1, 1]} : vector<96x16xf32> to vector<8x16xf32>
    %239 = vector.extract_strided_slice %186 {offsets = [80, 0], sizes = [8, 16], strides = [1, 1]} : vector<96x16xf32> to vector<8x16xf32>
    %cst_82 = arith.constant dense<0.000000e+00> : vector<16x16xf32>
    %240 = tpu.matmul %237, %238, %cst_82 {dimension_numbers = #tpu.dot_dimension_numbers<[0], [0], [1], [1], [0, 1, 1, 1], [], []>} : vector<8x16xf32>, vector<8x16xf32>, vector<16x16xf32> -> vector<16x16xf32>
    %cst_83 = arith.constant 0.353553385 : f32
    %241 = vector.broadcast %cst_83 : f32 to vector<16x16xf32>
    %242 = arith.mulf %240, %241 : vector<16x16xf32>
    %243 = arith.addf %242, %14 : vector<16x16xf32>
    %cst_84 = arith.constant dense<0xFF800000> : vector<16xf32>
    %244 = vector.multi_reduction <maximumf>, %243, %cst_84 [1] : vector<16x16xf32> to vector<16xf32>
    %245 = vector.shape_cast %244 : vector<16xf32> to vector<16x1xf32>
    %246 = vector.broadcast %245 : vector<16x1xf32> to vector<16x16xf32>
    %247 = arith.subf %243, %246 : vector<16x16xf32>
    %248 = math.exp %247 : vector<16x16xf32>
    %cst_85 = arith.constant dense<0.000000e+00> : vector<16xf32>
    %249 = vector.multi_reduction <add>, %248, %cst_85 [1] : vector<16x16xf32> to vector<16xf32>
    %250 = vector.shape_cast %249 : vector<16xf32> to vector<16x1xf32>
    %251 = tpu.reciprocal %250 {approx = true} : vector<16x1xf32> -> vector<16x1xf32>
    %252 = vector.broadcast %251 : vector<16x1xf32> to vector<16x16xf32>
    %253 = arith.mulf %248, %252 : vector<16x16xf32>
    %cst_86 = arith.constant dense<0.000000e+00> : vector<16x8xf32>
    %254 = tpu.matmul %253, %239, %cst_86 {dimension_numbers = #tpu.dot_dimension_numbers<[1], [1], [0], [0], [0, 0, 1, 0], [], []>} : vector<16x16xf32>, vector<8x16xf32>, vector<16x8xf32> -> vector<16x8xf32>
    %255 = vector.extract_strided_slice %189 {offsets = [16, 0], sizes = [8, 32], strides = [1, 1]} : vector<32x32xf32> to vector<8x32xf32>
    %cst_87 = arith.constant dense<0.000000e+00> : vector<16x32xf32>
    %256 = tpu.matmul %254, %255, %cst_87 {dimension_numbers = #tpu.dot_dimension_numbers<[1], [0], [0], [1], [0, 0, 1, 1], [], []>} : vector<16x8xf32>, vector<8x32xf32>, vector<16x32xf32> -> vector<16x32xf32>
    %257 = arith.addf %236, %256 : vector<16x32xf32>
    %258 = vector.extract_strided_slice %186 {offsets = [24, 0], sizes = [8, 16], strides = [1, 1]} : vector<96x16xf32> to vector<8x16xf32>
    %259 = vector.extract_strided_slice %186 {offsets = [56, 0], sizes = [8, 16], strides = [1, 1]} : vector<96x16xf32> to vector<8x16xf32>
    %260 = vector.extract_strided_slice %186 {offsets = [88, 0], sizes = [8, 16], strides = [1, 1]} : vector<96x16xf32> to vector<8x16xf32>
    %cst_88 = arith.constant dense<0.000000e+00> : vector<16x16xf32>
    %261 = tpu.matmul %258, %259, %cst_88 {dimension_numbers = #tpu.dot_dimension_numbers<[0], [0], [1], [1], [0, 1, 1, 1], [], []>} : vector<8x16xf32>, vector<8x16xf32>, vector<16x16xf32> -> vector<16x16xf32>
    %cst_89 = arith.constant 0.353553385 : f32
    %262 = vector.broadcast %cst_89 : f32 to vector<16x16xf32>
    %263 = arith.mulf %261, %262 : vector<16x16xf32>
    %264 = arith.addf %263, %14 : vector<16x16xf32>
    %cst_90 = arith.constant dense<0xFF800000> : vector<16xf32>
    %265 = vector.multi_reduction <maximumf>, %264, %cst_90 [1] : vector<16x16xf32> to vector<16xf32>
    %266 = vector.shape_cast %265 : vector<16xf32> to vector<16x1xf32>
    %267 = vector.broadcast %266 : vector<16x1xf32> to vector<16x16xf32>
    %268 = arith.subf %264, %267 : vector<16x16xf32>
    %269 = math.exp %268 : vector<16x16xf32>
    %cst_91 = arith.constant dense<0.000000e+00> : vector<16xf32>
    %270 = vector.multi_reduction <add>, %269, %cst_91 [1] : vector<16x16xf32> to vector<16xf32>
    %271 = vector.shape_cast %270 : vector<16xf32> to vector<16x1xf32>
    %272 = tpu.reciprocal %271 {approx = true} : vector<16x1xf32> -> vector<16x1xf32>
    %273 = vector.broadcast %272 : vector<16x1xf32> to vector<16x16xf32>
    %274 = arith.mulf %269, %273 : vector<16x16xf32>
    %cst_92 = arith.constant dense<0.000000e+00> : vector<16x8xf32>
    %275 = tpu.matmul %274, %260, %cst_92 {dimension_numbers = #tpu.dot_dimension_numbers<[1], [1], [0], [0], [0, 0, 1, 0], [], []>} : vector<16x16xf32>, vector<8x16xf32>, vector<16x8xf32> -> vector<16x8xf32>
    %276 = vector.extract_strided_slice %189 {offsets = [24, 0], sizes = [8, 32], strides = [1, 1]} : vector<32x32xf32> to vector<8x32xf32>
    %cst_93 = arith.constant dense<0.000000e+00> : vector<16x32xf32>
    %277 = tpu.matmul %275, %276, %cst_93 {dimension_numbers = #tpu.dot_dimension_numbers<[1], [0], [0], [1], [0, 0, 1, 1], [], []>} : vector<16x8xf32>, vector<8x32xf32>, vector<16x32xf32> -> vector<16x32xf32>
    %278 = arith.addf %257, %277 : vector<16x32xf32>
    %279 = vector.broadcast %193 : vector<1x32xf32> to vector<16x32xf32>
    %280 = arith.addf %278, %279 : vector<16x32xf32>
    %281 = arith.addf %280, %179 : vector<16x32xf32>
    %cst_94 = arith.constant dense<0.000000e+00> : vector<16xf32>
    %282 = vector.multi_reduction <add>, %281, %cst_94 [1] : vector<16x32xf32> to vector<16xf32>
    %283 = vector.shape_cast %282 : vector<16xf32> to vector<16x1xf32>
    %cst_95 = arith.constant 3.200000e+01 : f32
    %284 = vector.broadcast %cst_95 : f32 to vector<16x1xf32>
    %285 = arith.divf %283, %284 : vector<16x1xf32>
    %286 = vector.broadcast %285 : vector<16x1xf32> to vector<16x32xf32>
    %287 = arith.subf %281, %286 : vector<16x32xf32>
    %288 = arith.mulf %287, %287 : vector<16x32xf32>
    %cst_96 = arith.constant dense<0.000000e+00> : vector<16xf32>
    %289 = vector.multi_reduction <add>, %288, %cst_96 [1] : vector<16x32xf32> to vector<16xf32>
    %290 = vector.shape_cast %289 : vector<16xf32> to vector<16x1xf32>
    %cst_97 = arith.constant 3.200000e+01 : f32
    %291 = vector.broadcast %cst_97 : f32 to vector<16x1xf32>
    %292 = arith.divf %290, %291 : vector<16x1xf32>
    %293 = vector.broadcast %285 : vector<16x1xf32> to vector<16x32xf32>
    %294 = arith.subf %281, %293 : vector<16x32xf32>
    %cst_98 = arith.constant 9.99999974E-6 : f32
    %295 = vector.broadcast %cst_98 : f32 to vector<16x1xf32>
    %296 = arith.addf %292, %295 : vector<16x1xf32>
    %297 = math.rsqrt %296 : vector<16x1xf32>
    %298 = vector.broadcast %297 : vector<16x1xf32> to vector<16x32xf32>
    %299 = arith.mulf %294, %298 : vector<16x32xf32>
    %300 = vector.broadcast %194 : vector<1x32xf32> to vector<16x32xf32>
    %301 = arith.mulf %299, %300 : vector<16x32xf32>
    %302 = vector.broadcast %195 : vector<1x32xf32> to vector<16x32xf32>
    %303 = arith.addf %301, %302 : vector<16x32xf32>
    %304 = vector.broadcast %4 : vector<16x1xf32> to vector<16x32xf32>
    %305 = arith.mulf %303, %304 : vector<16x32xf32>
    %306 = vector.extract_strided_slice %188 {offsets = [32, 0], sizes = [64, 32], strides = [1, 1]} : vector<96x32xf32> to vector<64x32xf32>
    %307 = vector.extract_strided_slice %191 {offsets = [4, 0], sizes = [1, 32], strides = [1, 1]} : vector<7x64xf32> to vector<1x32xf32>
    %308 = vector.extract_strided_slice %191 {offsets = [5, 0], sizes = [1, 32], strides = [1, 1]} : vector<7x64xf32> to vector<1x32xf32>
    %309 = vector.extract_strided_slice %191 {offsets = [6, 0], sizes = [1, 32], strides = [1, 1]} : vector<7x64xf32> to vector<1x32xf32>
    %c1_99 = arith.constant 1 : index
    %c0_100 = arith.constant 0 : index
    %c0_101 = arith.constant 0 : index
    %310 = vector.load %arg6[%c1_99, %c0_100, %c0_101] : memref<2x32x64xf32, #tpu.memory_space<vmem>>, vector<1x32x64xf32>
    %311 = vector.shape_cast %310 : vector<1x32x64xf32> to vector<32x64xf32>
    %cst_102 = arith.constant dense<0.000000e+00> : vector<16x64xf32>
    %312 = tpu.matmul %305, %311, %cst_102 {dimension_numbers = #tpu.dot_dimension_numbers<[1], [0], [0], [1], [0, 0, 1, 1], [], []>} : vector<16x32xf32>, vector<32x64xf32>, vector<16x64xf32> -> vector<16x64xf32>
    %313 = vector.broadcast %192 : vector<1x64xf32> to vector<16x64xf32>
    %314 = arith.addf %312, %313 : vector<16x64xf32>
    %cst_103 = arith.constant 0.000000e+00 : f32
    %315 = vector.broadcast %cst_103 : f32 to vector<16x64xf32>
    %316 = arith.maximumf %314, %315 : vector<16x64xf32>
    %cst_104 = arith.constant dense<0.000000e+00> : vector<16x32xf32>
    %317 = tpu.matmul %316, %306, %cst_104 {dimension_numbers = #tpu.dot_dimension_numbers<[1], [0], [0], [1], [0, 0, 1, 1], [], []>} : vector<16x64xf32>, vector<64x32xf32>, vector<16x32xf32> -> vector<16x32xf32>
    %318 = vector.broadcast %307 : vector<1x32xf32> to vector<16x32xf32>
    %319 = arith.addf %317, %318 : vector<16x32xf32>
    %320 = arith.addf %319, %305 : vector<16x32xf32>
    %cst_105 = arith.constant dense<0.000000e+00> : vector<16xf32>
    %321 = vector.multi_reduction <add>, %320, %cst_105 [1] : vector<16x32xf32> to vector<16xf32>
    %322 = vector.shape_cast %321 : vector<16xf32> to vector<16x1xf32>
    %cst_106 = arith.constant 3.200000e+01 : f32
    %323 = vector.broadcast %cst_106 : f32 to vector<16x1xf32>
    %324 = arith.divf %322, %323 : vector<16x1xf32>
    %325 = vector.broadcast %324 : vector<16x1xf32> to vector<16x32xf32>
    %326 = arith.subf %320, %325 : vector<16x32xf32>
    %327 = arith.mulf %326, %326 : vector<16x32xf32>
    %cst_107 = arith.constant dense<0.000000e+00> : vector<16xf32>
    %328 = vector.multi_reduction <add>, %327, %cst_107 [1] : vector<16x32xf32> to vector<16xf32>
    %329 = vector.shape_cast %328 : vector<16xf32> to vector<16x1xf32>
    %cst_108 = arith.constant 3.200000e+01 : f32
    %330 = vector.broadcast %cst_108 : f32 to vector<16x1xf32>
    %331 = arith.divf %329, %330 : vector<16x1xf32>
    %332 = vector.broadcast %324 : vector<16x1xf32> to vector<16x32xf32>
    %333 = arith.subf %320, %332 : vector<16x32xf32>
    %cst_109 = arith.constant 9.99999974E-6 : f32
    %334 = vector.broadcast %cst_109 : f32 to vector<16x1xf32>
    %335 = arith.addf %331, %334 : vector<16x1xf32>
    %336 = math.rsqrt %335 : vector<16x1xf32>
    %337 = vector.broadcast %336 : vector<16x1xf32> to vector<16x32xf32>
    %338 = arith.mulf %333, %337 : vector<16x32xf32>
    %339 = vector.broadcast %308 : vector<1x32xf32> to vector<16x32xf32>
    %340 = arith.mulf %338, %339 : vector<16x32xf32>
    %341 = vector.broadcast %309 : vector<1x32xf32> to vector<16x32xf32>
    %342 = arith.addf %340, %341 : vector<16x32xf32>
    %343 = vector.broadcast %4 : vector<16x1xf32> to vector<16x32xf32>
    %344 = arith.mulf %342, %343 : vector<16x32xf32>
    %c0_110 = arith.constant 0 : index
    %c0_111 = arith.constant 0 : index
    %345 = vector.load %arg9[%c0_110, %c0_111] : memref<16x32xf32, #tpu.memory_space<vmem>>, vector<16x32xf32>
    tpu.vector_store %arg9[%c0_110, %c0_111], %344 {strides = array<i32>} : memref<16x32xf32, #tpu.memory_space<vmem>>, vector<16x32xf32>,
    return
  }
  func.func @transform_0(%arg0: i32) -> (i32, i32) {
    %c0_i32 = arith.constant 0 : i32
    %c0_i32_0 = arith.constant 0 : i32
    %c0_i32_1 = arith.constant 0 : i32
    return %c0_i32, %c0_i32_0 : i32, i32
  }
  func.func @transform_1(%arg0: i32) -> (i32, i32) {
    %c0_i32 = arith.constant 0 : i32
    %c0_i32_0 = arith.constant 0 : i32
    %c0_i32_1 = arith.constant 0 : i32
    return %c0_i32, %c0_i32_0 : i32, i32
  }
  func.func @transform_2(%arg0: i32) -> (i32, i32) {
    %c0_i32 = arith.constant 0 : i32
    %c0_i32_0 = arith.constant 0 : i32
    %c0_i32_1 = arith.constant 0 : i32
    return %c0_i32, %c0_i32_0 : i32, i32
  }
  func.func @transform_3(%arg0: i32) -> (i32, i32, i32) {
    %c0_i32 = arith.constant 0 : i32
    %c0_i32_0 = arith.constant 0 : i32
    %c0_i32_1 = arith.constant 0 : i32
    %c0_i32_2 = arith.constant 0 : i32
    return %c0_i32, %c0_i32_0, %c0_i32_1 : i32, i32, i32
  }
  func.func @transform_4(%arg0: i32) -> (i32, i32, i32) {
    %c0_i32 = arith.constant 0 : i32
    %c0_i32_0 = arith.constant 0 : i32
    %c0_i32_1 = arith.constant 0 : i32
    %c0_i32_2 = arith.constant 0 : i32
    return %c0_i32, %c0_i32_0, %c0_i32_1 : i32, i32, i32
  }
  func.func @transform_5(%arg0: i32) -> (i32, i32, i32) {
    %c0_i32 = arith.constant 0 : i32
    %c0_i32_0 = arith.constant 0 : i32
    %c0_i32_1 = arith.constant 0 : i32
    %c0_i32_2 = arith.constant 0 : i32
    return %c0_i32, %c0_i32_0, %c0_i32_1 : i32, i32, i32
  }
  func.func @transform_6(%arg0: i32) -> (i32, i32, i32) {
    %c0_i32 = arith.constant 0 : i32
    %c0_i32_0 = arith.constant 0 : i32
    %c0_i32_1 = arith.constant 0 : i32
    %c0_i32_2 = arith.constant 0 : i32
    return %c0_i32, %c0_i32_0, %c0_i32_1 : i32, i32, i32
  }
  func.func @transform_7(%arg0: i32) -> (i32, i32, i32) {
    %c0_i32 = arith.constant 0 : i32
    %c0_i32_0 = arith.constant 0 : i32
    %c0_i32_1 = arith.constant 0 : i32
    %c0_i32_2 = arith.constant 0 : i32
    return %c0_i32, %c0_i32_0, %c0_i32_1 : i32, i32, i32
  }
  func.func @transform_8(%arg0: i32) -> (i32, i32) {
    %c0_i32 = arith.constant 0 : i32
    %c0_i32_0 = arith.constant 0 : i32
    %c0_i32_1 = arith.constant 0 : i32
    return %c0_i32, %c0_i32_0 : i32, i32
  }
}

</mosaic_0001>

<llo_original>
// kernel: tpu_custom_call.1
$region0: #{tpu_custom_call.1}
  #allocation0 [shape = 'u32[]', space=smem, size = 0x4, offset = 0x4, fixed_abs, tag = 'smem constant byte address 0x4 - core index']
  #allocation1 [shape = 'u32[144,128]{1,0:T(1,128)}', space=vmem, size = 0x12000, scoped, tag = 'internal scratch']
  %s0 = inlined_call_operand.vmem [shape: s32[16,1], index: 0, kind: input, shape index: {}]
  %s1 = inlined_call_operand.vmem [shape: f32[10,32], index: 1, kind: input, shape index: {}]
  %s2 = inlined_call_operand.vmem [shape: f32[16,16], index: 2, kind: input, shape index: {}]
  %s3 = inlined_call_operand.vmem [shape: f32[2,96,32], index: 3, kind: input, shape index: {}]
  %s4 = inlined_call_operand.vmem [shape: f32[2,96,1], index: 4, kind: input, shape index: {}]
  %s5 = inlined_call_operand.vmem [shape: f32[2,32,64], index: 5, kind: input, shape index: {}]
  %s6 = inlined_call_operand.vmem [shape: f32[2,96,32], index: 6, kind: input, shape index: {}]
  %s7 = inlined_call_operand.vmem [shape: f32[2,7,64], index: 7, kind: input, shape index: {}]
  %s8 = inlined_call_operand.hbm [shape: f32[16,32], index: 8, kind: output, shape index: {}]
  %s9 = sld [smem:[#allocation0]]
  $region42: #{tpu_custom_call.1} parent=0
    _
  %s11 = ssub.s32 1, %s9
  %s12 = scalar_select 0, %s11, %s9
  $region1: #{tpu_custom_call.1} parent=0
    #allocation2 [shape = 'u8[8192]{0}', space=vmem, size = 0x2000, scoped, tag = 'output window, operand 0, single buffered']
    #allocation3 [shape = 's32[1]{0}', space=sflag, size = 0x4, scoped, tag = 'scoped memory for tpu_custom_call.1']
    %13 = vsyncpa [#allocation3], 0
    // Predicated region
    $region2: #{tpu_custom_call.1} parent=1 // pred_check
      _
    $region3: #{tpu_custom_call.1} parent=1 // pred_check_branch
      %15 = sbr.rel (0) target = $region5
    $region4: #{tpu_custom_call.1} parent=1 // pred_region
      _
    $region5: #{tpu_custom_call.1} parent=1 // pred_fallthru
      _
    // Predicated region
    $region6: #{tpu_custom_call.1} parent=1 // pred_check
      _
    $region7: #{tpu_custom_call.1} parent=1 // pred_check_branch
      %17 = sbr.rel (0) target = $region9
    $region8: #{tpu_custom_call.1} parent=1 // pred_region
      _
    $region9: #{tpu_custom_call.1} parent=1 // pred_fallthru
      _
    // Predicated region
    $region10: #{tpu_custom_call.1} parent=1 // pred_check
      _
    $region11: #{tpu_custom_call.1} parent=1 // pred_check_branch
      %19 = sbr.rel (0) target = $region13
    $region12: #{tpu_custom_call.1} parent=1 // pred_region
      _
    $region13: #{tpu_custom_call.1} parent=1 // pred_fallthru
      _
    // Predicated region
    $region14: #{tpu_custom_call.1} parent=1 // pred_check
      _
    $region15: #{tpu_custom_call.1} parent=1 // pred_check_branch
      %21 = sbr.rel (0) target = $region17
    $region16: #{tpu_custom_call.1} parent=1 // pred_region
      _
    $region17: #{tpu_custom_call.1} parent=1 // pred_fallthru
      _
    // Predicated region
    $region18: #{tpu_custom_call.1} parent=1 // pred_check
      _
    $region19: #{tpu_custom_call.1} parent=1 // pred_check_branch
      %23 = sbr.rel (0) target = $region21
    $region20: #{tpu_custom_call.1} parent=1 // pred_region
      _
    $region21: #{tpu_custom_call.1} parent=1 // pred_fallthru
      _
    // Predicated region
    $region22: #{tpu_custom_call.1} parent=1 // pred_check
      _
    $region23: #{tpu_custom_call.1} parent=1 // pred_check_branch
      %25 = sbr.rel (0) target = $region25
    $region24: #{tpu_custom_call.1} parent=1 // pred_region
      _
    $region25: #{tpu_custom_call.1} parent=1 // pred_fallthru
      _
    // Predicated region
    $region26: #{tpu_custom_call.1} parent=1 // pred_check
      _
    $region27: #{tpu_custom_call.1} parent=1 // pred_check_branch
      %27 = sbr.rel (0) target = $region29
    $region28: #{tpu_custom_call.1} parent=1 // pred_region
      _
    $region29: #{tpu_custom_call.1} parent=1 // pred_fallthru
      _
    // Predicated region
    $region30: #{tpu_custom_call.1} parent=1 // pred_check
      _
    $region31: #{tpu_custom_call.1} parent=1 // pred_check_branch
      %29 = sbr.rel (0) target = $region33
    $region32: #{tpu_custom_call.1} parent=1 // pred_region
      _
    $region33: #{tpu_custom_call.1} parent=1 // pred_fallthru
      _
    %v30 = vld [vmem:[%s0] sm:$0xff]
    %v31 = vld [vmem:[%s0 + $0x8] sm:$0xff]
    %vm32 = vcmp.ne.s32.totalorder %v30, 0
    %vm33 = vcmp.ne.s32.totalorder %v31, 0
    %v34 = vsel %vm32, 1, 0
    %v35 = vsel %vm33, 1, 0
    %v36 = vcvt.s32.f32 %v34
    %v37 = vcvt.s32.f32 %v35
    %v38 = vlaneseq
    %v39 = vand.u32 %v38, 127
    %40 = vset.pattern.permute.xlu0 0
    %41 = vperm.xlu0 %40, %v30
    %v42 = vpop.permute.xlu0 %41
    %43 = vset.pattern.permute.xlu0 0
    %44 = vperm.xlu0 %43, %v31
    %v45 = vpop.permute.xlu0 %44
    %vm46 = vcmp.eq.s32.totalorder %v42, %v39
    %vm47 = vcmp.eq.s32.totalorder %v45, %v39
    %v48 = vsel %vm46, 1, 0
    %v49 = vsel %vm47, 1, 0
    %v50 = vcvt.s32.f32 %v48
    %v51 = vcvt.s32.f32 %v49
    %v52 = vld [vmem:[%s1] sm:$0xff]
    %v53 = vld [vmem:[%s1 + $0x8] sm:$0x3]
    %vm54 = vcmask 80896
    %v56 = vsel %vm54, %v50, 0
    %v59 = vsel %vm54, %v51, 0
    %vm61 = vcmask 1041408
    %v63 = vsel %vm61, %v53, 0
    %65 = vmatprep.subr.mxu0 0.0
    %66 = vmatpush1.msra.mxu0 0.0
    %67 = vmatprep.subr.mxu0 0.0
    %68 = vmatpush1.msra.mxu0 0.0
    %69 = vmatprep.subr.mxu0 0.0
    %70 = vmatpush1.msra.mxu0 0.0
    %71 = vmatprep.subr.mxu0 0.0
    %72 = vmatpush1.msra.mxu0 0.0
    %73 = vmatprep.subr.mxu0 0.0
    %74 = vmatpush1.msra.mxu0 0.0
    %75 = vmatprep.subr.mxu0 0.0
    %76 = vmatpush1.msra.mxu0 0.0
    %77 = vmatprep.subr.mxu0 0.0
    %78 = vmatpush1.msra.mxu0 0.0
    %79 = vmatprep.subr.mxu0 0.0
    %80 = vmatpush1.msra.mxu0 0.0
    %81 = vmatprep.subr.mxu0 0.0
    %82 = vmatpush1.msra.mxu0 0.0
    %83 = vmatprep.subr.mxu0 0.0
    %84 = vmatpush1.msra.mxu0 0.0
    %85 = vmatprep.subr.mxu0 0.0
    %86 = vmatpush1.msra.mxu0 0.0
    %87 = vmatprep.subr.mxu0 0.0
    %88 = vmatpush1.msra.mxu0 0.0
    %89 = vmatprep.subr.mxu0 0.0
    %90 = vmatpush1.msra.mxu0 0.0
    %91 = vmatprep.subr.mxu0 0.0
    %92 = vmatpush1.msra.mxu0 0.0
    %93 = vmatprep.subr.mxu0 0.0
    %94 = vmatpush1.msra.mxu0 %v63
    %95 = vmatprep.subr.mxu0 0.0
    %96 = vmatpush1.msra.mxu0 %v52
    %97 = vmatprep.subr.mxu0 0.0
    %98 = vmatpush2.msra.mxu0 0.0
    %99 = vmatprep.subr.mxu0 0.0
    %100 = vmatpush2.msra.mxu0 0.0
    %101 = vmatprep.subr.mxu0 0.0
    %102 = vmatpush2.msra.mxu0 0.0
    %103 = vmatprep.subr.mxu0 0.0
    %104 = vmatpush2.msra.mxu0 0.0
    %105 = vmatprep.subr.mxu0 0.0
    %106 = vmatpush2.msra.mxu0 0.0
    %107 = vmatprep.subr.mxu0 0.0
    %108 = vmatpush2.msra.mxu0 0.0
    %109 = vmatprep.subr.mxu0 0.0
    %110 = vmatpush2.msra.mxu0 0.0
    %111 = vmatprep.subr.mxu0 0.0
    %112 = vmatpush2.msra.mxu0 0.0
    %113 = vmatprep.subr.mxu0 0.0
    %114 = vmatpush2.msra.mxu0 0.0
    %115 = vmatprep.subr.mxu0 0.0
    %116 = vmatpush2.msra.mxu0 0.0
    %117 = vmatprep.subr.mxu0 0.0
    %118 = vmatpush2.msra.mxu0 0.0
    %119 = vmatprep.subr.mxu0 0.0
    %120 = vmatpush2.msra.mxu0 0.0
    %121 = vmatprep.subr.mxu0 0.0
    %122 = vmatpush2.msra.mxu0 0.0
    %123 = vmatprep.subr.mxu0 0.0
    %124 = vmatpush2.msra.mxu0 0.0
    %125 = vmatprep.subr.mxu0 0.0
    %126 = vmatpush2.msra.mxu0 0.0
    %127 = vmatprep.subr.mxu0 0.0
    %128 = vmatpush2.msra.mxu0 0.0
    %129 = vmatprep.mubr.f32.mxu0 0.0
    %130 = vmatmul.mubr.f32.gmra.mxu0 %v56
    %v131 = vpop.f32.mrf.mxu0
    %v132 = vadd.f32 0.0, %v131
    %v133 = vpop.f32.mrf.mxu0
    %134 = vmatprep.mubr.f32.mxu0 0.0
    %135 = vmatmul.mubr.f32.gmra.mxu0 %v59
    %v136 = vpop.f32.mrf.mxu0
    %v137 = vadd.f32 0.0, %v136
    %v138 = vpop.f32.mrf.mxu0
    %139 = vdwg.mxu0
    %141 = vset.pattern.permute.xlu0 0
    %142 = vperm.xlu0 %141, %v36
    %v143 = vpop.permute.xlu0 %142
    %146 = vset.pattern.permute.xlu0 0
    %147 = vperm.xlu0 %146, %v37
    %v148 = vpop.permute.xlu0 %147
    %v150 = vmul.f32 %v132, %v143
    %v151 = vmul.f32 %v137, %v148
    %v152 = vld [vmem:[%s2] sm:$0xff]
    %v153 = vld [vmem:[%s2 + $0x8] sm:$0xff]
    %v154 = vld [vmem:[%s3] sm:$0xff]
    %v155 = vld [vmem:[%s3 + $0x8] sm:$0xff]
    %v156 = vld [vmem:[%s3 + $0x10] sm:$0xff]
    %v157 = vld [vmem:[%s3 + $0x18] sm:$0xff]
    %v158 = vld [vmem:[%s3 + $0x20] sm:$0xff]
    %v159 = vld [vmem:[%s3 + $0x28] sm:$0xff]
    %v160 = vld [vmem:[%s3 + $0x30] sm:$0xff]
    %v161 = vld [vmem:[%s3 + $0x38] sm:$0xff]
    %v162 = vld [vmem:[%s3 + $0x40] sm:$0xff]
    %v163 = vld [vmem:[%s3 + $0x48] sm:$0xff]
    %v164 = vld [vmem:[%s3 + $0x50] sm:$0xff]
    %v165 = vld [vmem:[%s3 + $0x58] sm:$0xff]
    %v166 = vld [vmem:[%s4] sm:$0xff]
    %v167 = vld [vmem:[%s4 + $0x8] sm:$0xff]
    %v168 = vld [vmem:[%s4 + $0x10] sm:$0xff]
    %v169 = vld [vmem:[%s4 + $0x18] sm:$0xff]
    %v170 = vld [vmem:[%s4 + $0x20] sm:$0xff]
    %v171 = vld [vmem:[%s4 + $0x28] sm:$0xff]
    %v172 = vld [vmem:[%s4 + $0x30] sm:$0xff]
    %v173 = vld [vmem:[%s4 + $0x38] sm:$0xff]
    %v174 = vld [vmem:[%s4 + $0x40] sm:$0xff]
    %v175 = vld [vmem:[%s4 + $0x48] sm:$0xff]
    %v176 = vld [vmem:[%s4 + $0x50] sm:$0xff]
    %v177 = vld [vmem:[%s4 + $0x58] sm:$0xff]
    %179 = vset.pattern.permute.xlu0 0
    %180 = vperm.xlu0 %179, %v166
    %v181 = vpop.permute.xlu0 %180
    %184 = vset.pattern.permute.xlu0 0
    %185 = vperm.xlu0 %184, %v167
    %v186 = vpop.permute.xlu0 %185
    %189 = vset.pattern.permute.xlu0 0
    %190 = vperm.xlu0 %189, %v168
    %v191 = vpop.permute.xlu0 %190
    %194 = vset.pattern.permute.xlu0 0
    %195 = vperm.xlu0 %194, %v169
    %v196 = vpop.permute.xlu0 %195
    %199 = vset.pattern.permute.xlu0 0
    %200 = vperm.xlu0 %199, %v170
    %v201 = vpop.permute.xlu0 %200
    %204 = vset.pattern.permute.xlu0 0
    %205 = vperm.xlu0 %204, %v171
    %v206 = vpop.permute.xlu0 %205
    %209 = vset.pattern.permute.xlu0 0
    %210 = vperm.xlu0 %209, %v172
    %v211 = vpop.permute.xlu0 %210
    %214 = vset.pattern.permute.xlu0 0
    %215 = vperm.xlu0 %214, %v173
    %v216 = vpop.permute.xlu0 %215
    %219 = vset.pattern.permute.xlu0 0
    %220 = vperm.xlu0 %219, %v174
    %v221 = vpop.permute.xlu0 %220
    %224 = vset.pattern.permute.xlu0 0
    %225 = vperm.xlu0 %224, %v175
    %v226 = vpop.permute.xlu0 %225
    %229 = vset.pattern.permute.xlu0 0
    %230 = vperm.xlu0 %229, %v176
    %v231 = vpop.permute.xlu0 %230
    %234 = vset.pattern.permute.xlu0 0
    %235 = vperm.xlu0 %234, %v177
    %v236 = vpop.permute.xlu0 %235
    %vm238 = vcmask 261120
    %v240 = vsel %vm238, %v154, 0
    %v243 = vsel %vm238, %v155, 0
    %v246 = vsel %vm238, %v156, 0
    %v249 = vsel %vm238, %v157, 0
    %v252 = vsel %vm238, %v158, 0
    %v255 = vsel %vm238, %v159, 0
    %v258 = vsel %vm238, %v160, 0
    %v261 = vsel %vm238, %v161, 0
    %v264 = vsel %vm238, %v162, 0
    %v267 = vsel %vm238, %v163, 0
    %v270 = vsel %vm238, %v164, 0
    %v273 = vsel %vm238, %v165, 0
    %v276 = vsel %vm238, %v150, 0
    %v279 = vsel %vm238, %v151, 0
    %281 = vmatprep.subr.mxu0 0.0
    %282 = vmatpush1.xpose.msra.mxu0 0.0
    %283 = vmatprep.subr.mxu0 0.0
    %284 = vmatpush1.xpose.msra.mxu0 0.0
    %285 = vmatprep.subr.mxu0 0.0
    %286 = vmatpush1.xpose.msra.mxu0 0.0
    %287 = vmatprep.subr.mxu0 0.0
    %288 = vmatpush1.xpose.msra.mxu0 0.0
    %289 = vmatprep.subr.mxu0 0.0
    %290 = vmatpush1.xpose.msra.mxu0 0.0
    %291 = vmatprep.subr.mxu0 0.0
    %292 = vmatpush1.xpose.msra.mxu0 0.0
    %293 = vmatprep.subr.mxu0 0.0
    %294 = vmatpush1.xpose.msra.mxu0 0.0
    %295 = vmatprep.subr.mxu0 0.0
    %296 = vmatpush1.xpose.msra.mxu0 0.0
    %297 = vmatprep.subr.mxu0 0.0
    %298 = vmatpush1.xpose.msra.mxu0 0.0
    %299 = vmatprep.subr.mxu0 0.0
    %300 = vmatpush1.xpose.msra.mxu0 0.0
    %301 = vmatprep.subr.mxu0 0.0
    %302 = vmatpush1.xpose.msra.mxu0 0.0
    %303 = vmatprep.subr.mxu0 0.0
    %304 = vmatpush1.xpose.msra.mxu0 0.0
    %305 = vmatprep.subr.mxu0 0.0
    %306 = vmatpush1.xpose.msra.mxu0 0.0
    %307 = vmatprep.subr.mxu0 0.0
    %308 = vmatpush1.xpose.msra.mxu0 0.0
    %309 = vmatprep.subr.mxu0 0.0
    %310 = vmatpush1.xpose.msra.mxu0 %v279
    %311 = vmatprep.subr.mxu0 0.0
    %312 = vmatpush1.xpose.msra.mxu0 %v276
    %313 = vmatprep.subr.mxu0 0.0
    %314 = vmatpush2.xpose.msra.mxu0 0.0
    %315 = vmatprep.subr.mxu0 0.0
    %316 = vmatpush2.xpose.msra.mxu0 0.0
    %317 = vmatprep.subr.mxu0 0.0
    %318 = vmatpush2.xpose.msra.mxu0 0.0
    %319 = vmatprep.subr.mxu0 0.0
    %320 = vmatpush2.xpose.msra.mxu0 0.0
    %321 = vmatprep.subr.mxu0 0.0
    %322 = vmatpush2.xpose.msra.mxu0 0.0
    %323 = vmatprep.subr.mxu0 0.0
    %324 = vmatpush2.xpose.msra.mxu0 0.0
    %325 = vmatprep.subr.mxu0 0.0
    %326 = vmatpush2.xpose.msra.mxu0 0.0
    %327 = vmatprep.subr.mxu0 0.0
    %328 = vmatpush2.xpose.msra.mxu0 0.0
    %329 = vmatprep.subr.mxu0 0.0
    %330 = vmatpush2.xpose.msra.mxu0 0.0
    %331 = vmatprep.subr.mxu0 0.0
    %332 = vmatpush2.xpose.msra.mxu0 0.0
    %333 = vmatprep.subr.mxu0 0.0
    %334 = vmatpush2.xpose.msra.mxu0 0.0
    %335 = vmatprep.subr.mxu0 0.0
    %336 = vmatpush2.xpose.msra.mxu0 0.0
    %337 = vmatprep.subr.mxu0 0.0
    %338 = vmatpush2.xpose.msra.mxu0 0.0
    %339 = vmatprep.subr.mxu0 0.0
    %340 = vmatpush2.xpose.msra.mxu0 0.0
    %341 = vmatprep.subr.mxu0 0.0
    %342 = vmatpush2.xpose.msra.mxu0 0.0
    %343 = vmatprep.subr.mxu0 0.0
    %344 = vmatpush2.xpose.msra.mxu0 0.0
    %345 = vmatprep.mubr.f32.mxu0 0.0
    %346 = vmatmul.mubr.f32.gmra.mxu0 %v240
    %v347 = vpop.f32.mrf.mxu0
    %v348 = vadd.f32 %v181, %v347
    %v349 = vpop.f32.mrf.mxu0
    %350 = vmatprep.mubr.f32.mxu0 0.0
    %351 = vmatmul.mubr.f32.gmra.mxu0 %v243
    %v352 = vpop.f32.mrf.mxu0
    %v353 = vadd.f32 %v186, %v352
    %v354 = vpop.f32.mrf.mxu0
    %355 = vmatprep.mubr.f32.mxu0 0.0
    %356 = vmatmul.mubr.f32.gmra.mxu0 %v246
    %v357 = vpop.f32.mrf.mxu0
    %v358 = vadd.f32 %v191, %v357
    %v359 = vpop.f32.mrf.mxu0
    %360 = vmatprep.mubr.f32.mxu0 0.0
    %361 = vmatmul.mubr.f32.gmra.mxu0 %v249
    %v362 = vpop.f32.mrf.mxu0
    %v363 = vadd.f32 %v196, %v362
    %v364 = vpop.f32.mrf.mxu0
    %365 = vmatprep.mubr.f32.mxu0 0.0
    %366 = vmatmul.mubr.f32.gmra.mxu0 %v252
    %v367 = vpop.f32.mrf.mxu0
    %v368 = vadd.f32 %v201, %v367
    %v369 = vpop.f32.mrf.mxu0
    %370 = vmatprep.mubr.f32.mxu0 0.0
    %371 = vmatmul.mubr.f32.gmra.mxu0 %v255
    %v372 = vpop.f32.mrf.mxu0
    %v373 = vadd.f32 %v206, %v372
    %v374 = vpop.f32.mrf.mxu0
    %375 = vmatprep.mubr.f32.mxu0 0.0
    %376 = vmatmul.mubr.f32.gmra.mxu0 %v258
    %v377 = vpop.f32.mrf.mxu0
    %v378 = vadd.f32 %v211, %v377
    %v379 = vpop.f32.mrf.mxu0
    %380 = vmatprep.mubr.f32.mxu0 0.0
    %381 = vmatmul.mubr.f32.gmra.mxu0 %v261
    %v382 = vpop.f32.mrf.mxu0
    %v383 = vadd.f32 %v216, %v382
    %v384 = vpop.f32.mrf.mxu0
    %385 = vmatprep.mubr.f32.mxu0 0.0
    %386 = vmatmul.mubr.f32.gmra.mxu0 %v264
    %v387 = vpop.f32.mrf.mxu0
    %v388 = vadd.f32 %v221, %v387
    %v389 = vpop.f32.mrf.mxu0
    %390 = vmatprep.mubr.f32.mxu0 0.0
    %391 = vmatmul.mubr.f32.gmra.mxu0 %v267
    %v392 = vpop.f32.mrf.mxu0
    %v393 = vadd.f32 %v226, %v392
    %v394 = vpop.f32.mrf.mxu0
    %395 = vmatprep.mubr.f32.mxu0 0.0
    %396 = vmatmul.mubr.f32.gmra.mxu0 %v270
    %v397 = vpop.f32.mrf.mxu0
    %v398 = vadd.f32 %v231, %v397
    %v399 = vpop.f32.mrf.mxu0
    %400 = vmatprep.mubr.f32.mxu0 0.0
    %401 = vmatmul.mubr.f32.gmra.mxu0 %v273
    %v402 = vpop.f32.mrf.mxu0
    %v403 = vadd.f32 %v236, %v402
    %v404 = vpop.f32.mrf.mxu0
    %405 = vdwg.mxu0
    %v406 = vld [vmem:[%s6] sm:$0xff]
    %v407 = vld [vmem:[%s6 + $0x8] sm:$0xff]
    %v408 = vld [vmem:[%s6 + $0x10] sm:$0xff]
    %v409 = vld [vmem:[%s6 + $0x18] sm:$0xff]
    %v410 = vld [vmem:[%s6 + $0x20] sm:$0xff]
    %v411 = vld [vmem:[%s6 + $0x28] sm:$0xff]
    %v412 = vld [vmem:[%s6 + $0x30] sm:$0xff]
    %v413 = vld [vmem:[%s6 + $0x38] sm:$0xff]
    %v414 = vld [vmem:[%s6 + $0x40] sm:$0xff]
    %v415 = vld [vmem:[%s6 + $0x48] sm:$0xff]
    %v416 = vld [vmem:[%s6 + $0x50] sm:$0xff]
    %v417 = vld [vmem:[%s6 + $0x58] sm:$0xff]
    %v418 = vld [vmem:[%s7] sm:$0x7f]
    %419 = vxpose.xlu0.b32.start [1/16] %v348, 128
    %420 = vxpose.xlu0.b32.cont [2/16] 0.0, 128
    %421 = vxpose.xlu0.b32.cont [3/16] 0.0, 128
    %422 = vxpose.xlu0.b32.cont [4/16] 0.0, 128
    %423 = vxpose.xlu0.b32.cont [5/16] 0.0, 128
    %424 = vxpose.xlu0.b32.cont [6/16] 0.0, 128
    %425 = vxpose.xlu0.b32.cont [7/16] 0.0, 128
    %426 = vxpose.xlu0.b32.cont [8/16] 0.0, 128
    %427 = vxpose.xlu0.b32.cont [9/16] 0.0, 128
    %428 = vxpose.xlu0.b32.cont [10/16] 0.0, 128
    %429 = vxpose.xlu0.b32.cont [11/16] 0.0, 128
    %430 = vxpose.xlu0.b32.cont [12/16] 0.0, 128
    %431 = vxpose.xlu0.b32.cont [13/16] 0.0, 128
    %432 = vxpose.xlu0.b32.cont [14/16] 0.0, 128
    %433 = vxpose.xlu0.b32.cont [15/16] 0.0, 128
    %434 = vxpose.xlu0.b32.end [16/16] 0.0, 128
    %v435 = vpop.trf.xlu0
    %v436 = vpop.trf.xlu0
    %v437 = vpop.trf.xlu0
    %v438 = vpop.trf.xlu0
    %v439 = vpop.trf.xlu0
    %v440 = vpop.trf.xlu0
    %v441 = vpop.trf.xlu0
    %v442 = vpop.trf.xlu0
    %v443 = vpop.trf.xlu0
    %v444 = vpop.trf.xlu0
    %v445 = vpop.trf.xlu0
    %v446 = vpop.trf.xlu0
    %v447 = vpop.trf.xlu0
    %v448 = vpop.trf.xlu0
    %v449 = vpop.trf.xlu0
    %v450 = vpop.trf.xlu0
    %vm451 = vcmask 64512
    %v453 = vsel %vm451, %v435, 0
    %v456 = vsel %vm451, %v436, 0
    %458 = vmatprep.subr.mxu0 0.0
    %459 = vmatpush1.msra.mxu0 0.0
    %460 = vmatprep.subr.mxu0 0.0
    %461 = vmatpush1.msra.mxu0 0.0
    %462 = vmatprep.subr.mxu0 0.0
    %463 = vmatpush1.msra.mxu0 0.0
    %464 = vmatprep.subr.mxu0 0.0
    %465 = vmatpush1.msra.mxu0 0.0
    %466 = vmatprep.subr.mxu0 0.0
    %467 = vmatpush1.msra.mxu0 0.0
    %468 = vmatprep.subr.mxu0 0.0
    %469 = vmatpush1.msra.mxu0 0.0
    %470 = vmatprep.subr.mxu0 0.0
    %471 = vmatpush1.msra.mxu0 0.0
    %472 = vmatprep.subr.mxu0 0.0
    %473 = vmatpush1.msra.mxu0 0.0
    %474 = vmatprep.subr.mxu0 0.0
    %475 = vmatpush1.msra.mxu0 0.0
    %476 = vmatprep.subr.mxu0 0.0
    %477 = vmatpush1.msra.mxu0 0.0
    %478 = vmatprep.subr.mxu0 0.0
    %479 = vmatpush1.msra.mxu0 0.0
    %480 = vmatprep.subr.mxu0 0.0
    %481 = vmatpush1.msra.mxu0 0.0
    %482 = vmatprep.subr.mxu0 0.0
    %483 = vmatpush1.msra.mxu0 0.0
    %484 = vmatprep.subr.mxu0 0.0
    %485 = vmatpush1.msra.mxu0 0.0
    %486 = vmatprep.subr.mxu0 0.0
    %487 = vmatpush1.msra.mxu0 0.0
    %488 = vmatprep.subr.mxu0 0.0
    %489 = vmatpush1.msra.mxu0 %v368
    %490 = vmatprep.subr.mxu0 0.0
    %491 = vmatpush2.msra.mxu0 0.0
    %492 = vmatprep.subr.mxu0 0.0
    %493 = vmatpush2.msra.mxu0 0.0
    %494 = vmatprep.subr.mxu0 0.0
    %495 = vmatpush2.msra.mxu0 0.0
    %496 = vmatprep.subr.mxu0 0.0
    %497 = vmatpush2.msra.mxu0 0.0
    %498 = vmatprep.subr.mxu0 0.0
    %499 = vmatpush2.msra.mxu0 0.0
    %500 = vmatprep.subr.mxu0 0.0
    %501 = vmatpush2.msra.mxu0 0.0
    %502 = vmatprep.subr.mxu0 0.0
    %503 = vmatpush2.msra.mxu0 0.0
    %504 = vmatprep.subr.mxu0 0.0
    %505 = vmatpush2.msra.mxu0 0.0
    %506 = vmatprep.subr.mxu0 0.0
    %507 = vmatpush2.msra.mxu0 0.0
    %508 = vmatprep.subr.mxu0 0.0
    %509 = vmatpush2.msra.mxu0 0.0
    %510 = vmatprep.subr.mxu0 0.0
    %511 = vmatpush2.msra.mxu0 0.0
    %512 = vmatprep.subr.mxu0 0.0
    %513 = vmatpush2.msra.mxu0 0.0
    %514 = vmatprep.subr.mxu0 0.0
    %515 = vmatpush2.msra.mxu0 0.0
    %516 = vmatprep.subr.mxu0 0.0
    %517 = vmatpush2.msra.mxu0 0.0
    %518 = vmatprep.subr.mxu0 0.0
    %519 = vmatpush2.msra.mxu0 0.0
    %520 = vmatprep.subr.mxu0 0.0
    %521 = vmatpush2.msra.mxu0 0.0
    %522 = vmatprep.mubr.f32.mxu0 0.0
    %523 = vmatmul.mubr.f32.gmra.mxu0 %v453
    %v524 = vpop.f32.mrf.mxu0
    %v525 = vadd.f32 0.0, %v524
    %v526 = vpop.f32.mrf.mxu0
    %527 = vmatprep.mubr.f32.mxu0 0.0
    %528 = vmatmul.mubr.f32.gmra.mxu0 %v456
    %v529 = vpop.f32.mrf.mxu0
    %v530 = vadd.f32 0.0, %v529
    %v531 = vpop.f32.mrf.mxu0
    %532 = vdwg.mxu0
    %v533 = vmul.f32 %v525, 0.35355338
    %v534 = vmul.f32 %v530, 0.35355338
    %v535 = vadd.f32 %v533, %v152
    %v536 = vadd.f32 %v534, %v153
    %vm537 = vcmask 130048
    %v538 = vsel %vm537, %v535, -inf
    %539 = vmax.xlane.f32.xlu0 %v538
    %v540 = vpop.xlane.xlu0 %539
    %v541 = vsel %vm537, %v536, -inf
    %542 = vmax.xlane.f32.xlu0 %v541
    %v543 = vpop.xlane.xlu0 %542
    %v544 = vsub.f32 %v535, %v540
    %v545 = vsub.f32 %v536, %v543
    %v546 = vmul.f32 %v544, 1.442695
    %v547 = vpow.pop %v546
    %v548 = vmul.f32 %v545, 1.442695
    %v549 = vpow.pop %v548
    %v550 = vsel %vm537, %v547, 0.0
    %551 = vadd.xlane.f32.xlu0 %v550
    %v552 = vpop.xlane.xlu0 %551
    %v553 = vsel %vm537, %v549, 0.0
    %554 = vadd.xlane.f32.xlu0 %v553
    %v555 = vpop.xlane.xlu0 %554
    %v556 = vrcp.pop %v552
    %v557 = vrcp.pop %v555
    %v558 = vmul.f32 %v547, %v556
    %v559 = vmul.f32 %v549, %v557
    %v561 = vsel %vm537, %v558, 0
    %v564 = vsel %vm537, %v559, 0
    %v567 = vsel %vm537, %v388, 0
    %569 = vmatprep.subr.mxu0 0.0
    %570 = vmatpush1.xpose.msra.mxu0 0.0
    %571 = vmatprep.subr.mxu0 0.0
    %572 = vmatpush1.xpose.msra.mxu0 0.0
    %573 = vmatprep.subr.mxu0 0.0
    %574 = vmatpush1.xpose.msra.mxu0 0.0
    %575 = vmatprep.subr.mxu0 0.0
    %576 = vmatpush1.xpose.msra.mxu0 0.0
    %577 = vmatprep.subr.mxu0 0.0
    %578 = vmatpush1.xpose.msra.mxu0 0.0
    %579 = vmatprep.subr.mxu0 0.0
    %580 = vmatpush1.xpose.msra.mxu0 0.0
    %581 = vmatprep.subr.mxu0 0.0
    %582 = vmatpush1.xpose.msra.mxu0 0.0
    %583 = vmatprep.subr.mxu0 0.0
    %584 = vmatpush1.xpose.msra.mxu0 0.0
    %585 = vmatprep.subr.mxu0 0.0
    %586 = vmatpush1.xpose.msra.mxu0 0.0
    %587 = vmatprep.subr.mxu0 0.0
    %588 = vmatpush1.xpose.msra.mxu0 0.0
    %589 = vmatprep.subr.mxu0 0.0
    %590 = vmatpush1.xpose.msra.mxu0 0.0
    %591 = vmatprep.subr.mxu0 0.0
    %592 = vmatpush1.xpose.msra.mxu0 0.0
    %593 = vmatprep.subr.mxu0 0.0
    %594 = vmatpush1.xpose.msra.mxu0 0.0
    %595 = vmatprep.subr.mxu0 0.0
    %596 = vmatpush1.xpose.msra.mxu0 0.0
    %597 = vmatprep.subr.mxu0 0.0
    %598 = vmatpush1.xpose.msra.mxu0 0.0
    %599 = vmatprep.subr.mxu0 0.0
    %600 = vmatpush1.xpose.msra.mxu0 %v567
    %601 = vmatprep.subr.mxu0 0.0
    %602 = vmatpush2.xpose.msra.mxu0 0.0
    %603 = vmatprep.subr.mxu0 0.0
    %604 = vmatpush2.xpose.msra.mxu0 0.0
    %605 = vmatprep.subr.mxu0 0.0
    %606 = vmatpush2.xpose.msra.mxu0 0.0
    %607 = vmatprep.subr.mxu0 0.0
    %608 = vmatpush2.xpose.msra.mxu0 0.0
    %609 = vmatprep.subr.mxu0 0.0
    %610 = vmatpush2.xpose.msra.mxu0 0.0
    %611 = vmatprep.subr.mxu0 0.0
    %612 = vmatpush2.xpose.msra.mxu0 0.0
    %613 = vmatprep.subr.mxu0 0.0
    %614 = vmatpush2.xpose.msra.mxu0 0.0
    %615 = vmatprep.subr.mxu0 0.0
    %616 = vmatpush2.xpose.msra.mxu0 0.0
    %617 = vmatprep.subr.mxu0 0.0
    %618 = vmatpush2.xpose.msra.mxu0 0.0
    %619 = vmatprep.subr.mxu0 0.0
    %620 = vmatpush2.xpose.msra.mxu0 0.0
    %621 = vmatprep.subr.mxu0 0.0
    %622 = vmatpush2.xpose.msra.mxu0 0.0
    %623 = vmatprep.subr.mxu0 0.0
    %624 = vmatpush2.xpose.msra.mxu0 0.0
    %625 = vmatprep.subr.mxu0 0.0
    %626 = vmatpush2.xpose.msra.mxu0 0.0
    %627 = vmatprep.subr.mxu0 0.0
    %628 = vmatpush2.xpose.msra.mxu0 0.0
    %629 = vmatprep.subr.mxu0 0.0
    %630 = vmatpush2.xpose.msra.mxu0 0.0
    %631 = vmatprep.subr.mxu0 0.0
    %632 = vmatpush2.xpose.msra.mxu0 0.0
    %633 = vmatprep.mubr.f32.mxu0 0.0
    %634 = vmatmul.mubr.f32.gmra.mxu0 %v561
    %v635 = vpop.f32.mrf.mxu0
    %v636 = vadd.f32 0.0, %v635
    %v637 = vpop.f32.mrf.mxu0
    %638 = vmatprep.mubr.f32.mxu0 0.0
    %639 = vmatmul.mubr.f32.gmra.mxu0 %v564
    %v640 = vpop.f32.mrf.mxu0
    %v641 = vadd.f32 0.0, %v640
    %v642 = vpop.f32.mrf.mxu0
    %643 = vdwg.mxu0
    %644 = vxpose.xlu0.b32.start [1/16] %v353, 128
    %645 = vxpose.xlu0.b32.cont [2/16] 0.0, 128
    %646 = vxpose.xlu0.b32.cont [3/16] 0.0, 128
    %647 = vxpose.xlu0.b32.cont [4/16] 0.0, 128
    %648 = vxpose.xlu0.b32.cont [5/16] 0.0, 128
    %649 = vxpose.xlu0.b32.cont [6/16] 0.0, 128
    %650 = vxpose.xlu0.b32.cont [7/16] 0.0, 128
    %651 = vxpose.xlu0.b32.cont [8/16] 0.0, 128
    %652 = vxpose.xlu0.b32.cont [9/16] 0.0, 128
    %653 = vxpose.xlu0.b32.cont [10/16] 0.0, 128
    %654 = vxpose.xlu0.b32.cont [11/16] 0.0, 128
    %655 = vxpose.xlu0.b32.cont [12/16] 0.0, 128
    %656 = vxpose.xlu0.b32.cont [13/16] 0.0, 128
    %657 = vxpose.xlu0.b32.cont [14/16] 0.0, 128
    %658 = vxpose.xlu0.b32.cont [15/16] 0.0, 128
    %659 = vxpose.xlu0.b32.end [16/16] 0.0, 128
    %v660 = vpop.trf.xlu0
    %v661 = vpop.trf.xlu0
    %v662 = vpop.trf.xlu0
    %v663 = vpop.trf.xlu0
    %v664 = vpop.trf.xlu0
    %v665 = vpop.trf.xlu0
    %v666 = vpop.trf.xlu0
    %v667 = vpop.trf.xlu0
    %v668 = vpop.trf.xlu0
    %v669 = vpop.trf.xlu0
    %v670 = vpop.trf.xlu0
    %v671 = vpop.trf.xlu0
    %v672 = vpop.trf.xlu0
    %v673 = vpop.trf.xlu0
    %v674 = vpop.trf.xlu0
    %v675 = vpop.trf.xlu0
    %v677 = vsel %vm451, %v660, 0
    %v680 = vsel %vm451, %v661, 0
    %682 = vmatprep.subr.mxu0 0.0
    %683 = vmatpush1.msra.mxu0 0.0
    %684 = vmatprep.subr.mxu0 0.0
    %685 = vmatpush1.msra.mxu0 0.0
    %686 = vmatprep.subr.mxu0 0.0
    %687 = vmatpush1.msra.mxu0 0.0
    %688 = vmatprep.subr.mxu0 0.0
    %689 = vmatpush1.msra.mxu0 0.0
    %690 = vmatprep.subr.mxu0 0.0
    %691 = vmatpush1.msra.mxu0 0.0
    %692 = vmatprep.subr.mxu0 0.0
    %693 = vmatpush1.msra.mxu0 0.0
    %694 = vmatprep.subr.mxu0 0.0
    %695 = vmatpush1.msra.mxu0 0.0
    %696 = vmatprep.subr.mxu0 0.0
    %697 = vmatpush1.msra.mxu0 0.0
    %698 = vmatprep.subr.mxu0 0.0
    %699 = vmatpush1.msra.mxu0 0.0
    %700 = vmatprep.subr.mxu0 0.0
    %701 = vmatpush1.msra.mxu0 0.0
    %702 = vmatprep.subr.mxu0 0.0
    %703 = vmatpush1.msra.mxu0 0.0
    %704 = vmatprep.subr.mxu0 0.0
    %705 = vmatpush1.msra.mxu0 0.0
    %706 = vmatprep.subr.mxu0 0.0
    %707 = vmatpush1.msra.mxu0 0.0
    %708 = vmatprep.subr.mxu0 0.0
    %709 = vmatpush1.msra.mxu0 0.0
    %710 = vmatprep.subr.mxu0 0.0
    %711 = vmatpush1.msra.mxu0 0.0
    %712 = vmatprep.subr.mxu0 0.0
    %713 = vmatpush1.msra.mxu0 %v373
    %714 = vmatprep.subr.mxu0 0.0
    %715 = vmatpush2.msra.mxu0 0.0
    %716 = vmatprep.subr.mxu0 0.0
    %717 = vmatpush2.msra.mxu0 0.0
    %718 = vmatprep.subr.mxu0 0.0
    %719 = vmatpush2.msra.mxu0 0.0
    %720 = vmatprep.subr.mxu0 0.0
    %721 = vmatpush2.msra.mxu0 0.0
    %722 = vmatprep.subr.mxu0 0.0
    %723 = vmatpush2.msra.mxu0 0.0
    %724 = vmatprep.subr.mxu0 0.0
    %725 = vmatpush2.msra.mxu0 0.0
    %726 = vmatprep.subr.mxu0 0.0
    %727 = vmatpush2.msra.mxu0 0.0
    %728 = vmatprep.subr.mxu0 0.0
    %729 = vmatpush2.msra.mxu0 0.0
    %730 = vmatprep.subr.mxu0 0.0
    %731 = vmatpush2.msra.mxu0 0.0
    %732 = vmatprep.subr.mxu0 0.0
    %733 = vmatpush2.msra.mxu0 0.0
    %734 = vmatprep.subr.mxu0 0.0
    %735 = vmatpush2.msra.mxu0 0.0
    %736 = vmatprep.subr.mxu0 0.0
    %737 = vmatpush2.msra.mxu0 0.0
    %738 = vmatprep.subr.mxu0 0.0
    %739 = vmatpush2.msra.mxu0 0.0
    %740 = vmatprep.subr.mxu0 0.0
    %741 = vmatpush2.msra.mxu0 0.0
    %742 = vmatprep.subr.mxu0 0.0
    %743 = vmatpush2.msra.mxu0 0.0
    %744 = vmatprep.subr.mxu0 0.0
    %745 = vmatpush2.msra.mxu0 0.0
    %746 = vmatprep.mubr.f32.mxu0 0.0
    %747 = vmatmul.mubr.f32.gmra.mxu0 %v677
    %v748 = vpop.f32.mrf.mxu0
    %v749 = vadd.f32 0.0, %v748
    %v750 = vpop.f32.mrf.mxu0
    %751 = vmatprep.mubr.f32.mxu0 0.0
    %752 = vmatmul.mubr.f32.gmra.mxu0 %v680
    %v753 = vpop.f32.mrf.mxu0
    %v754 = vadd.f32 0.0, %v753
    %v755 = vpop.f32.mrf.mxu0
    %756 = vdwg.mxu0
    %v757 = vmul.f32 %v749, 0.35355338
    %v758 = vmul.f32 %v754, 0.35355338
    %v759 = vadd.f32 %v757, %v152
    %v760 = vadd.f32 %v758, %v153
    %v761 = vsel %vm537, %v759, -inf
    %762 = vmax.xlane.f32.xlu0 %v761
    %v763 = vpop.xlane.xlu0 %762
    %v764 = vsel %vm537, %v760, -inf
    %765 = vmax.xlane.f32.xlu0 %v764
    %v766 = vpop.xlane.xlu0 %765
    %v767 = vsub.f32 %v759, %v763
    %v768 = vsub.f32 %v760, %v766
    %v769 = vmul.f32 %v767, 1.442695
    %v770 = vpow.pop %v769
    %v771 = vmul.f32 %v768, 1.442695
    %v772 = vpow.pop %v771
    %v773 = vsel %vm537, %v770, 0.0
    %774 = vadd.xlane.f32.xlu0 %v773
    %v775 = vpop.xlane.xlu0 %774
    %v776 = vsel %vm537, %v772, 0.0
    %777 = vadd.xlane.f32.xlu0 %v776
    %v778 = vpop.xlane.xlu0 %777
    %v779 = vrcp.pop %v775
    %v780 = vrcp.pop %v778
    %v781 = vmul.f32 %v770, %v779
    %v782 = vmul.f32 %v772, %v780
    %v784 = vsel %vm537, %v781, 0
    %v787 = vsel %vm537, %v782, 0
    %v790 = vsel %vm537, %v393, 0
    %792 = vmatprep.subr.mxu0 0.0
    %793 = vmatpush1.xpose.msra.mxu0 0.0
    %794 = vmatprep.subr.mxu0 0.0
    %795 = vmatpush1.xpose.msra.mxu0 0.0
    %796 = vmatprep.subr.mxu0 0.0
    %797 = vmatpush1.xpose.msra.mxu0 0.0
    %798 = vmatprep.subr.mxu0 0.0
    %799 = vmatpush1.xpose.msra.mxu0 0.0
    %800 = vmatprep.subr.mxu0 0.0
    %801 = vmatpush1.xpose.msra.mxu0 0.0
    %802 = vmatprep.subr.mxu0 0.0
    %803 = vmatpush1.xpose.msra.mxu0 0.0
    %804 = vmatprep.subr.mxu0 0.0
    %805 = vmatpush1.xpose.msra.mxu0 0.0
    %806 = vmatprep.subr.mxu0 0.0
    %807 = vmatpush1.xpose.msra.mxu0 0.0
    %808 = vmatprep.subr.mxu0 0.0
    %809 = vmatpush1.xpose.msra.mxu0 0.0
    %810 = vmatprep.subr.mxu0 0.0
    %811 = vmatpush1.xpose.msra.mxu0 0.0
    %812 = vmatprep.subr.mxu0 0.0
    %813 = vmatpush1.xpose.msra.mxu0 0.0
    %814 = vmatprep.subr.mxu0 0.0
    %815 = vmatpush1.xpose.msra.mxu0 0.0
    %816 = vmatprep.subr.mxu0 0.0
    %817 = vmatpush1.xpose.msra.mxu0 0.0
    %818 = vmatprep.subr.mxu0 0.0
    %819 = vmatpush1.xpose.msra.mxu0 0.0
    %820 = vmatprep.subr.mxu0 0.0
    %821 = vmatpush1.xpose.msra.mxu0 0.0
    %822 = vmatprep.subr.mxu0 0.0
    %823 = vmatpush1.xpose.msra.mxu0 %v790
    %824 = vmatprep.subr.mxu0 0.0
    %825 = vmatpush2.xpose.msra.mxu0 0.0
    %826 = vmatprep.subr.mxu0 0.0
    %827 = vmatpush2.xpose.msra.mxu0 0.0
    %828 = vmatprep.subr.mxu0 0.0
    %829 = vmatpush2.xpose.msra.mxu0 0.0
    %830 = vmatprep.subr.mxu0 0.0
    %831 = vmatpush2.xpose.msra.mxu0 0.0
    %832 = vmatprep.subr.mxu0 0.0
    %833 = vmatpush2.xpose.msra.mxu0 0.0
    %834 = vmatprep.subr.mxu0 0.0
    %835 = vmatpush2.xpose.msra.mxu0 0.0
    %836 = vmatprep.subr.mxu0 0.0
    %837 = vmatpush2.xpose.msra.mxu0 0.0
    %838 = vmatprep.subr.mxu0 0.0
    %839 = vmatpush2.xpose.msra.mxu0 0.0
    %840 = vmatprep.subr.mxu0 0.0
    %841 = vmatpush2.xpose.msra.mxu0 0.0
    %842 = vmatprep.subr.mxu0 0.0
    %843 = vmatpush2.xpose.msra.mxu0 0.0
    %844 = vmatprep.subr.mxu0 0.0
    %845 = vmatpush2.xpose.msra.mxu0 0.0
    %846 = vmatprep.subr.mxu0 0.0
    %847 = vmatpush2.xpose.msra.mxu0 0.0
    %848 = vmatprep.subr.mxu0 0.0
    %849 = vmatpush2.xpose.msra.mxu0 0.0
    %850 = vmatprep.subr.mxu0 0.0
    %851 = vmatpush2.xpose.msra.mxu0 0.0
    %852 = vmatprep.subr.mxu0 0.0
    %853 = vmatpush2.xpose.msra.mxu0 0.0
    %854 = vmatprep.subr.mxu0 0.0
    %855 = vmatpush2.xpose.msra.mxu0 0.0
    %856 = vmatprep.mubr.f32.mxu0 0.0
    %857 = vmatmul.mubr.f32.gmra.mxu0 %v784
    %v858 = vpop.f32.mrf.mxu0
    %v859 = vadd.f32 0.0, %v858
    %v860 = vpop.f32.mrf.mxu0
    %861 = vmatprep.mubr.f32.mxu0 0.0
    %862 = vmatmul.mubr.f32.gmra.mxu0 %v787
    %v863 = vpop.f32.mrf.mxu0
    %v864 = vadd.f32 0.0, %v863
    %v865 = vpop.f32.mrf.mxu0
    %866 = vdwg.mxu0
    %v868 = vsel %vm451, %v859, 0
    %v871 = vsel %vm451, %v864, 0
    %873 = vmatprep.subr.mxu0 0.0
    %874 = vmatpush1.msra.mxu0 0.0
    %875 = vmatprep.subr.mxu0 0.0
    %876 = vmatpush1.msra.mxu0 0.0
    %877 = vmatprep.subr.mxu0 0.0
    %878 = vmatpush1.msra.mxu0 0.0
    %879 = vmatprep.subr.mxu0 0.0
    %880 = vmatpush1.msra.mxu0 0.0
    %881 = vmatprep.subr.mxu0 0.0
    %882 = vmatpush1.msra.mxu0 0.0
    %883 = vmatprep.subr.mxu0 0.0
    %884 = vmatpush1.msra.mxu0 0.0
    %885 = vmatprep.subr.mxu0 0.0
    %886 = vmatpush1.msra.mxu0 0.0
    %887 = vmatprep.subr.mxu0 0.0
    %888 = vmatpush1.msra.mxu0 0.0
    %889 = vmatprep.subr.mxu0 0.0
    %890 = vmatpush1.msra.mxu0 0.0
    %891 = vmatprep.subr.mxu0 0.0
    %892 = vmatpush1.msra.mxu0 0.0
    %893 = vmatprep.subr.mxu0 0.0
    %894 = vmatpush1.msra.mxu0 0.0
    %895 = vmatprep.subr.mxu0 0.0
    %896 = vmatpush1.msra.mxu0 0.0
    %897 = vmatprep.subr.mxu0 0.0
    %898 = vmatpush1.msra.mxu0 0.0
    %899 = vmatprep.subr.mxu0 0.0
    %900 = vmatpush1.msra.mxu0 0.0
    %901 = vmatprep.subr.mxu0 0.0
    %902 = vmatpush1.msra.mxu0 0.0
    %903 = vmatprep.subr.mxu0 0.0
    %904 = vmatpush1.msra.mxu0 %v407
    %905 = vmatprep.subr.mxu0 0.0
    %906 = vmatpush2.msra.mxu0 0.0
    %907 = vmatprep.subr.mxu0 0.0
    %908 = vmatpush2.msra.mxu0 0.0
    %909 = vmatprep.subr.mxu0 0.0
    %910 = vmatpush2.msra.mxu0 0.0
    %911 = vmatprep.subr.mxu0 0.0
    %912 = vmatpush2.msra.mxu0 0.0
    %913 = vmatprep.subr.mxu0 0.0
    %914 = vmatpush2.msra.mxu0 0.0
    %915 = vmatprep.subr.mxu0 0.0
    %916 = vmatpush2.msra.mxu0 0.0
    %917 = vmatprep.subr.mxu0 0.0
    %918 = vmatpush2.msra.mxu0 0.0
    %919 = vmatprep.subr.mxu0 0.0
    %920 = vmatpush2.msra.mxu0 0.0
    %921 = vmatprep.subr.mxu0 0.0
    %922 = vmatpush2.msra.mxu0 0.0
    %923 = vmatprep.subr.mxu0 0.0
    %924 = vmatpush2.msra.mxu0 0.0
    %925 = vmatprep.subr.mxu0 0.0
    %926 = vmatpush2.msra.mxu0 0.0
    %927 = vmatprep.subr.mxu0 0.0
    %928 = vmatpush2.msra.mxu0 0.0
    %929 = vmatprep.subr.mxu0 0.0
    %930 = vmatpush2.msra.mxu0 0.0
    %931 = vmatprep.subr.mxu0 0.0
    %932 = vmatpush2.msra.mxu0 0.0
    %933 = vmatprep.subr.mxu0 0.0
    %934 = vmatpush2.msra.mxu0 0.0
    %935 = vmatprep.subr.mxu0 0.0
    %936 = vmatpush2.msra.mxu0 0.0
    %937 = vmatprep.mubr.f32.mxu0 0.0
    %938 = vmatmul.mubr.f32.gmra.mxu0 %v868
    %v939 = vpop.f32.mrf.mxu0
    %v940 = vadd.f32 0.0, %v939
    %v941 = vpop.f32.mrf.mxu0
    %942 = vmatprep.mubr.f32.mxu0 0.0
    %943 = vmatmul.mubr.f32.gmra.mxu0 %v871
    %v944 = vpop.f32.mrf.mxu0
    %v945 = vadd.f32 0.0, %v944
    %v946 = vpop.f32.mrf.mxu0
    %947 = vdwg.mxu0
    %v949 = vsel %vm451, %v636, 0
    %v952 = vsel %vm451, %v641, 0
    %954 = vmatprep.subr.mxu0 0.0
    %955 = vmatpush1.msra.mxu0 0.0
    %956 = vmatprep.subr.mxu0 0.0
    %957 = vmatpush1.msra.mxu0 0.0
    %958 = vmatprep.subr.mxu0 0.0
    %959 = vmatpush1.msra.mxu0 0.0
    %960 = vmatprep.subr.mxu0 0.0
    %961 = vmatpush1.msra.mxu0 0.0
    %962 = vmatprep.subr.mxu0 0.0
    %963 = vmatpush1.msra.mxu0 0.0
    %964 = vmatprep.subr.mxu0 0.0
    %965 = vmatpush1.msra.mxu0 0.0
    %966 = vmatprep.subr.mxu0 0.0
    %967 = vmatpush1.msra.mxu0 0.0
    %968 = vmatprep.subr.mxu0 0.0
    %969 = vmatpush1.msra.mxu0 0.0
    %970 = vmatprep.subr.mxu0 0.0
    %971 = vmatpush1.msra.mxu0 0.0
    %972 = vmatprep.subr.mxu0 0.0
    %973 = vmatpush1.msra.mxu0 0.0
    %974 = vmatprep.subr.mxu0 0.0
    %975 = vmatpush1.msra.mxu0 0.0
    %976 = vmatprep.subr.mxu0 0.0
    %977 = vmatpush1.msra.mxu0 0.0
    %978 = vmatprep.subr.mxu0 0.0
    %979 = vmatpush1.msra.mxu0 0.0
    %980 = vmatprep.subr.mxu0 0.0
    %981 = vmatpush1.msra.mxu0 0.0
    %982 = vmatprep.subr.mxu0 0.0
    %983 = vmatpush1.msra.mxu0 0.0
    %984 = vmatprep.subr.mxu0 0.0
    %985 = vmatpush1.msra.mxu0 %v406
    %986 = vmatprep.subr.mxu0 0.0
    %987 = vmatpush2.msra.mxu0 0.0
    %988 = vmatprep.subr.mxu0 0.0
    %989 = vmatpush2.msra.mxu0 0.0
    %990 = vmatprep.subr.mxu0 0.0
    %991 = vmatpush2.msra.mxu0 0.0
    %992 = vmatprep.subr.mxu0 0.0
    %993 = vmatpush2.msra.mxu0 0.0
    %994 = vmatprep.subr.mxu0 0.0
    %995 = vmatpush2.msra.mxu0 0.0
    %996 = vmatprep.subr.mxu0 0.0
    %997 = vmatpush2.msra.mxu0 0.0
    %998 = vmatprep.subr.mxu0 0.0
    %999 = vmatpush2.msra.mxu0 0.0
    %1000 = vmatprep.subr.mxu0 0.0
    %1001 = vmatpush2.msra.mxu0 0.0
    %1002 = vmatprep.subr.mxu0 0.0
    %1003 = vmatpush2.msra.mxu0 0.0
    %1004 = vmatprep.subr.mxu0 0.0
    %1005 = vmatpush2.msra.mxu0 0.0
    %1006 = vmatprep.subr.mxu0 0.0
    %1007 = vmatpush2.msra.mxu0 0.0
    %1008 = vmatprep.subr.mxu0 0.0
    %1009 = vmatpush2.msra.mxu0 0.0
    %1010 = vmatprep.subr.mxu0 0.0
    %1011 = vmatpush2.msra.mxu0 0.0
    %1012 = vmatprep.subr.mxu0 0.0
    %1013 = vmatpush2.msra.mxu0 0.0
    %1014 = vmatprep.subr.mxu0 0.0
    %1015 = vmatpush2.msra.mxu0 0.0
    %1016 = vmatprep.subr.mxu0 0.0
    %1017 = vmatpush2.msra.mxu0 0.0
    %1018 = vmatprep.mubr.f32.mxu0 0.0
    %1019 = vmatmul.mubr.f32.gmra.mxu0 %v949
    %v1020 = vpop.f32.mrf.mxu0
    %v1021 = vadd.f32 %v940, %v1020
    %v1022 = vpop.f32.mrf.mxu0
    %1023 = vmatprep.mubr.f32.mxu0 0.0
    %1024 = vmatmul.mubr.f32.gmra.mxu0 %v952
    %v1025 = vpop.f32.mrf.mxu0
    %v1026 = vadd.f32 %v945, %v1025
    %v1027 = vpop.f32.mrf.mxu0
    %1028 = vdwg.mxu0
    %1029 = vxpose.xlu0.b32.start [1/16] %v358, 128
    %1030 = vxpose.xlu0.b32.cont [2/16] 0.0, 128
    %1031 = vxpose.xlu0.b32.cont [3/16] 0.0, 128
    %1032 = vxpose.xlu0.b32.cont [4/16] 0.0, 128
    %1033 = vxpose.xlu0.b32.cont [5/16] 0.0, 128
    %1034 = vxpose.xlu0.b32.cont [6/16] 0.0, 128
    %1035 = vxpose.xlu0.b32.cont [7/16] 0.0, 128
    %1036 = vxpose.xlu0.b32.cont [8/16] 0.0, 128
    %1037 = vxpose.xlu0.b32.cont [9/16] 0.0, 128
    %1038 = vxpose.xlu0.b32.cont [10/16] 0.0, 128
    %1039 = vxpose.xlu0.b32.cont [11/16] 0.0, 128
    %1040 = vxpose.xlu0.b32.cont [12/16] 0.0, 128
    %1041 = vxpose.xlu0.b32.cont [13/16] 0.0, 128
    %1042 = vxpose.xlu0.b32.cont [14/16] 0.0, 128
    %1043 = vxpose.xlu0.b32.cont [15/16] 0.0, 128
    %1044 = vxpose.xlu0.b32.end [16/16] 0.0, 128
    %v1045 = vpop.trf.xlu0
    %v1046 = vpop.trf.xlu0
    %v1047 = vpop.trf.xlu0
    %v1048 = vpop.trf.xlu0
    %v1049 = vpop.trf.xlu0
    %v1050 = vpop.trf.xlu0
    %v1051 = vpop.trf.xlu0
    %v1052 = vpop.trf.xlu0
    %v1053 = vpop.trf.xlu0
    %v1054 = vpop.trf.xlu0
    %v1055 = vpop.trf.xlu0
    %v1056 = vpop.trf.xlu0
    %v1057 = vpop.trf.xlu0
    %v1058 = vpop.trf.xlu0
    %v1059 = vpop.trf.xlu0
    %v1060 = vpop.trf.xlu0
    %v1062 = vsel %vm451, %v1045, 0
    %v1065 = vsel %vm451, %v1046, 0
    %1067 = vmatprep.subr.mxu0 0.0
    %1068 = vmatpush1.msra.mxu0 0.0
    %1069 = vmatprep.subr.mxu0 0.0
    %1070 = vmatpush1.msra.mxu0 0.0
    %1071 = vmatprep.subr.mxu0 0.0
    %1072 = vmatpush1.msra.mxu0 0.0
    %1073 = vmatprep.subr.mxu0 0.0
    %1074 = vmatpush1.msra.mxu0 0.0
    %1075 = vmatprep.subr.mxu0 0.0
    %1076 = vmatpush1.msra.mxu0 0.0
    %1077 = vmatprep.subr.mxu0 0.0
    %1078 = vmatpush1.msra.mxu0 0.0
    %1079 = vmatprep.subr.mxu0 0.0
    %1080 = vmatpush1.msra.mxu0 0.0
    %1081 = vmatprep.subr.mxu0 0.0
    %1082 = vmatpush1.msra.mxu0 0.0
    %1083 = vmatprep.subr.mxu0 0.0
    %1084 = vmatpush1.msra.mxu0 0.0
    %1085 = vmatprep.subr.mxu0 0.0
    %1086 = vmatpush1.msra.mxu0 0.0
    %1087 = vmatprep.subr.mxu0 0.0
    %1088 = vmatpush1.msra.mxu0 0.0
    %1089 = vmatprep.subr.mxu0 0.0
    %1090 = vmatpush1.msra.mxu0 0.0
    %1091 = vmatprep.subr.mxu0 0.0
    %1092 = vmatpush1.msra.mxu0 0.0
    %1093 = vmatprep.subr.mxu0 0.0
    %1094 = vmatpush1.msra.mxu0 0.0
    %1095 = vmatprep.subr.mxu0 0.0
    %1096 = vmatpush1.msra.mxu0 0.0
    %1097 = vmatprep.subr.mxu0 0.0
    %1098 = vmatpush1.msra.mxu0 %v378
    %1099 = vmatprep.subr.mxu0 0.0
    %1100 = vmatpush2.msra.mxu0 0.0
    %1101 = vmatprep.subr.mxu0 0.0
    %1102 = vmatpush2.msra.mxu0 0.0
    %1103 = vmatprep.subr.mxu0 0.0
    %1104 = vmatpush2.msra.mxu0 0.0
    %1105 = vmatprep.subr.mxu0 0.0
    %1106 = vmatpush2.msra.mxu0 0.0
    %1107 = vmatprep.subr.mxu0 0.0
    %1108 = vmatpush2.msra.mxu0 0.0
    %1109 = vmatprep.subr.mxu0 0.0
    %1110 = vmatpush2.msra.mxu0 0.0
    %1111 = vmatprep.subr.mxu0 0.0
    %1112 = vmatpush2.msra.mxu0 0.0
    %1113 = vmatprep.subr.mxu0 0.0
    %1114 = vmatpush2.msra.mxu0 0.0
    %1115 = vmatprep.subr.mxu0 0.0
    %1116 = vmatpush2.msra.mxu0 0.0
    %1117 = vmatprep.subr.mxu0 0.0
    %1118 = vmatpush2.msra.mxu0 0.0
    %1119 = vmatprep.subr.mxu0 0.0
    %1120 = vmatpush2.msra.mxu0 0.0
    %1121 = vmatprep.subr.mxu0 0.0
    %1122 = vmatpush2.msra.mxu0 0.0
    %1123 = vmatprep.subr.mxu0 0.0
    %1124 = vmatpush2.msra.mxu0 0.0
    %1125 = vmatprep.subr.mxu0 0.0
    %1126 = vmatpush2.msra.mxu0 0.0
    %1127 = vmatprep.subr.mxu0 0.0
    %1128 = vmatpush2.msra.mxu0 0.0
    %1129 = vmatprep.subr.mxu0 0.0
    %1130 = vmatpush2.msra.mxu0 0.0
    %1131 = vmatprep.mubr.f32.mxu0 0.0
    %1132 = vmatmul.mubr.f32.gmra.mxu0 %v1062
    %v1133 = vpop.f32.mrf.mxu0
    %v1134 = vadd.f32 0.0, %v1133
    %v1135 = vpop.f32.mrf.mxu0
    %1136 = vmatprep.mubr.f32.mxu0 0.0
    %1137 = vmatmul.mubr.f32.gmra.mxu0 %v1065
    %v1138 = vpop.f32.mrf.mxu0
    %v1139 = vadd.f32 0.0, %v1138
    %v1140 = vpop.f32.mrf.mxu0
    %1141 = vdwg.mxu0
    %v1142 = vmul.f32 %v1134, 0.35355338
    %v1143 = vmul.f32 %v1139, 0.35355338
    %v1144 = vadd.f32 %v1142, %v152
    %v1145 = vadd.f32 %v1143, %v153
    %v1146 = vsel %vm537, %v1144, -inf
    %1147 = vmax.xlane.f32.xlu0 %v1146
    %v1148 = vpop.xlane.xlu0 %1147
    %v1149 = vsel %vm537, %v1145, -inf
    %1150 = vmax.xlane.f32.xlu0 %v1149
    %v1151 = vpop.xlane.xlu0 %1150
    %v1152 = vsub.f32 %v1144, %v1148
    %v1153 = vsub.f32 %v1145, %v1151
    %v1154 = vmul.f32 %v1152, 1.442695
    %v1155 = vpow.pop %v1154
    %v1156 = vmul.f32 %v1153, 1.442695
    %v1157 = vpow.pop %v1156
    %v1158 = vsel %vm537, %v1155, 0.0
    %1159 = vadd.xlane.f32.xlu0 %v1158
    %v1160 = vpop.xlane.xlu0 %1159
    %v1161 = vsel %vm537, %v1157, 0.0
    %1162 = vadd.xlane.f32.xlu0 %v1161
    %v1163 = vpop.xlane.xlu0 %1162
    %v1164 = vrcp.pop %v1160
    %v1165 = vrcp.pop %v1163
    %v1166 = vmul.f32 %v1155, %v1164
    %v1167 = vmul.f32 %v1157, %v1165
    %v1169 = vsel %vm537, %v1166, 0
    %v1172 = vsel %vm537, %v1167, 0
    %v1175 = vsel %vm537, %v398, 0
    %1177 = vmatprep.subr.mxu0 0.0
    %1178 = vmatpush1.xpose.msra.mxu0 0.0
    %1179 = vmatprep.subr.mxu0 0.0
    %1180 = vmatpush1.xpose.msra.mxu0 0.0
    %1181 = vmatprep.subr.mxu0 0.0
    %1182 = vmatpush1.xpose.msra.mxu0 0.0
    %1183 = vmatprep.subr.mxu0 0.0
    %1184 = vmatpush1.xpose.msra.mxu0 0.0
    %1185 = vmatprep.subr.mxu0 0.0
    %1186 = vmatpush1.xpose.msra.mxu0 0.0
    %1187 = vmatprep.subr.mxu0 0.0
    %1188 = vmatpush1.xpose.msra.mxu0 0.0
    %1189 = vmatprep.subr.mxu0 0.0
    %1190 = vmatpush1.xpose.msra.mxu0 0.0
    %1191 = vmatprep.subr.mxu0 0.0
    %1192 = vmatpush1.xpose.msra.mxu0 0.0
    %1193 = vmatprep.subr.mxu0 0.0
    %1194 = vmatpush1.xpose.msra.mxu0 0.0
    %1195 = vmatprep.subr.mxu0 0.0
    %1196 = vmatpush1.xpose.msra.mxu0 0.0
    %1197 = vmatprep.subr.mxu0 0.0
    %1198 = vmatpush1.xpose.msra.mxu0 0.0
    %1199 = vmatprep.subr.mxu0 0.0
    %1200 = vmatpush1.xpose.msra.mxu0 0.0
    %1201 = vmatprep.subr.mxu0 0.0
    %1202 = vmatpush1.xpose.msra.mxu0 0.0
    %1203 = vmatprep.subr.mxu0 0.0
    %1204 = vmatpush1.xpose.msra.mxu0 0.0
    %1205 = vmatprep.subr.mxu0 0.0
    %1206 = vmatpush1.xpose.msra.mxu0 0.0
    %1207 = vmatprep.subr.mxu0 0.0
    %1208 = vmatpush1.xpose.msra.mxu0 %v1175
    %1209 = vmatprep.subr.mxu0 0.0
    %1210 = vmatpush2.xpose.msra.mxu0 0.0
    %1211 = vmatprep.subr.mxu0 0.0
    %1212 = vmatpush2.xpose.msra.mxu0 0.0
    %1213 = vmatprep.subr.mxu0 0.0
    %1214 = vmatpush2.xpose.msra.mxu0 0.0
    %1215 = vmatprep.subr.mxu0 0.0
    %1216 = vmatpush2.xpose.msra.mxu0 0.0
    %1217 = vmatprep.subr.mxu0 0.0
    %1218 = vmatpush2.xpose.msra.mxu0 0.0
    %1219 = vmatprep.subr.mxu0 0.0
    %1220 = vmatpush2.xpose.msra.mxu0 0.0
    %1221 = vmatprep.subr.mxu0 0.0
    %1222 = vmatpush2.xpose.msra.mxu0 0.0
    %1223 = vmatprep.subr.mxu0 0.0
    %1224 = vmatpush2.xpose.msra.mxu0 0.0
    %1225 = vmatprep.subr.mxu0 0.0
    %1226 = vmatpush2.xpose.msra.mxu0 0.0
    %1227 = vmatprep.subr.mxu0 0.0
    %1228 = vmatpush2.xpose.msra.mxu0 0.0
    %1229 = vmatprep.subr.mxu0 0.0
    %1230 = vmatpush2.xpose.msra.mxu0 0.0
    %1231 = vmatprep.subr.mxu0 0.0
    %1232 = vmatpush2.xpose.msra.mxu0 0.0
    %1233 = vmatprep.subr.mxu0 0.0
    %1234 = vmatpush2.xpose.msra.mxu0 0.0
    %1235 = vmatprep.subr.mxu0 0.0
    %1236 = vmatpush2.xpose.msra.mxu0 0.0
    %1237 = vmatprep.subr.mxu0 0.0
    %1238 = vmatpush2.xpose.msra.mxu0 0.0
    %1239 = vmatprep.subr.mxu0 0.0
    %1240 = vmatpush2.xpose.msra.mxu0 0.0
    %1241 = vmatprep.mubr.f32.mxu0 0.0
    %1242 = vmatmul.mubr.f32.gmra.mxu0 %v1169
    %v1243 = vpop.f32.mrf.mxu0
    %v1244 = vadd.f32 0.0, %v1243
    %v1245 = vpop.f32.mrf.mxu0
    %1246 = vmatprep.mubr.f32.mxu0 0.0
    %1247 = vmatmul.mubr.f32.gmra.mxu0 %v1172
    %v1248 = vpop.f32.mrf.mxu0
    %v1249 = vadd.f32 0.0, %v1248
    %v1250 = vpop.f32.mrf.mxu0
    %1251 = vdwg.mxu0
    %v1253 = vsel %vm451, %v1244, 0
    %v1256 = vsel %vm451, %v1249, 0
    %1258 = vmatprep.subr.mxu0 0.0
    %1259 = vmatpush1.msra.mxu0 0.0
    %1260 = vmatprep.subr.mxu0 0.0
    %1261 = vmatpush1.msra.mxu0 0.0
    %1262 = vmatprep.subr.mxu0 0.0
    %1263 = vmatpush1.msra.mxu0 0.0
    %1264 = vmatprep.subr.mxu0 0.0
    %1265 = vmatpush1.msra.mxu0 0.0
    %1266 = vmatprep.subr.mxu0 0.0
    %1267 = vmatpush1.msra.mxu0 0.0
    %1268 = vmatprep.subr.mxu0 0.0
    %1269 = vmatpush1.msra.mxu0 0.0
    %1270 = vmatprep.subr.mxu0 0.0
    %1271 = vmatpush1.msra.mxu0 0.0
    %1272 = vmatprep.subr.mxu0 0.0
    %1273 = vmatpush1.msra.mxu0 0.0
    %1274 = vmatprep.subr.mxu0 0.0
    %1275 = vmatpush1.msra.mxu0 0.0
    %1276 = vmatprep.subr.mxu0 0.0
    %1277 = vmatpush1.msra.mxu0 0.0
    %1278 = vmatprep.subr.mxu0 0.0
    %1279 = vmatpush1.msra.mxu0 0.0
    %1280 = vmatprep.subr.mxu0 0.0
    %1281 = vmatpush1.msra.mxu0 0.0
    %1282 = vmatprep.subr.mxu0 0.0
    %1283 = vmatpush1.msra.mxu0 0.0
    %1284 = vmatprep.subr.mxu0 0.0
    %1285 = vmatpush1.msra.mxu0 0.0
    %1286 = vmatprep.subr.mxu0 0.0
    %1287 = vmatpush1.msra.mxu0 0.0
    %1288 = vmatprep.subr.mxu0 0.0
    %1289 = vmatpush1.msra.mxu0 %v408
    %1290 = vmatprep.subr.mxu0 0.0
    %1291 = vmatpush2.msra.mxu0 0.0
    %1292 = vmatprep.subr.mxu0 0.0
    %1293 = vmatpush2.msra.mxu0 0.0
    %1294 = vmatprep.subr.mxu0 0.0
    %1295 = vmatpush2.msra.mxu0 0.0
    %1296 = vmatprep.subr.mxu0 0.0
    %1297 = vmatpush2.msra.mxu0 0.0
    %1298 = vmatprep.subr.mxu0 0.0
    %1299 = vmatpush2.msra.mxu0 0.0
    %1300 = vmatprep.subr.mxu0 0.0
    %1301 = vmatpush2.msra.mxu0 0.0
    %1302 = vmatprep.subr.mxu0 0.0
    %1303 = vmatpush2.msra.mxu0 0.0
    %1304 = vmatprep.subr.mxu0 0.0
    %1305 = vmatpush2.msra.mxu0 0.0
    %1306 = vmatprep.subr.mxu0 0.0
    %1307 = vmatpush2.msra.mxu0 0.0
    %1308 = vmatprep.subr.mxu0 0.0
    %1309 = vmatpush2.msra.mxu0 0.0
    %1310 = vmatprep.subr.mxu0 0.0
    %1311 = vmatpush2.msra.mxu0 0.0
    %1312 = vmatprep.subr.mxu0 0.0
    %1313 = vmatpush2.msra.mxu0 0.0
    %1314 = vmatprep.subr.mxu0 0.0
    %1315 = vmatpush2.msra.mxu0 0.0
    %1316 = vmatprep.subr.mxu0 0.0
    %1317 = vmatpush2.msra.mxu0 0.0
    %1318 = vmatprep.subr.mxu0 0.0
    %1319 = vmatpush2.msra.mxu0 0.0
    %1320 = vmatprep.subr.mxu0 0.0
    %1321 = vmatpush2.msra.mxu0 0.0
    %1322 = vmatprep.mubr.f32.mxu0 0.0
    %1323 = vmatmul.mubr.f32.gmra.mxu0 %v1253
    %v1324 = vpop.f32.mrf.mxu0
    %v1325 = vadd.f32 0.0, %v1324
    %v1326 = vpop.f32.mrf.mxu0
    %1327 = vmatprep.mubr.f32.mxu0 0.0
    %1328 = vmatmul.mubr.f32.gmra.mxu0 %v1256
    %v1329 = vpop.f32.mrf.mxu0
    %v1330 = vadd.f32 0.0, %v1329
    %v1331 = vpop.f32.mrf.mxu0
    %1332 = vdwg.mxu0
    %v1333 = vadd.f32 %v1021, %v1325
    %v1334 = vadd.f32 %v1026, %v1330
    %1335 = vxpose.xlu0.b32.start [1/16] %v363, 128
    %1336 = vxpose.xlu0.b32.cont [2/16] 0.0, 128
    %1337 = vxpose.xlu0.b32.cont [3/16] 0.0, 128
    %1338 = vxpose.xlu0.b32.cont [4/16] 0.0, 128
    %1339 = vxpose.xlu0.b32.cont [5/16] 0.0, 128
    %1340 = vxpose.xlu0.b32.cont [6/16] 0.0, 128
    %1341 = vxpose.xlu0.b32.cont [7/16] 0.0, 128
    %1342 = vxpose.xlu0.b32.cont [8/16] 0.0, 128
    %1343 = vxpose.xlu0.b32.cont [9/16] 0.0, 128
    %1344 = vxpose.xlu0.b32.cont [10/16] 0.0, 128
    %1345 = vxpose.xlu0.b32.cont [11/16] 0.0, 128
    %1346 = vxpose.xlu0.b32.cont [12/16] 0.0, 128
    %1347 = vxpose.xlu0.b32.cont [13/16] 0.0, 128
    %1348 = vxpose.xlu0.b32.cont [14/16] 0.0, 128
    %1349 = vxpose.xlu0.b32.cont [15/16] 0.0, 128
    %1350 = vxpose.xlu0.b32.end [16/16] 0.0, 128
    %v1351 = vpop.trf.xlu0
    %v1352 = vpop.trf.xlu0
    %v1353 = vpop.trf.xlu0
    %v1354 = vpop.trf.xlu0
    %v1355 = vpop.trf.xlu0
    %v1356 = vpop.trf.xlu0
    %v1357 = vpop.trf.xlu0
    %v1358 = vpop.trf.xlu0
    %v1359 = vpop.trf.xlu0
    %v1360 = vpop.trf.xlu0
    %v1361 = vpop.trf.xlu0
    %v1362 = vpop.trf.xlu0
    %v1363 = vpop.trf.xlu0
    %v1364 = vpop.trf.xlu0
    %v1365 = vpop.trf.xlu0
    %v1366 = vpop.trf.xlu0
    %v1368 = vsel %vm451, %v1351, 0
    %v1371 = vsel %vm451, %v1352, 0
    %1373 = vmatprep.subr.mxu0 0.0
    %1374 = vmatpush1.msra.mxu0 0.0
    %1375 = vmatprep.subr.mxu0 0.0
    %1376 = vmatpush1.msra.mxu0 0.0
    %1377 = vmatprep.subr.mxu0 0.0
    %1378 = vmatpush1.msra.mxu0 0.0
    %1379 = vmatprep.subr.mxu0 0.0
    %1380 = vmatpush1.msra.mxu0 0.0
    %1381 = vmatprep.subr.mxu0 0.0
    %1382 = vmatpush1.msra.mxu0 0.0
    %1383 = vmatprep.subr.mxu0 0.0
    %1384 = vmatpush1.msra.mxu0 0.0
    %1385 = vmatprep.subr.mxu0 0.0
    %1386 = vmatpush1.msra.mxu0 0.0
    %1387 = vmatprep.subr.mxu0 0.0
    %1388 = vmatpush1.msra.mxu0 0.0
    %1389 = vmatprep.subr.mxu0 0.0
    %1390 = vmatpush1.msra.mxu0 0.0
    %1391 = vmatprep.subr.mxu0 0.0
    %1392 = vmatpush1.msra.mxu0 0.0
    %1393 = vmatprep.subr.mxu0 0.0
    %1394 = vmatpush1.msra.mxu0 0.0
    %1395 = vmatprep.subr.mxu0 0.0
    %1396 = vmatpush1.msra.mxu0 0.0
    %1397 = vmatprep.subr.mxu0 0.0
    %1398 = vmatpush1.msra.mxu0 0.0
    %1399 = vmatprep.subr.mxu0 0.0
    %1400 = vmatpush1.msra.mxu0 0.0
    %1401 = vmatprep.subr.mxu0 0.0
    %1402 = vmatpush1.msra.mxu0 0.0
    %1403 = vmatprep.subr.mxu0 0.0
    %1404 = vmatpush1.msra.mxu0 %v383
    %1405 = vmatprep.subr.mxu0 0.0
    %1406 = vmatpush2.msra.mxu0 0.0
    %1407 = vmatprep.subr.mxu0 0.0
    %1408 = vmatpush2.msra.mxu0 0.0
    %1409 = vmatprep.subr.mxu0 0.0
    %1410 = vmatpush2.msra.mxu0 0.0
    %1411 = vmatprep.subr.mxu0 0.0
    %1412 = vmatpush2.msra.mxu0 0.0
    %1413 = vmatprep.subr.mxu0 0.0
    %1414 = vmatpush2.msra.mxu0 0.0
    %1415 = vmatprep.subr.mxu0 0.0
    %1416 = vmatpush2.msra.mxu0 0.0
    %1417 = vmatprep.subr.mxu0 0.0
    %1418 = vmatpush2.msra.mxu0 0.0
    %1419 = vmatprep.subr.mxu0 0.0
    %1420 = vmatpush2.msra.mxu0 0.0
    %1421 = vmatprep.subr.mxu0 0.0
    %1422 = vmatpush2.msra.mxu0 0.0
    %1423 = vmatprep.subr.mxu0 0.0
    %1424 = vmatpush2.msra.mxu0 0.0
    %1425 = vmatprep.subr.mxu0 0.0
    %1426 = vmatpush2.msra.mxu0 0.0
    %1427 = vmatprep.subr.mxu0 0.0
    %1428 = vmatpush2.msra.mxu0 0.0
    %1429 = vmatprep.subr.mxu0 0.0
    %1430 = vmatpush2.msra.mxu0 0.0
    %1431 = vmatprep.subr.mxu0 0.0
    %1432 = vmatpush2.msra.mxu0 0.0
    %1433 = vmatprep.subr.mxu0 0.0
    %1434 = vmatpush2.msra.mxu0 0.0
    %1435 = vmatprep.subr.mxu0 0.0
    %1436 = vmatpush2.msra.mxu0 0.0
    %1437 = vmatprep.mubr.f32.mxu0 0.0
    %1438 = vmatmul.mubr.f32.gmra.mxu0 %v1368
    %v1439 = vpop.f32.mrf.mxu0
    %v1440 = vadd.f32 0.0, %v1439
    %v1441 = vpop.f32.mrf.mxu0
    %1442 = vmatprep.mubr.f32.mxu0 0.0
    %1443 = vmatmul.mubr.f32.gmra.mxu0 %v1371
    %v1444 = vpop.f32.mrf.mxu0
    %v1445 = vadd.f32 0.0, %v1444
    %v1446 = vpop.f32.mrf.mxu0
    %1447 = vdwg.mxu0
    %v1448 = vmul.f32 %v1440, 0.35355338
    %v1449 = vmul.f32 %v1445, 0.35355338
    %v1450 = vadd.f32 %v1448, %v152
    %v1451 = vadd.f32 %v1449, %v153
    %v1452 = vsel %vm537, %v1450, -inf
    %1453 = vmax.xlane.f32.xlu0 %v1452
    %v1454 = vpop.xlane.xlu0 %1453
    %v1455 = vsel %vm537, %v1451, -inf
    %1456 = vmax.xlane.f32.xlu0 %v1455
    %v1457 = vpop.xlane.xlu0 %1456
    %v1458 = vsub.f32 %v1450, %v1454
    %v1459 = vsub.f32 %v1451, %v1457
    %v1460 = vmul.f32 %v1458, 1.442695
    %v1461 = vpow.pop %v1460
    %v1462 = vmul.f32 %v1459, 1.442695
    %v1463 = vpow.pop %v1462
    %v1464 = vsel %vm537, %v1461, 0.0
    %1465 = vadd.xlane.f32.xlu0 %v1464
    %v1466 = vpop.xlane.xlu0 %1465
    %v1467 = vsel %vm537, %v1463, 0.0
    %1468 = vadd.xlane.f32.xlu0 %v1467
    %v1469 = vpop.xlane.xlu0 %1468
    %v1470 = vrcp.pop %v1466
    %v1471 = vrcp.pop %v1469
    %v1472 = vmul.f32 %v1461, %v1470
    %v1473 = vmul.f32 %v1463, %v1471
    %v1475 = vsel %vm537, %v1472, 0
    %v1478 = vsel %vm537, %v1473, 0
    %v1481 = vsel %vm537, %v403, 0
    %1483 = vmatprep.subr.mxu0 0.0
    %1484 = vmatpush1.xpose.msra.mxu0 0.0
    %1485 = vmatprep.subr.mxu0 0.0
    %1486 = vmatpush1.xpose.msra.mxu0 0.0
    %1487 = vmatprep.subr.mxu0 0.0
    %1488 = vmatpush1.xpose.msra.mxu0 0.0
    %1489 = vmatprep.subr.mxu0 0.0
    %1490 = vmatpush1.xpose.msra.mxu0 0.0
    %1491 = vmatprep.subr.mxu0 0.0
    %1492 = vmatpush1.xpose.msra.mxu0 0.0
    %1493 = vmatprep.subr.mxu0 0.0
    %1494 = vmatpush1.xpose.msra.mxu0 0.0
    %1495 = vmatprep.subr.mxu0 0.0
    %1496 = vmatpush1.xpose.msra.mxu0 0.0
    %1497 = vmatprep.subr.mxu0 0.0
    %1498 = vmatpush1.xpose.msra.mxu0 0.0
    %1499 = vmatprep.subr.mxu0 0.0
    %1500 = vmatpush1.xpose.msra.mxu0 0.0
    %1501 = vmatprep.subr.mxu0 0.0
    %1502 = vmatpush1.xpose.msra.mxu0 0.0
    %1503 = vmatprep.subr.mxu0 0.0
    %1504 = vmatpush1.xpose.msra.mxu0 0.0
    %1505 = vmatprep.subr.mxu0 0.0
    %1506 = vmatpush1.xpose.msra.mxu0 0.0
    %1507 = vmatprep.subr.mxu0 0.0
    %1508 = vmatpush1.xpose.msra.mxu0 0.0
    %1509 = vmatprep.subr.mxu0 0.0
    %1510 = vmatpush1.xpose.msra.mxu0 0.0
    %1511 = vmatprep.subr.mxu0 0.0
    %1512 = vmatpush1.xpose.msra.mxu0 0.0
    %1513 = vmatprep.subr.mxu0 0.0
    %1514 = vmatpush1.xpose.msra.mxu0 %v1481
    %1515 = vmatprep.subr.mxu0 0.0
    %1516 = vmatpush2.xpose.msra.mxu0 0.0
    %1517 = vmatprep.subr.mxu0 0.0
    %1518 = vmatpush2.xpose.msra.mxu0 0.0
    %1519 = vmatprep.subr.mxu0 0.0
    %1520 = vmatpush2.xpose.msra.mxu0 0.0
    %1521 = vmatprep.subr.mxu0 0.0
    %1522 = vmatpush2.xpose.msra.mxu0 0.0
    %1523 = vmatprep.subr.mxu0 0.0
    %1524 = vmatpush2.xpose.msra.mxu0 0.0
    %1525 = vmatprep.subr.mxu0 0.0
    %1526 = vmatpush2.xpose.msra.mxu0 0.0
    %1527 = vmatprep.subr.mxu0 0.0
    %1528 = vmatpush2.xpose.msra.mxu0 0.0
    %1529 = vmatprep.subr.mxu0 0.0
    %1530 = vmatpush2.xpose.msra.mxu0 0.0
    %1531 = vmatprep.subr.mxu0 0.0
    %1532 = vmatpush2.xpose.msra.mxu0 0.0
    %1533 = vmatprep.subr.mxu0 0.0
    %1534 = vmatpush2.xpose.msra.mxu0 0.0
    %1535 = vmatprep.subr.mxu0 0.0
    %1536 = vmatpush2.xpose.msra.mxu0 0.0
    %1537 = vmatprep.subr.mxu0 0.0
    %1538 = vmatpush2.xpose.msra.mxu0 0.0
    %1539 = vmatprep.subr.mxu0 0.0
    %1540 = vmatpush2.xpose.msra.mxu0 0.0
    %1541 = vmatprep.subr.mxu0 0.0
    %1542 = vmatpush2.xpose.msra.mxu0 0.0
    %1543 = vmatprep.subr.mxu0 0.0
    %1544 = vmatpush2.xpose.msra.mxu0 0.0
    %1545 = vmatprep.subr.mxu0 0.0
    %1546 = vmatpush2.xpose.msra.mxu0 0.0
    %1547 = vmatprep.mubr.f32.mxu0 0.0
    %1548 = vmatmul.mubr.f32.gmra.mxu0 %v1475
    %v1549 = vpop.f32.mrf.mxu0
    %v1550 = vadd.f32 0.0, %v1549
    %v1551 = vpop.f32.mrf.mxu0
    %1552 = vmatprep.mubr.f32.mxu0 0.0
    %1553 = vmatmul.mubr.f32.gmra.mxu0 %v1478
    %v1554 = vpop.f32.mrf.mxu0
    %v1555 = vadd.f32 0.0, %v1554
    %v1556 = vpop.f32.mrf.mxu0
    %1557 = vdwg.mxu0
    %v1559 = vsel %vm451, %v1550, 0
    %v1562 = vsel %vm451, %v1555, 0
    %1564 = vmatprep.subr.mxu0 0.0
    %1565 = vmatpush1.msra.mxu0 0.0
    %1566 = vmatprep.subr.mxu0 0.0
    %1567 = vmatpush1.msra.mxu0 0.0
    %1568 = vmatprep.subr.mxu0 0.0
    %1569 = vmatpush1.msra.mxu0 0.0
    %1570 = vmatprep.subr.mxu0 0.0
    %1571 = vmatpush1.msra.mxu0 0.0
    %1572 = vmatprep.subr.mxu0 0.0
    %1573 = vmatpush1.msra.mxu0 0.0
    %1574 = vmatprep.subr.mxu0 0.0
    %1575 = vmatpush1.msra.mxu0 0.0
    %1576 = vmatprep.subr.mxu0 0.0
    %1577 = vmatpush1.msra.mxu0 0.0
    %1578 = vmatprep.subr.mxu0 0.0
    %1579 = vmatpush1.msra.mxu0 0.0
    %1580 = vmatprep.subr.mxu0 0.0
    %1581 = vmatpush1.msra.mxu0 0.0
    %1582 = vmatprep.subr.mxu0 0.0
    %1583 = vmatpush1.msra.mxu0 0.0
    %1584 = vmatprep.subr.mxu0 0.0
    %1585 = vmatpush1.msra.mxu0 0.0
    %1586 = vmatprep.subr.mxu0 0.0
    %1587 = vmatpush1.msra.mxu0 0.0
    %1588 = vmatprep.subr.mxu0 0.0
    %1589 = vmatpush1.msra.mxu0 0.0
    %1590 = vmatprep.subr.mxu0 0.0
    %1591 = vmatpush1.msra.mxu0 0.0
    %1592 = vmatprep.subr.mxu0 0.0
    %1593 = vmatpush1.msra.mxu0 0.0
    %1594 = vmatprep.subr.mxu0 0.0
    %1595 = vmatpush1.msra.mxu0 %v409
    %1596 = vmatprep.subr.mxu0 0.0
    %1597 = vmatpush2.msra.mxu0 0.0
    %1598 = vmatprep.subr.mxu0 0.0
    %1599 = vmatpush2.msra.mxu0 0.0
    %1600 = vmatprep.subr.mxu0 0.0
    %1601 = vmatpush2.msra.mxu0 0.0
    %1602 = vmatprep.subr.mxu0 0.0
    %1603 = vmatpush2.msra.mxu0 0.0
    %1604 = vmatprep.subr.mxu0 0.0
    %1605 = vmatpush2.msra.mxu0 0.0
    %1606 = vmatprep.subr.mxu0 0.0
    %1607 = vmatpush2.msra.mxu0 0.0
    %1608 = vmatprep.subr.mxu0 0.0
    %1609 = vmatpush2.msra.mxu0 0.0
    %1610 = vmatprep.subr.mxu0 0.0
    %1611 = vmatpush2.msra.mxu0 0.0
    %1612 = vmatprep.subr.mxu0 0.0
    %1613 = vmatpush2.msra.mxu0 0.0
    %1614 = vmatprep.subr.mxu0 0.0
    %1615 = vmatpush2.msra.mxu0 0.0
    %1616 = vmatprep.subr.mxu0 0.0
    %1617 = vmatpush2.msra.mxu0 0.0
    %1618 = vmatprep.subr.mxu0 0.0
    %1619 = vmatpush2.msra.mxu0 0.0
    %1620 = vmatprep.subr.mxu0 0.0
    %1621 = vmatpush2.msra.mxu0 0.0
    %1622 = vmatprep.subr.mxu0 0.0
    %1623 = vmatpush2.msra.mxu0 0.0
    %1624 = vmatprep.subr.mxu0 0.0
    %1625 = vmatpush2.msra.mxu0 0.0
    %1626 = vmatprep.subr.mxu0 0.0
    %1627 = vmatpush2.msra.mxu0 0.0
    %1628 = vmatprep.mubr.f32.mxu0 0.0
    %1629 = vmatmul.mubr.f32.gmra.mxu0 %v1559
    %v1630 = vpop.f32.mrf.mxu0
    %v1631 = vadd.f32 0.0, %v1630
    %v1632 = vpop.f32.mrf.mxu0
    %1633 = vmatprep.mubr.f32.mxu0 0.0
    %1634 = vmatmul.mubr.f32.gmra.mxu0 %v1562
    %v1635 = vpop.f32.mrf.mxu0
    %v1636 = vadd.f32 0.0, %v1635
    %v1637 = vpop.f32.mrf.mxu0
    %1638 = vdwg.mxu0
    %v1639 = vadd.f32 %v1333, %v1631
    %v1640 = vadd.f32 %v1334, %v1636
    %v1641 = vlaneseq
    %v1642 = vshrl.u32 %v1641, 7
    %v1643 = vsub.s32 1, %v1642
    %v1644 = vrot.slane %v418, %v1643
    %v1645 = vadd.f32 %v1639, %v1644
    %v1646 = vadd.f32 %v1640, %v1644
    %v1647 = vadd.f32 %v1645, %v150
    %v1648 = vadd.f32 %v1646, %v151
    %v1649 = vsel %vm238, %v1647, 0.0
    %1650 = vadd.xlane.f32.xlu0 %v1649
    %v1651 = vpop.xlane.xlu0 %1650
    %v1652 = vsel %vm238, %v1648, 0.0
    %1653 = vadd.xlane.f32.xlu0 %v1652
    %v1654 = vpop.xlane.xlu0 %1653
    %v1655 = vrcp.pop 32.0
    %v1656 = vmul.f32 %v1651, %v1655
    %v1657 = vmul.f32 %v1654, %v1655
    %v1658 = vsub.f32 %v1647, %v1656
    %v1659 = vsub.f32 %v1648, %v1657
    %v1660 = vmul.f32 %v1658, %v1658
    %v1661 = vmul.f32 %v1659, %v1659
    %v1662 = vsel %vm238, %v1660, 0.0
    %1663 = vadd.xlane.f32.xlu0 %v1662
    %v1664 = vpop.xlane.xlu0 %1663
    %v1665 = vsel %vm238, %v1661, 0.0
    %1666 = vadd.xlane.f32.xlu0 %v1665
    %v1667 = vpop.xlane.xlu0 %1666
    %v1668 = vmul.f32 %v1664, %v1655
    %v1669 = vmul.f32 %v1667, %v1655
    %v1670 = vadd.f32 %v1668, 1e-05
    %v1671 = vadd.f32 %v1669, 1e-05
    %v1672 = vrsqrt.pop %v1670
    %v1673 = vrsqrt.pop %v1671
    %v1674 = vmul.f32 %v1658, %v1672
    %v1675 = vmul.f32 %v1659, %v1673
    %v1676 = vlaneseq
    %v1677 = vshrl.u32 %v1676, 7
    %v1678 = vsub.s32 2, %v1677
    %v1679 = vrot.slane %v418, %v1678
    %v1680 = vmul.f32 %v1674, %v1679
    %v1681 = vmul.f32 %v1675, %v1679
    %v1682 = vlaneseq
    %v1683 = vshrl.u32 %v1682, 7
    %v1684 = vsub.s32 3, %v1683
    %v1685 = vrot.slane %v418, %v1684
    %v1686 = vadd.f32 %v1680, %v1685
    %v1687 = vadd.f32 %v1681, %v1685
    %v1688 = vmul.f32 %v1686, %v143
    %v1689 = vmul.f32 %v1687, %v148
    %v1690 = vld [vmem:[%s5] sm:$0xff]
    %v1691 = vld [vmem:[%s5 + $0x8] sm:$0xff]
    %v1692 = vld [vmem:[%s5 + $0x10] sm:$0xff]
    %v1693 = vld [vmem:[%s5 + $0x18] sm:$0xff]
    %v1694 = vlaneseq
    %v1695 = vshrl.u32 %v1694, 7
    %v1696 = vsub.s32 0, %v1695
    %v1697 = vrot.slane %v418, %v1696
    %v1699 = vsel %vm238, %v1688, 0
    %v1702 = vsel %vm238, %v1689, 0
    %1704 = vmatprep.subr.mxu0 0.0
    %1705 = vmatpush1.msra.mxu0 0.0
    %1706 = vmatprep.subr.mxu0 0.0
    %1707 = vmatpush1.msra.mxu0 0.0
    %1708 = vmatprep.subr.mxu0 0.0
    %1709 = vmatpush1.msra.mxu0 0.0
    %1710 = vmatprep.subr.mxu0 0.0
    %1711 = vmatpush1.msra.mxu0 0.0
    %1712 = vmatprep.subr.mxu0 0.0
    %1713 = vmatpush1.msra.mxu0 0.0
    %1714 = vmatprep.subr.mxu0 0.0
    %1715 = vmatpush1.msra.mxu0 0.0
    %1716 = vmatprep.subr.mxu0 0.0
    %1717 = vmatpush1.msra.mxu0 0.0
    %1718 = vmatprep.subr.mxu0 0.0
    %1719 = vmatpush1.msra.mxu0 0.0
    %1720 = vmatprep.subr.mxu0 0.0
    %1721 = vmatpush1.msra.mxu0 0.0
    %1722 = vmatprep.subr.mxu0 0.0
    %1723 = vmatpush1.msra.mxu0 0.0
    %1724 = vmatprep.subr.mxu0 0.0
    %1725 = vmatpush1.msra.mxu0 0.0
    %1726 = vmatprep.subr.mxu0 0.0
    %1727 = vmatpush1.msra.mxu0 0.0
    %1728 = vmatprep.subr.mxu0 0.0
    %1729 = vmatpush1.msra.mxu0 %v1693
    %1730 = vmatprep.subr.mxu0 0.0
    %1731 = vmatpush1.msra.mxu0 %v1692
    %1732 = vmatprep.subr.mxu0 0.0
    %1733 = vmatpush1.msra.mxu0 %v1691
    %1734 = vmatprep.subr.mxu0 0.0
    %1735 = vmatpush1.msra.mxu0 %v1690
    %1736 = vmatprep.subr.mxu0 0.0
    %1737 = vmatpush2.msra.mxu0 0.0
    %1738 = vmatprep.subr.mxu0 0.0
    %1739 = vmatpush2.msra.mxu0 0.0
    %1740 = vmatprep.subr.mxu0 0.0
    %1741 = vmatpush2.msra.mxu0 0.0
    %1742 = vmatprep.subr.mxu0 0.0
    %1743 = vmatpush2.msra.mxu0 0.0
    %1744 = vmatprep.subr.mxu0 0.0
    %1745 = vmatpush2.msra.mxu0 0.0
    %1746 = vmatprep.subr.mxu0 0.0
    %1747 = vmatpush2.msra.mxu0 0.0
    %1748 = vmatprep.subr.mxu0 0.0
    %1749 = vmatpush2.msra.mxu0 0.0
    %1750 = vmatprep.subr.mxu0 0.0
    %1751 = vmatpush2.msra.mxu0 0.0
    %1752 = vmatprep.subr.mxu0 0.0
    %1753 = vmatpush2.msra.mxu0 0.0
    %1754 = vmatprep.subr.mxu0 0.0
    %1755 = vmatpush2.msra.mxu0 0.0
    %1756 = vmatprep.subr.mxu0 0.0
    %1757 = vmatpush2.msra.mxu0 0.0
    %1758 = vmatprep.subr.mxu0 0.0
    %1759 = vmatpush2.msra.mxu0 0.0
    %1760 = vmatprep.subr.mxu0 0.0
    %1761 = vmatpush2.msra.mxu0 0.0
    %1762 = vmatprep.subr.mxu0 0.0
    %1763 = vmatpush2.msra.mxu0 0.0
    %1764 = vmatprep.subr.mxu0 0.0
    %1765 = vmatpush2.msra.mxu0 0.0
    %1766 = vmatprep.subr.mxu0 0.0
    %1767 = vmatpush2.msra.mxu0 0.0
    %1768 = vmatprep.mubr.f32.mxu0 0.0
    %1769 = vmatmul.mubr.f32.gmra.mxu0 %v1699
    %v1770 = vpop.f32.mrf.mxu0
    %v1771 = vadd.f32 %v1697, %v1770
    %v1772 = vpop.f32.mrf.mxu0
    %1773 = vmatprep.mubr.f32.mxu0 0.0
    %1774 = vmatmul.mubr.f32.gmra.mxu0 %v1702
    %v1775 = vpop.f32.mrf.mxu0
    %v1776 = vadd.f32 %v1697, %v1775
    %v1777 = vpop.f32.mrf.mxu0
    %1778 = vdwg.mxu0
    %v1779 = vmax.f32 %v1771, 0.0
    %v1780 = vmax.f32 %v1776, 0.0
    %v1781 = vlaneseq
    %v1782 = vshrl.u32 %v1781, 7
    %v1783 = vsub.s32 4, %v1782
    %v1784 = vrot.slane %v418, %v1783
    %vm1785 = vcmask 523264
    %v1787 = vsel %vm1785, %v1779, 0
    %v1790 = vsel %vm1785, %v1780, 0
    %1792 = vmatprep.subr.mxu0 0.0
    %1793 = vmatpush1.msra.mxu0 0.0
    %1794 = vmatprep.subr.mxu0 0.0
    %1795 = vmatpush1.msra.mxu0 0.0
    %1796 = vmatprep.subr.mxu0 0.0
    %1797 = vmatpush1.msra.mxu0 0.0
    %1798 = vmatprep.subr.mxu0 0.0
    %1799 = vmatpush1.msra.mxu0 0.0
    %1800 = vmatprep.subr.mxu0 0.0
    %1801 = vmatpush1.msra.mxu0 0.0
    %1802 = vmatprep.subr.mxu0 0.0
    %1803 = vmatpush1.msra.mxu0 0.0
    %1804 = vmatprep.subr.mxu0 0.0
    %1805 = vmatpush1.msra.mxu0 0.0
    %1806 = vmatprep.subr.mxu0 0.0
    %1807 = vmatpush1.msra.mxu0 0.0
    %1808 = vmatprep.subr.mxu0 0.0
    %1809 = vmatpush1.msra.mxu0 %v417
    %1810 = vmatprep.subr.mxu0 0.0
    %1811 = vmatpush1.msra.mxu0 %v416
    %1812 = vmatprep.subr.mxu0 0.0
    %1813 = vmatpush1.msra.mxu0 %v415
    %1814 = vmatprep.subr.mxu0 0.0
    %1815 = vmatpush1.msra.mxu0 %v414
    %1816 = vmatprep.subr.mxu0 0.0
    %1817 = vmatpush1.msra.mxu0 %v413
    %1818 = vmatprep.subr.mxu0 0.0
    %1819 = vmatpush1.msra.mxu0 %v412
    %1820 = vmatprep.subr.mxu0 0.0
    %1821 = vmatpush1.msra.mxu0 %v411
    %1822 = vmatprep.subr.mxu0 0.0
    %1823 = vmatpush1.msra.mxu0 %v410
    %1824 = vmatprep.subr.mxu0 0.0
    %1825 = vmatpush2.msra.mxu0 0.0
    %1826 = vmatprep.subr.mxu0 0.0
    %1827 = vmatpush2.msra.mxu0 0.0
    %1828 = vmatprep.subr.mxu0 0.0
    %1829 = vmatpush2.msra.mxu0 0.0
    %1830 = vmatprep.subr.mxu0 0.0
    %1831 = vmatpush2.msra.mxu0 0.0
    %1832 = vmatprep.subr.mxu0 0.0
    %1833 = vmatpush2.msra.mxu0 0.0
    %1834 = vmatprep.subr.mxu0 0.0
    %1835 = vmatpush2.msra.mxu0 0.0
    %1836 = vmatprep.subr.mxu0 0.0
    %1837 = vmatpush2.msra.mxu0 0.0
    %1838 = vmatprep.subr.mxu0 0.0
    %1839 = vmatpush2.msra.mxu0 0.0
    %1840 = vmatprep.subr.mxu0 0.0
    %1841 = vmatpush2.msra.mxu0 0.0
    %1842 = vmatprep.subr.mxu0 0.0
    %1843 = vmatpush2.msra.mxu0 0.0
    %1844 = vmatprep.subr.mxu0 0.0
    %1845 = vmatpush2.msra.mxu0 0.0
    %1846 = vmatprep.subr.mxu0 0.0
    %1847 = vmatpush2.msra.mxu0 0.0
    %1848 = vmatprep.subr.mxu0 0.0
    %1849 = vmatpush2.msra.mxu0 0.0
    %1850 = vmatprep.subr.mxu0 0.0
    %1851 = vmatpush2.msra.mxu0 0.0
    %1852 = vmatprep.subr.mxu0 0.0
    %1853 = vmatpush2.msra.mxu0 0.0
    %1854 = vmatprep.subr.mxu0 0.0
    %1855 = vmatpush2.msra.mxu0 0.0
    %1856 = vmatprep.mubr.f32.mxu0 0.0
    %1857 = vmatmul.mubr.f32.gmra.mxu0 %v1787
    %v1858 = vpop.f32.mrf.mxu0
    %v1859 = vadd.f32 %v1784, %v1858
    %v1860 = vpop.f32.mrf.mxu0
    %1861 = vmatprep.mubr.f32.mxu0 0.0
    %1862 = vmatmul.mubr.f32.gmra.mxu0 %v1790
    %v1863 = vpop.f32.mrf.mxu0
    %v1864 = vadd.f32 %v1784, %v1863
    %v1865 = vpop.f32.mrf.mxu0
    %1866 = vdwg.mxu0
    %v1867 = vadd.f32 %v1859, %v1688
    %v1868 = vadd.f32 %v1864, %v1689
    %v1869 = vsel %vm238, %v1867, 0.0
    %1870 = vadd.xlane.f32.xlu0 %v1869
    %v1871 = vpop.xlane.xlu0 %1870
    %v1872 = vsel %vm238, %v1868, 0.0
    %1873 = vadd.xlane.f32.xlu0 %v1872
    %v1874 = vpop.xlane.xlu0 %1873
    %v1875 = vmul.f32 %v1871, %v1655
    %v1876 = vmul.f32 %v1874, %v1655
    %v1877 = vsub.f32 %v1867, %v1875
    %v1878 = vsub.f32 %v1868, %v1876
    %v1879 = vmul.f32 %v1877, %v1877
    %v1880 = vmul.f32 %v1878, %v1878
    %v1881 = vsel %vm238, %v1879, 0.0
    %1882 = vadd.xlane.f32.xlu0 %v1881
    %v1883 = vpop.xlane.xlu0 %1882
    %v1884 = vsel %vm238, %v1880, 0.0
    %1885 = vadd.xlane.f32.xlu0 %v1884
    %v1886 = vpop.xlane.xlu0 %1885
    %v1887 = vmul.f32 %v1883, %v1655
    %v1888 = vmul.f32 %v1886, %v1655
    %v1889 = vadd.f32 %v1887, 1e-05
    %v1890 = vadd.f32 %v1888, 1e-05
    %v1891 = vrsqrt.pop %v1889
    %v1892 = vrsqrt.pop %v1890
    %v1893 = vmul.f32 %v1877, %v1891
    %v1894 = vmul.f32 %v1878, %v1892
    %v1895 = vlaneseq
    %v1896 = vshrl.u32 %v1895, 7
    %v1897 = vsub.s32 5, %v1896
    %v1898 = vrot.slane %v418, %v1897
    %v1899 = vmul.f32 %v1893, %v1898
    %v1900 = vmul.f32 %v1894, %v1898
    %v1901 = vlaneseq
    %v1902 = vshrl.u32 %v1901, 7
    %v1903 = vsub.s32 6, %v1902
    %v1904 = vrot.slane %v418, %v1903
    %v1905 = vadd.f32 %v1899, %v1904
    %v1906 = vadd.f32 %v1900, %v1904
    %v1907 = vmul.f32 %v1905, %v143
    %v1908 = vmul.f32 %v1906, %v148
    %s1909 = scalar_lea.vmem %s3, 96
    %v1910 = vld [vmem:[%s1909] sm:$0xff]
    %v1911 = vld [vmem:[%s1909 + $0x8] sm:$0xff]
    %v1912 = vld [vmem:[%s1909 + $0x10] sm:$0xff]
    %v1913 = vld [vmem:[%s1909 + $0x18] sm:$0xff]
    %v1914 = vld [vmem:[%s1909 + $0x20] sm:$0xff]
    %v1915 = vld [vmem:[%s1909 + $0x28] sm:$0xff]
    %v1916 = vld [vmem:[%s1909 + $0x30] sm:$0xff]
    %v1917 = vld [vmem:[%s1909 + $0x38] sm:$0xff]
    %v1918 = vld [vmem:[%s1909 + $0x40] sm:$0xff]
    %v1919 = vld [vmem:[%s1909 + $0x48] sm:$0xff]
    %v1920 = vld [vmem:[%s1909 + $0x50] sm:$0xff]
    %v1921 = vld [vmem:[%s1909 + $0x58] sm:$0xff]
    %s1922 = scalar_lea.vmem %s4, 96
    %v1923 = vld [vmem:[%s1922] sm:$0xff]
    %v1924 = vld [vmem:[%s1922 + $0x8] sm:$0xff]
    %v1925 = vld [vmem:[%s1922 + $0x10] sm:$0xff]
    %v1926 = vld [vmem:[%s1922 + $0x18] sm:$0xff]
    %v1927 = vld [vmem:[%s1922 + $0x20] sm:$0xff]
    %v1928 = vld [vmem:[%s1922 + $0x28] sm:$0xff]
    %v1929 = vld [vmem:[%s1922 + $0x30] sm:$0xff]
    %v1930 = vld [vmem:[%s1922 + $0x38] sm:$0xff]
    %v1931 = vld [vmem:[%s1922 + $0x40] sm:$0xff]
    %v1932 = vld [vmem:[%s1922 + $0x48] sm:$0xff]
    %v1933 = vld [vmem:[%s1922 + $0x50] sm:$0xff]
    %v1934 = vld [vmem:[%s1922 + $0x58] sm:$0xff]
    %1936 = vset.pattern.permute.xlu0 0
    %1937 = vperm.xlu0 %1936, %v1923
    %v1938 = vpop.permute.xlu0 %1937
    %1941 = vset.pattern.permute.xlu0 0
    %1942 = vperm.xlu0 %1941, %v1924
    %v1943 = vpop.permute.xlu0 %1942
    %1946 = vset.pattern.permute.xlu0 0
    %1947 = vperm.xlu0 %1946, %v1925
    %v1948 = vpop.permute.xlu0 %1947
    %1951 = vset.pattern.permute.xlu0 0
    %1952 = vperm.xlu0 %1951, %v1926
    %v1953 = vpop.permute.xlu0 %1952
    %1956 = vset.pattern.permute.xlu0 0
    %1957 = vperm.xlu0 %1956, %v1927
    %v1958 = vpop.permute.xlu0 %1957
    %1961 = vset.pattern.permute.xlu0 0
    %1962 = vperm.xlu0 %1961, %v1928
    %v1963 = vpop.permute.xlu0 %1962
    %1966 = vset.pattern.permute.xlu0 0
    %1967 = vperm.xlu0 %1966, %v1929
    %v1968 = vpop.permute.xlu0 %1967
    %1971 = vset.pattern.permute.xlu0 0
    %1972 = vperm.xlu0 %1971, %v1930
    %v1973 = vpop.permute.xlu0 %1972
    %1976 = vset.pattern.permute.xlu0 0
    %1977 = vperm.xlu0 %1976, %v1931
    %v1978 = vpop.permute.xlu0 %1977
    %1981 = vset.pattern.permute.xlu0 0
    %1982 = vperm.xlu0 %1981, %v1932
    %v1983 = vpop.permute.xlu0 %1982
    %1986 = vset.pattern.permute.xlu0 0
    %1987 = vperm.xlu0 %1986, %v1933
    %v1988 = vpop.permute.xlu0 %1987
    %1991 = vset.pattern.permute.xlu0 0
    %1992 = vperm.xlu0 %1991, %v1934
    %v1993 = vpop.permute.xlu0 %1992
    %v1996 = vsel %vm238, %v1910, 0
    %v1999 = vsel %vm238, %v1911, 0
    %v2002 = vsel %vm238, %v1912, 0
    %v2005 = vsel %vm238, %v1913, 0
    %v2008 = vsel %vm238, %v1914, 0
    %v2011 = vsel %vm238, %v1915, 0
    %v2014 = vsel %vm238, %v1916, 0
    %v2017 = vsel %vm238, %v1917, 0
    %v2020 = vsel %vm238, %v1918, 0
    %v2023 = vsel %vm238, %v1919, 0
    %v2026 = vsel %vm238, %v1920, 0
    %v2029 = vsel %vm238, %v1921, 0
    %v2032 = vsel %vm238, %v1907, 0
    %v2035 = vsel %vm238, %v1908, 0
    %2037 = vmatprep.subr.mxu0 0.0
    %2038 = vmatpush1.xpose.msra.mxu0 0.0
    %2039 = vmatprep.subr.mxu0 0.0
    %2040 = vmatpush1.xpose.msra.mxu0 0.0
    %2041 = vmatprep.subr.mxu0 0.0
    %2042 = vmatpush1.xpose.msra.mxu0 0.0
    %2043 = vmatprep.subr.mxu0 0.0
    %2044 = vmatpush1.xpose.msra.mxu0 0.0
    %2045 = vmatprep.subr.mxu0 0.0
    %2046 = vmatpush1.xpose.msra.mxu0 0.0
    %2047 = vmatprep.subr.mxu0 0.0
    %2048 = vmatpush1.xpose.msra.mxu0 0.0
    %2049 = vmatprep.subr.mxu0 0.0
    %2050 = vmatpush1.xpose.msra.mxu0 0.0
    %2051 = vmatprep.subr.mxu0 0.0
    %2052 = vmatpush1.xpose.msra.mxu0 0.0
    %2053 = vmatprep.subr.mxu0 0.0
    %2054 = vmatpush1.xpose.msra.mxu0 0.0
    %2055 = vmatprep.subr.mxu0 0.0
    %2056 = vmatpush1.xpose.msra.mxu0 0.0
    %2057 = vmatprep.subr.mxu0 0.0
    %2058 = vmatpush1.xpose.msra.mxu0 0.0
    %2059 = vmatprep.subr.mxu0 0.0
    %2060 = vmatpush1.xpose.msra.mxu0 0.0
    %2061 = vmatprep.subr.mxu0 0.0
    %2062 = vmatpush1.xpose.msra.mxu0 0.0
    %2063 = vmatprep.subr.mxu0 0.0
    %2064 = vmatpush1.xpose.msra.mxu0 0.0
    %2065 = vmatprep.subr.mxu0 0.0
    %2066 = vmatpush1.xpose.msra.mxu0 %v2035
    %2067 = vmatprep.subr.mxu0 0.0
    %2068 = vmatpush1.xpose.msra.mxu0 %v2032
    %2069 = vmatprep.subr.mxu0 0.0
    %2070 = vmatpush2.xpose.msra.mxu0 0.0
    %2071 = vmatprep.subr.mxu0 0.0
    %2072 = vmatpush2.xpose.msra.mxu0 0.0
    %2073 = vmatprep.subr.mxu0 0.0
    %2074 = vmatpush2.xpose.msra.mxu0 0.0
    %2075 = vmatprep.subr.mxu0 0.0
    %2076 = vmatpush2.xpose.msra.mxu0 0.0
    %2077 = vmatprep.subr.mxu0 0.0
    %2078 = vmatpush2.xpose.msra.mxu0 0.0
    %2079 = vmatprep.subr.mxu0 0.0
    %2080 = vmatpush2.xpose.msra.mxu0 0.0
    %2081 = vmatprep.subr.mxu0 0.0
    %2082 = vmatpush2.xpose.msra.mxu0 0.0
    %2083 = vmatprep.subr.mxu0 0.0
    %2084 = vmatpush2.xpose.msra.mxu0 0.0
    %2085 = vmatprep.subr.mxu0 0.0
    %2086 = vmatpush2.xpose.msra.mxu0 0.0
    %2087 = vmatprep.subr.mxu0 0.0
    %2088 = vmatpush2.xpose.msra.mxu0 0.0
    %2089 = vmatprep.subr.mxu0 0.0
    %2090 = vmatpush2.xpose.msra.mxu0 0.0
    %2091 = vmatprep.subr.mxu0 0.0
    %2092 = vmatpush2.xpose.msra.mxu0 0.0
    %2093 = vmatprep.subr.mxu0 0.0
    %2094 = vmatpush2.xpose.msra.mxu0 0.0
    %2095 = vmatprep.subr.mxu0 0.0
    %2096 = vmatpush2.xpose.msra.mxu0 0.0
    %2097 = vmatprep.subr.mxu0 0.0
    %2098 = vmatpush2.xpose.msra.mxu0 0.0
    %2099 = vmatprep.subr.mxu0 0.0
    %2100 = vmatpush2.xpose.msra.mxu0 0.0
    %2101 = vmatprep.mubr.f32.mxu0 0.0
    %2102 = vmatmul.mubr.f32.gmra.mxu0 %v1996
    %v2103 = vpop.f32.mrf.mxu0
    %v2104 = vadd.f32 %v1938, %v2103
    %v2105 = vpop.f32.mrf.mxu0
    %2106 = vmatprep.mubr.f32.mxu0 0.0
    %2107 = vmatmul.mubr.f32.gmra.mxu0 %v1999
    %v2108 = vpop.f32.mrf.mxu0
    %v2109 = vadd.f32 %v1943, %v2108
    %v2110 = vpop.f32.mrf.mxu0
    %2111 = vmatprep.mubr.f32.mxu0 0.0
    %2112 = vmatmul.mubr.f32.gmra.mxu0 %v2002
    %v2113 = vpop.f32.mrf.mxu0
    %v2114 = vadd.f32 %v1948, %v2113
    %v2115 = vpop.f32.mrf.mxu0
    %2116 = vmatprep.mubr.f32.mxu0 0.0
    %2117 = vmatmul.mubr.f32.gmra.mxu0 %v2005
    %v2118 = vpop.f32.mrf.mxu0
    %v2119 = vadd.f32 %v1953, %v2118
    %v2120 = vpop.f32.mrf.mxu0
    %2121 = vmatprep.mubr.f32.mxu0 0.0
    %2122 = vmatmul.mubr.f32.gmra.mxu0 %v2008
    %v2123 = vpop.f32.mrf.mxu0
    %v2124 = vadd.f32 %v1958, %v2123
    %v2125 = vpop.f32.mrf.mxu0
    %2126 = vmatprep.mubr.f32.mxu0 0.0
    %2127 = vmatmul.mubr.f32.gmra.mxu0 %v2011
    %v2128 = vpop.f32.mrf.mxu0
    %v2129 = vadd.f32 %v1963, %v2128
    %v2130 = vpop.f32.mrf.mxu0
    %2131 = vmatprep.mubr.f32.mxu0 0.0
    %2132 = vmatmul.mubr.f32.gmra.mxu0 %v2014
    %v2133 = vpop.f32.mrf.mxu0
    %v2134 = vadd.f32 %v1968, %v2133
    %v2135 = vpop.f32.mrf.mxu0
    %2136 = vmatprep.mubr.f32.mxu0 0.0
    %2137 = vmatmul.mubr.f32.gmra.mxu0 %v2017
    %v2138 = vpop.f32.mrf.mxu0
    %v2139 = vadd.f32 %v1973, %v2138
    %v2140 = vpop.f32.mrf.mxu0
    %2141 = vmatprep.mubr.f32.mxu0 0.0
    %2142 = vmatmul.mubr.f32.gmra.mxu0 %v2020
    %v2143 = vpop.f32.mrf.mxu0
    %v2144 = vadd.f32 %v1978, %v2143
    %v2145 = vpop.f32.mrf.mxu0
    %2146 = vmatprep.mubr.f32.mxu0 0.0
    %2147 = vmatmul.mubr.f32.gmra.mxu0 %v2023
    %v2148 = vpop.f32.mrf.mxu0
    %v2149 = vadd.f32 %v1983, %v2148
    %v2150 = vpop.f32.mrf.mxu0
    %2151 = vmatprep.mubr.f32.mxu0 0.0
    %2152 = vmatmul.mubr.f32.gmra.mxu0 %v2026
    %v2153 = vpop.f32.mrf.mxu0
    %v2154 = vadd.f32 %v1988, %v2153
    %v2155 = vpop.f32.mrf.mxu0
    %2156 = vmatprep.mubr.f32.mxu0 0.0
    %2157 = vmatmul.mubr.f32.gmra.mxu0 %v2029
    %v2158 = vpop.f32.mrf.mxu0
    %v2159 = vadd.f32 %v1993, %v2158
    %v2160 = vpop.f32.mrf.mxu0
    %2161 = vdwg.mxu0
    %s2162 = scalar_lea.vmem %s6, 96
    %v2163 = vld [vmem:[%s2162] sm:$0xff]
    %v2164 = vld [vmem:[%s2162 + $0x8] sm:$0xff]
    %v2165 = vld [vmem:[%s2162 + $0x10] sm:$0xff]
    %v2166 = vld [vmem:[%s2162 + $0x18] sm:$0xff]
    %v2167 = vld [vmem:[%s2162 + $0x20] sm:$0xff]
    %v2168 = vld [vmem:[%s2162 + $0x28] sm:$0xff]
    %v2169 = vld [vmem:[%s2162 + $0x30] sm:$0xff]
    %v2170 = vld [vmem:[%s2162 + $0x38] sm:$0xff]
    %v2171 = vld [vmem:[%s2162 + $0x40] sm:$0xff]
    %v2172 = vld [vmem:[%s2162 + $0x48] sm:$0xff]
    %v2173 = vld [vmem:[%s2162 + $0x50] sm:$0xff]
    %v2174 = vld [vmem:[%s2162 + $0x58] sm:$0xff]
    %s2175 = scalar_lea.vmem %s7, 8
    %v2176 = vld [vmem:[%s2175] sm:$0x7f]
    %2177 = vxpose.xlu0.b32.start [1/16] %v2104, 128
    %2178 = vxpose.xlu0.b32.cont [2/16] 0.0, 128
    %2179 = vxpose.xlu0.b32.cont [3/16] 0.0, 128
    %2180 = vxpose.xlu0.b32.cont [4/16] 0.0, 128
    %2181 = vxpose.xlu0.b32.cont [5/16] 0.0, 128
    %2182 = vxpose.xlu0.b32.cont [6/16] 0.0, 128
    %2183 = vxpose.xlu0.b32.cont [7/16] 0.0, 128
    %2184 = vxpose.xlu0.b32.cont [8/16] 0.0, 128
    %2185 = vxpose.xlu0.b32.cont [9/16] 0.0, 128
    %2186 = vxpose.xlu0.b32.cont [10/16] 0.0, 128
    %2187 = vxpose.xlu0.b32.cont [11/16] 0.0, 128
    %2188 = vxpose.xlu0.b32.cont [12/16] 0.0, 128
    %2189 = vxpose.xlu0.b32.cont [13/16] 0.0, 128
    %2190 = vxpose.xlu0.b32.cont [14/16] 0.0, 128
    %2191 = vxpose.xlu0.b32.cont [15/16] 0.0, 128
    %2192 = vxpose.xlu0.b32.end [16/16] 0.0, 128
    %v2193 = vpop.trf.xlu0
    %v2194 = vpop.trf.xlu0
    %v2195 = vpop.trf.xlu0
    %v2196 = vpop.trf.xlu0
    %v2197 = vpop.trf.xlu0
    %v2198 = vpop.trf.xlu0
    %v2199 = vpop.trf.xlu0
    %v2200 = vpop.trf.xlu0
    %v2201 = vpop.trf.xlu0
    %v2202 = vpop.trf.xlu0
    %v2203 = vpop.trf.xlu0
    %v2204 = vpop.trf.xlu0
    %v2205 = vpop.trf.xlu0
    %v2206 = vpop.trf.xlu0
    %v2207 = vpop.trf.xlu0
    %v2208 = vpop.trf.xlu0
    %v2210 = vsel %vm451, %v2193, 0
    %v2213 = vsel %vm451, %v2194, 0
    %2215 = vmatprep.subr.mxu0 0.0
    %2216 = vmatpush1.msra.mxu0 0.0
    %2217 = vmatprep.subr.mxu0 0.0
    %2218 = vmatpush1.msra.mxu0 0.0
    %2219 = vmatprep.subr.mxu0 0.0
    %2220 = vmatpush1.msra.mxu0 0.0
    %2221 = vmatprep.subr.mxu0 0.0
    %2222 = vmatpush1.msra.mxu0 0.0
    %2223 = vmatprep.subr.mxu0 0.0
    %2224 = vmatpush1.msra.mxu0 0.0
    %2225 = vmatprep.subr.mxu0 0.0
    %2226 = vmatpush1.msra.mxu0 0.0
    %2227 = vmatprep.subr.mxu0 0.0
    %2228 = vmatpush1.msra.mxu0 0.0
    %2229 = vmatprep.subr.mxu0 0.0
    %2230 = vmatpush1.msra.mxu0 0.0
    %2231 = vmatprep.subr.mxu0 0.0
    %2232 = vmatpush1.msra.mxu0 0.0
    %2233 = vmatprep.subr.mxu0 0.0
    %2234 = vmatpush1.msra.mxu0 0.0
    %2235 = vmatprep.subr.mxu0 0.0
    %2236 = vmatpush1.msra.mxu0 0.0
    %2237 = vmatprep.subr.mxu0 0.0
    %2238 = vmatpush1.msra.mxu0 0.0
    %2239 = vmatprep.subr.mxu0 0.0
    %2240 = vmatpush1.msra.mxu0 0.0
    %2241 = vmatprep.subr.mxu0 0.0
    %2242 = vmatpush1.msra.mxu0 0.0
    %2243 = vmatprep.subr.mxu0 0.0
    %2244 = vmatpush1.msra.mxu0 0.0
    %2245 = vmatprep.subr.mxu0 0.0
    %2246 = vmatpush1.msra.mxu0 %v2124
    %2247 = vmatprep.subr.mxu0 0.0
    %2248 = vmatpush2.msra.mxu0 0.0
    %2249 = vmatprep.subr.mxu0 0.0
    %2250 = vmatpush2.msra.mxu0 0.0
    %2251 = vmatprep.subr.mxu0 0.0
    %2252 = vmatpush2.msra.mxu0 0.0
    %2253 = vmatprep.subr.mxu0 0.0
    %2254 = vmatpush2.msra.mxu0 0.0
    %2255 = vmatprep.subr.mxu0 0.0
    %2256 = vmatpush2.msra.mxu0 0.0
    %2257 = vmatprep.subr.mxu0 0.0
    %2258 = vmatpush2.msra.mxu0 0.0
    %2259 = vmatprep.subr.mxu0 0.0
    %2260 = vmatpush2.msra.mxu0 0.0
    %2261 = vmatprep.subr.mxu0 0.0
    %2262 = vmatpush2.msra.mxu0 0.0
    %2263 = vmatprep.subr.mxu0 0.0
    %2264 = vmatpush2.msra.mxu0 0.0
    %2265 = vmatprep.subr.mxu0 0.0
    %2266 = vmatpush2.msra.mxu0 0.0
    %2267 = vmatprep.subr.mxu0 0.0
    %2268 = vmatpush2.msra.mxu0 0.0
    %2269 = vmatprep.subr.mxu0 0.0
    %2270 = vmatpush2.msra.mxu0 0.0
    %2271 = vmatprep.subr.mxu0 0.0
    %2272 = vmatpush2.msra.mxu0 0.0
    %2273 = vmatprep.subr.mxu0 0.0
    %2274 = vmatpush2.msra.mxu0 0.0
    %2275 = vmatprep.subr.mxu0 0.0
    %2276 = vmatpush2.msra.mxu0 0.0
    %2277 = vmatprep.subr.mxu0 0.0
    %2278 = vmatpush2.msra.mxu0 0.0
    %2279 = vmatprep.mubr.f32.mxu0 0.0
    %2280 = vmatmul.mubr.f32.gmra.mxu0 %v2210
    %v2281 = vpop.f32.mrf.mxu0
    %v2282 = vadd.f32 0.0, %v2281
    %v2283 = vpop.f32.mrf.mxu0
    %2284 = vmatprep.mubr.f32.mxu0 0.0
    %2285 = vmatmul.mubr.f32.gmra.mxu0 %v2213
    %v2286 = vpop.f32.mrf.mxu0
    %v2287 = vadd.f32 0.0, %v2286
    %v2288 = vpop.f32.mrf.mxu0
    %2289 = vdwg.mxu0
    %v2290 = vmul.f32 %v2282, 0.35355338
    %v2291 = vmul.f32 %v2287, 0.35355338
    %v2292 = vadd.f32 %v2290, %v152
    %v2293 = vadd.f32 %v2291, %v153
    %v2294 = vsel %vm537, %v2292, -inf
    %2295 = vmax.xlane.f32.xlu0 %v2294
    %v2296 = vpop.xlane.xlu0 %2295
    %v2297 = vsel %vm537, %v2293, -inf
    %2298 = vmax.xlane.f32.xlu0 %v2297
    %v2299 = vpop.xlane.xlu0 %2298
    %v2300 = vsub.f32 %v2292, %v2296
    %v2301 = vsub.f32 %v2293, %v2299
    %v2302 = vmul.f32 %v2300, 1.442695
    %v2303 = vpow.pop %v2302
    %v2304 = vmul.f32 %v2301, 1.442695
    %v2305 = vpow.pop %v2304
    %v2306 = vsel %vm537, %v2303, 0.0
    %2307 = vadd.xlane.f32.xlu0 %v2306
    %v2308 = vpop.xlane.xlu0 %2307
    %v2309 = vsel %vm537, %v2305, 0.0
    %2310 = vadd.xlane.f32.xlu0 %v2309
    %v2311 = vpop.xlane.xlu0 %2310
    %v2312 = vrcp.pop %v2308
    %v2313 = vrcp.pop %v2311
    %v2314 = vmul.f32 %v2303, %v2312
    %v2315 = vmul.f32 %v2305, %v2313
    %v2317 = vsel %vm537, %v2314, 0
    %v2320 = vsel %vm537, %v2315, 0
    %v2323 = vsel %vm537, %v2144, 0
    %2325 = vmatprep.subr.mxu0 0.0
    %2326 = vmatpush1.xpose.msra.mxu0 0.0
    %2327 = vmatprep.subr.mxu0 0.0
    %2328 = vmatpush1.xpose.msra.mxu0 0.0
    %2329 = vmatprep.subr.mxu0 0.0
    %2330 = vmatpush1.xpose.msra.mxu0 0.0
    %2331 = vmatprep.subr.mxu0 0.0
    %2332 = vmatpush1.xpose.msra.mxu0 0.0
    %2333 = vmatprep.subr.mxu0 0.0
    %2334 = vmatpush1.xpose.msra.mxu0 0.0
    %2335 = vmatprep.subr.mxu0 0.0
    %2336 = vmatpush1.xpose.msra.mxu0 0.0
    %2337 = vmatprep.subr.mxu0 0.0
    %2338 = vmatpush1.xpose.msra.mxu0 0.0
    %2339 = vmatprep.subr.mxu0 0.0
    %2340 = vmatpush1.xpose.msra.mxu0 0.0
    %2341 = vmatprep.subr.mxu0 0.0
    %2342 = vmatpush1.xpose.msra.mxu0 0.0
    %2343 = vmatprep.subr.mxu0 0.0
    %2344 = vmatpush1.xpose.msra.mxu0 0.0
    %2345 = vmatprep.subr.mxu0 0.0
    %2346 = vmatpush1.xpose.msra.mxu0 0.0
    %2347 = vmatprep.subr.mxu0 0.0
    %2348 = vmatpush1.xpose.msra.mxu0 0.0
    %2349 = vmatprep.subr.mxu0 0.0
    %2350 = vmatpush1.xpose.msra.mxu0 0.0
    %2351 = vmatprep.subr.mxu0 0.0
    %2352 = vmatpush1.xpose.msra.mxu0 0.0
    %2353 = vmatprep.subr.mxu0 0.0
    %2354 = vmatpush1.xpose.msra.mxu0 0.0
    %2355 = vmatprep.subr.mxu0 0.0
    %2356 = vmatpush1.xpose.msra.mxu0 %v2323
    %2357 = vmatprep.subr.mxu0 0.0
    %2358 = vmatpush2.xpose.msra.mxu0 0.0
    %2359 = vmatprep.subr.mxu0 0.0
    %2360 = vmatpush2.xpose.msra.mxu0 0.0
    %2361 = vmatprep.subr.mxu0 0.0
    %2362 = vmatpush2.xpose.msra.mxu0 0.0
    %2363 = vmatprep.subr.mxu0 0.0
    %2364 = vmatpush2.xpose.msra.mxu0 0.0
    %2365 = vmatprep.subr.mxu0 0.0
    %2366 = vmatpush2.xpose.msra.mxu0 0.0
    %2367 = vmatprep.subr.mxu0 0.0
    %2368 = vmatpush2.xpose.msra.mxu0 0.0
    %2369 = vmatprep.subr.mxu0 0.0
    %2370 = vmatpush2.xpose.msra.mxu0 0.0
    %2371 = vmatprep.subr.mxu0 0.0
    %2372 = vmatpush2.xpose.msra.mxu0 0.0
    %2373 = vmatprep.subr.mxu0 0.0
    %2374 = vmatpush2.xpose.msra.mxu0 0.0
    %2375 = vmatprep.subr.mxu0 0.0
    %2376 = vmatpush2.xpose.msra.mxu0 0.0
    %2377 = vmatprep.subr.mxu0 0.0
    %2378 = vmatpush2.xpose.msra.mxu0 0.0
    %2379 = vmatprep.subr.mxu0 0.0
    %2380 = vmatpush2.xpose.msra.mxu0 0.0
    %2381 = vmatprep.subr.mxu0 0.0
    %2382 = vmatpush2.xpose.msra.mxu0 0.0
    %2383 = vmatprep.subr.mxu0 0.0
    %2384 = vmatpush2.xpose.msra.mxu0 0.0
    %2385 = vmatprep.subr.mxu0 0.0
    %2386 = vmatpush2.xpose.msra.mxu0 0.0
    %2387 = vmatprep.subr.mxu0 0.0
    %2388 = vmatpush2.xpose.msra.mxu0 0.0
    %2389 = vmatprep.mubr.f32.mxu0 0.0
    %2390 = vmatmul.mubr.f32.gmra.mxu0 %v2317
    %v2391 = vpop.f32.mrf.mxu0
    %v2392 = vadd.f32 0.0, %v2391
    %v2393 = vpop.f32.mrf.mxu0
    %2394 = vmatprep.mubr.f32.mxu0 0.0
    %2395 = vmatmul.mubr.f32.gmra.mxu0 %v2320
    %v2396 = vpop.f32.mrf.mxu0
    %v2397 = vadd.f32 0.0, %v2396
    %v2398 = vpop.f32.mrf.mxu0
    %2399 = vdwg.mxu0
    %2400 = vxpose.xlu0.b32.start [1/16] %v2109, 128
    %2401 = vxpose.xlu0.b32.cont [2/16] 0.0, 128
    %2402 = vxpose.xlu0.b32.cont [3/16] 0.0, 128
    %2403 = vxpose.xlu0.b32.cont [4/16] 0.0, 128
    %2404 = vxpose.xlu0.b32.cont [5/16] 0.0, 128
    %2405 = vxpose.xlu0.b32.cont [6/16] 0.0, 128
    %2406 = vxpose.xlu0.b32.cont [7/16] 0.0, 128
    %2407 = vxpose.xlu0.b32.cont [8/16] 0.0, 128
    %2408 = vxpose.xlu0.b32.cont [9/16] 0.0, 128
    %2409 = vxpose.xlu0.b32.cont [10/16] 0.0, 128
    %2410 = vxpose.xlu0.b32.cont [11/16] 0.0, 128
    %2411 = vxpose.xlu0.b32.cont [12/16] 0.0, 128
    %2412 = vxpose.xlu0.b32.cont [13/16] 0.0, 128
    %2413 = vxpose.xlu0.b32.cont [14/16] 0.0, 128
    %2414 = vxpose.xlu0.b32.cont [15/16] 0.0, 128
    %2415 = vxpose.xlu0.b32.end [16/16] 0.0, 128
    %v2416 = vpop.trf.xlu0
    %v2417 = vpop.trf.xlu0
    %v2418 = vpop.trf.xlu0
    %v2419 = vpop.trf.xlu0
    %v2420 = vpop.trf.xlu0
    %v2421 = vpop.trf.xlu0
    %v2422 = vpop.trf.xlu0
    %v2423 = vpop.trf.xlu0
    %v2424 = vpop.trf.xlu0
    %v2425 = vpop.trf.xlu0
    %v2426 = vpop.trf.xlu0
    %v2427 = vpop.trf.xlu0
    %v2428 = vpop.trf.xlu0
    %v2429 = vpop.trf.xlu0
    %v2430 = vpop.trf.xlu0
    %v2431 = vpop.trf.xlu0
    %v2433 = vsel %vm451, %v2416, 0
    %v2436 = vsel %vm451, %v2417, 0
    %2438 = vmatprep.subr.mxu0 0.0
    %2439 = vmatpush1.msra.mxu0 0.0
    %2440 = vmatprep.subr.mxu0 0.0
    %2441 = vmatpush1.msra.mxu0 0.0
    %2442 = vmatprep.subr.mxu0 0.0
    %2443 = vmatpush1.msra.mxu0 0.0
    %2444 = vmatprep.subr.mxu0 0.0
    %2445 = vmatpush1.msra.mxu0 0.0
    %2446 = vmatprep.subr.mxu0 0.0
    %2447 = vmatpush1.msra.mxu0 0.0
    %2448 = vmatprep.subr.mxu0 0.0
    %2449 = vmatpush1.msra.mxu0 0.0
    %2450 = vmatprep.subr.mxu0 0.0
    %2451 = vmatpush1.msra.mxu0 0.0
    %2452 = vmatprep.subr.mxu0 0.0
    %2453 = vmatpush1.msra.mxu0 0.0
    %2454 = vmatprep.subr.mxu0 0.0
    %2455 = vmatpush1.msra.mxu0 0.0
    %2456 = vmatprep.subr.mxu0 0.0
    %2457 = vmatpush1.msra.mxu0 0.0
    %2458 = vmatprep.subr.mxu0 0.0
    %2459 = vmatpush1.msra.mxu0 0.0
    %2460 = vmatprep.subr.mxu0 0.0
    %2461 = vmatpush1.msra.mxu0 0.0
    %2462 = vmatprep.subr.mxu0 0.0
    %2463 = vmatpush1.msra.mxu0 0.0
    %2464 = vmatprep.subr.mxu0 0.0
    %2465 = vmatpush1.msra.mxu0 0.0
    %2466 = vmatprep.subr.mxu0 0.0
    %2467 = vmatpush1.msra.mxu0 0.0
    %2468 = vmatprep.subr.mxu0 0.0
    %2469 = vmatpush1.msra.mxu0 %v2129
    %2470 = vmatprep.subr.mxu0 0.0
    %2471 = vmatpush2.msra.mxu0 0.0
    %2472 = vmatprep.subr.mxu0 0.0
    %2473 = vmatpush2.msra.mxu0 0.0
    %2474 = vmatprep.subr.mxu0 0.0
    %2475 = vmatpush2.msra.mxu0 0.0
    %2476 = vmatprep.subr.mxu0 0.0
    %2477 = vmatpush2.msra.mxu0 0.0
    %2478 = vmatprep.subr.mxu0 0.0
    %2479 = vmatpush2.msra.mxu0 0.0
    %2480 = vmatprep.subr.mxu0 0.0
    %2481 = vmatpush2.msra.mxu0 0.0
    %2482 = vmatprep.subr.mxu0 0.0
    %2483 = vmatpush2.msra.mxu0 0.0
    %2484 = vmatprep.subr.mxu0 0.0
    %2485 = vmatpush2.msra.mxu0 0.0
    %2486 = vmatprep.subr.mxu0 0.0
    %2487 = vmatpush2.msra.mxu0 0.0
    %2488 = vmatprep.subr.mxu0 0.0
    %2489 = vmatpush2.msra.mxu0 0.0
    %2490 = vmatprep.subr.mxu0 0.0
    %2491 = vmatpush2.msra.mxu0 0.0
    %2492 = vmatprep.subr.mxu0 0.0
    %2493 = vmatpush2.msra.mxu0 0.0
    %2494 = vmatprep.subr.mxu0 0.0
    %2495 = vmatpush2.msra.mxu0 0.0
    %2496 = vmatprep.subr.mxu0 0.0
    %2497 = vmatpush2.msra.mxu0 0.0
    %2498 = vmatprep.subr.mxu0 0.0
    %2499 = vmatpush2.msra.mxu0 0.0
    %2500 = vmatprep.subr.mxu0 0.0
    %2501 = vmatpush2.msra.mxu0 0.0
    %2502 = vmatprep.mubr.f32.mxu0 0.0
    %2503 = vmatmul.mubr.f32.gmra.mxu0 %v2433
    %v2504 = vpop.f32.mrf.mxu0
    %v2505 = vadd.f32 0.0, %v2504
    %v2506 = vpop.f32.mrf.mxu0
    %2507 = vmatprep.mubr.f32.mxu0 0.0
    %2508 = vmatmul.mubr.f32.gmra.mxu0 %v2436
    %v2509 = vpop.f32.mrf.mxu0
    %v2510 = vadd.f32 0.0, %v2509
    %v2511 = vpop.f32.mrf.mxu0
    %2512 = vdwg.mxu0
    %v2513 = vmul.f32 %v2505, 0.35355338
    %v2514 = vmul.f32 %v2510, 0.35355338
    %v2515 = vadd.f32 %v2513, %v152
    %v2516 = vadd.f32 %v2514, %v153
    %v2517 = vsel %vm537, %v2515, -inf
    %2518 = vmax.xlane.f32.xlu0 %v2517
    %v2519 = vpop.xlane.xlu0 %2518
    %v2520 = vsel %vm537, %v2516, -inf
    %2521 = vmax.xlane.f32.xlu0 %v2520
    %v2522 = vpop.xlane.xlu0 %2521
    %v2523 = vsub.f32 %v2515, %v2519
    %v2524 = vsub.f32 %v2516, %v2522
    %v2525 = vmul.f32 %v2523, 1.442695
    %v2526 = vpow.pop %v2525
    %v2527 = vmul.f32 %v2524, 1.442695
    %v2528 = vpow.pop %v2527
    %v2529 = vsel %vm537, %v2526, 0.0
    %2530 = vadd.xlane.f32.xlu0 %v2529
    %v2531 = vpop.xlane.xlu0 %2530
    %v2532 = vsel %vm537, %v2528, 0.0
    %2533 = vadd.xlane.f32.xlu0 %v2532
    %v2534 = vpop.xlane.xlu0 %2533
    %v2535 = vrcp.pop %v2531
    %v2536 = vrcp.pop %v2534
    %v2537 = vmul.f32 %v2526, %v2535
    %v2538 = vmul.f32 %v2528, %v2536
    %v2540 = vsel %vm537, %v2537, 0
    %v2543 = vsel %vm537, %v2538, 0
    %v2546 = vsel %vm537, %v2149, 0
    %2548 = vmatprep.subr.mxu0 0.0
    %2549 = vmatpush1.xpose.msra.mxu0 0.0
    %2550 = vmatprep.subr.mxu0 0.0
    %2551 = vmatpush1.xpose.msra.mxu0 0.0
    %2552 = vmatprep.subr.mxu0 0.0
    %2553 = vmatpush1.xpose.msra.mxu0 0.0
    %2554 = vmatprep.subr.mxu0 0.0
    %2555 = vmatpush1.xpose.msra.mxu0 0.0
    %2556 = vmatprep.subr.mxu0 0.0
    %2557 = vmatpush1.xpose.msra.mxu0 0.0
    %2558 = vmatprep.subr.mxu0 0.0
    %2559 = vmatpush1.xpose.msra.mxu0 0.0
    %2560 = vmatprep.subr.mxu0 0.0
    %2561 = vmatpush1.xpose.msra.mxu0 0.0
    %2562 = vmatprep.subr.mxu0 0.0
    %2563 = vmatpush1.xpose.msra.mxu0 0.0
    %2564 = vmatprep.subr.mxu0 0.0
    %2565 = vmatpush1.xpose.msra.mxu0 0.0
    %2566 = vmatprep.subr.mxu0 0.0
    %2567 = vmatpush1.xpose.msra.mxu0 0.0
    %2568 = vmatprep.subr.mxu0 0.0
    %2569 = vmatpush1.xpose.msra.mxu0 0.0
    %2570 = vmatprep.subr.mxu0 0.0
    %2571 = vmatpush1.xpose.msra.mxu0 0.0
    %2572 = vmatprep.subr.mxu0 0.0
    %2573 = vmatpush1.xpose.msra.mxu0 0.0
    %2574 = vmatprep.subr.mxu0 0.0
    %2575 = vmatpush1.xpose.msra.mxu0 0.0
    %2576 = vmatprep.subr.mxu0 0.0
    %2577 = vmatpush1.xpose.msra.mxu0 0.0
    %2578 = vmatprep.subr.mxu0 0.0
    %2579 = vmatpush1.xpose.msra.mxu0 %v2546
    %2580 = vmatprep.subr.mxu0 0.0
    %2581 = vmatpush2.xpose.msra.mxu0 0.0
    %2582 = vmatprep.subr.mxu0 0.0
    %2583 = vmatpush2.xpose.msra.mxu0 0.0
    %2584 = vmatprep.subr.mxu0 0.0
    %2585 = vmatpush2.xpose.msra.mxu0 0.0
    %2586 = vmatprep.subr.mxu0 0.0
    %2587 = vmatpush2.xpose.msra.mxu0 0.0
    %2588 = vmatprep.subr.mxu0 0.0
    %2589 = vmatpush2.xpose.msra.mxu0 0.0
    %2590 = vmatprep.subr.mxu0 0.0
    %2591 = vmatpush2.xpose.msra.mxu0 0.0
    %2592 = vmatprep.subr.mxu0 0.0
    %2593 = vmatpush2.xpose.msra.mxu0 0.0
    %2594 = vmatprep.subr.mxu0 0.0
    %2595 = vmatpush2.xpose.msra.mxu0 0.0
    %2596 = vmatprep.subr.mxu0 0.0
    %2597 = vmatpush2.xpose.msra.mxu0 0.0
    %2598 = vmatprep.subr.mxu0 0.0
    %2599 = vmatpush2.xpose.msra.mxu0 0.0
    %2600 = vmatprep.subr.mxu0 0.0
    %2601 = vmatpush2.xpose.msra.mxu0 0.0
    %2602 = vmatprep.subr.mxu0 0.0
    %2603 = vmatpush2.xpose.msra.mxu0 0.0
    %2604 = vmatprep.subr.mxu0 0.0
    %2605 = vmatpush2.xpose.msra.mxu0 0.0
    %2606 = vmatprep.subr.mxu0 0.0
    %2607 = vmatpush2.xpose.msra.mxu0 0.0
    %2608 = vmatprep.subr.mxu0 0.0
    %2609 = vmatpush2.xpose.msra.mxu0 0.0
    %2610 = vmatprep.subr.mxu0 0.0
    %2611 = vmatpush2.xpose.msra.mxu0 0.0
    %2612 = vmatprep.mubr.f32.mxu0 0.0
    %2613 = vmatmul.mubr.f32.gmra.mxu0 %v2540
    %v2614 = vpop.f32.mrf.mxu0
    %v2615 = vadd.f32 0.0, %v2614
    %v2616 = vpop.f32.mrf.mxu0
    %2617 = vmatprep.mubr.f32.mxu0 0.0
    %2618 = vmatmul.mubr.f32.gmra.mxu0 %v2543
    %v2619 = vpop.f32.mrf.mxu0
    %v2620 = vadd.f32 0.0, %v2619
    %v2621 = vpop.f32.mrf.mxu0
    %2622 = vdwg.mxu0
    %v2624 = vsel %vm451, %v2615, 0
    %v2627 = vsel %vm451, %v2620, 0
    %2629 = vmatprep.subr.mxu0 0.0
    %2630 = vmatpush1.msra.mxu0 0.0
    %2631 = vmatprep.subr.mxu0 0.0
    %2632 = vmatpush1.msra.mxu0 0.0
    %2633 = vmatprep.subr.mxu0 0.0
    %2634 = vmatpush1.msra.mxu0 0.0
    %2635 = vmatprep.subr.mxu0 0.0
    %2636 = vmatpush1.msra.mxu0 0.0
    %2637 = vmatprep.subr.mxu0 0.0
    %2638 = vmatpush1.msra.mxu0 0.0
    %2639 = vmatprep.subr.mxu0 0.0
    %2640 = vmatpush1.msra.mxu0 0.0
    %2641 = vmatprep.subr.mxu0 0.0
    %2642 = vmatpush1.msra.mxu0 0.0
    %2643 = vmatprep.subr.mxu0 0.0
    %2644 = vmatpush1.msra.mxu0 0.0
    %2645 = vmatprep.subr.mxu0 0.0
    %2646 = vmatpush1.msra.mxu0 0.0
    %2647 = vmatprep.subr.mxu0 0.0
    %2648 = vmatpush1.msra.mxu0 0.0
    %2649 = vmatprep.subr.mxu0 0.0
    %2650 = vmatpush1.msra.mxu0 0.0
    %2651 = vmatprep.subr.mxu0 0.0
    %2652 = vmatpush1.msra.mxu0 0.0
    %2653 = vmatprep.subr.mxu0 0.0
    %2654 = vmatpush1.msra.mxu0 0.0
    %2655 = vmatprep.subr.mxu0 0.0
    %2656 = vmatpush1.msra.mxu0 0.0
    %2657 = vmatprep.subr.mxu0 0.0
    %2658 = vmatpush1.msra.mxu0 0.0
    %2659 = vmatprep.subr.mxu0 0.0
    %2660 = vmatpush1.msra.mxu0 %v2164
    %2661 = vmatprep.subr.mxu0 0.0
    %2662 = vmatpush2.msra.mxu0 0.0
    %2663 = vmatprep.subr.mxu0 0.0
    %2664 = vmatpush2.msra.mxu0 0.0
    %2665 = vmatprep.subr.mxu0 0.0
    %2666 = vmatpush2.msra.mxu0 0.0
    %2667 = vmatprep.subr.mxu0 0.0
    %2668 = vmatpush2.msra.mxu0 0.0
    %2669 = vmatprep.subr.mxu0 0.0
    %2670 = vmatpush2.msra.mxu0 0.0
    %2671 = vmatprep.subr.mxu0 0.0
    %2672 = vmatpush2.msra.mxu0 0.0
    %2673 = vmatprep.subr.mxu0 0.0
    %2674 = vmatpush2.msra.mxu0 0.0
    %2675 = vmatprep.subr.mxu0 0.0
    %2676 = vmatpush2.msra.mxu0 0.0
    %2677 = vmatprep.subr.mxu0 0.0
    %2678 = vmatpush2.msra.mxu0 0.0
    %2679 = vmatprep.subr.mxu0 0.0
    %2680 = vmatpush2.msra.mxu0 0.0
    %2681 = vmatprep.subr.mxu0 0.0
    %2682 = vmatpush2.msra.mxu0 0.0
    %2683 = vmatprep.subr.mxu0 0.0
    %2684 = vmatpush2.msra.mxu0 0.0
    %2685 = vmatprep.subr.mxu0 0.0
    %2686 = vmatpush2.msra.mxu0 0.0
    %2687 = vmatprep.subr.mxu0 0.0
    %2688 = vmatpush2.msra.mxu0 0.0
    %2689 = vmatprep.subr.mxu0 0.0
    %2690 = vmatpush2.msra.mxu0 0.0
    %2691 = vmatprep.subr.mxu0 0.0
    %2692 = vmatpush2.msra.mxu0 0.0
    %2693 = vmatprep.mubr.f32.mxu0 0.0
    %2694 = vmatmul.mubr.f32.gmra.mxu0 %v2624
    %v2695 = vpop.f32.mrf.mxu0
    %v2696 = vadd.f32 0.0, %v2695
    %v2697 = vpop.f32.mrf.mxu0
    %2698 = vmatprep.mubr.f32.mxu0 0.0
    %2699 = vmatmul.mubr.f32.gmra.mxu0 %v2627
    %v2700 = vpop.f32.mrf.mxu0
    %v2701 = vadd.f32 0.0, %v2700
    %v2702 = vpop.f32.mrf.mxu0
    %2703 = vdwg.mxu0
    %v2705 = vsel %vm451, %v2392, 0
    %v2708 = vsel %vm451, %v2397, 0
    %2710 = vmatprep.subr.mxu0 0.0
    %2711 = vmatpush1.msra.mxu0 0.0
    %2712 = vmatprep.subr.mxu0 0.0
    %2713 = vmatpush1.msra.mxu0 0.0
    %2714 = vmatprep.subr.mxu0 0.0
    %2715 = vmatpush1.msra.mxu0 0.0
    %2716 = vmatprep.subr.mxu0 0.0
    %2717 = vmatpush1.msra.mxu0 0.0
    %2718 = vmatprep.subr.mxu0 0.0
    %2719 = vmatpush1.msra.mxu0 0.0
    %2720 = vmatprep.subr.mxu0 0.0
    %2721 = vmatpush1.msra.mxu0 0.0
    %2722 = vmatprep.subr.mxu0 0.0
    %2723 = vmatpush1.msra.mxu0 0.0
    %2724 = vmatprep.subr.mxu0 0.0
    %2725 = vmatpush1.msra.mxu0 0.0
    %2726 = vmatprep.subr.mxu0 0.0
    %2727 = vmatpush1.msra.mxu0 0.0
    %2728 = vmatprep.subr.mxu0 0.0
    %2729 = vmatpush1.msra.mxu0 0.0
    %2730 = vmatprep.subr.mxu0 0.0
    %2731 = vmatpush1.msra.mxu0 0.0
    %2732 = vmatprep.subr.mxu0 0.0
    %2733 = vmatpush1.msra.mxu0 0.0
    %2734 = vmatprep.subr.mxu0 0.0
    %2735 = vmatpush1.msra.mxu0 0.0
    %2736 = vmatprep.subr.mxu0 0.0
    %2737 = vmatpush1.msra.mxu0 0.0
    %2738 = vmatprep.subr.mxu0 0.0
    %2739 = vmatpush1.msra.mxu0 0.0
    %2740 = vmatprep.subr.mxu0 0.0
    %2741 = vmatpush1.msra.mxu0 %v2163
    %2742 = vmatprep.subr.mxu0 0.0
    %2743 = vmatpush2.msra.mxu0 0.0
    %2744 = vmatprep.subr.mxu0 0.0
    %2745 = vmatpush2.msra.mxu0 0.0
    %2746 = vmatprep.subr.mxu0 0.0
    %2747 = vmatpush2.msra.mxu0 0.0
    %2748 = vmatprep.subr.mxu0 0.0
    %2749 = vmatpush2.msra.mxu0 0.0
    %2750 = vmatprep.subr.mxu0 0.0
    %2751 = vmatpush2.msra.mxu0 0.0
    %2752 = vmatprep.subr.mxu0 0.0
    %2753 = vmatpush2.msra.mxu0 0.0
    %2754 = vmatprep.subr.mxu0 0.0
    %2755 = vmatpush2.msra.mxu0 0.0
    %2756 = vmatprep.subr.mxu0 0.0
    %2757 = vmatpush2.msra.mxu0 0.0
    %2758 = vmatprep.subr.mxu0 0.0
    %2759 = vmatpush2.msra.mxu0 0.0
    %2760 = vmatprep.subr.mxu0 0.0
    %2761 = vmatpush2.msra.mxu0 0.0
    %2762 = vmatprep.subr.mxu0 0.0
    %2763 = vmatpush2.msra.mxu0 0.0
    %2764 = vmatprep.subr.mxu0 0.0
    %2765 = vmatpush2.msra.mxu0 0.0
    %2766 = vmatprep.subr.mxu0 0.0
    %2767 = vmatpush2.msra.mxu0 0.0
    %2768 = vmatprep.subr.mxu0 0.0
    %2769 = vmatpush2.msra.mxu0 0.0
    %2770 = vmatprep.subr.mxu0 0.0
    %2771 = vmatpush2.msra.mxu0 0.0
    %2772 = vmatprep.subr.mxu0 0.0
    %2773 = vmatpush2.msra.mxu0 0.0
    %2774 = vmatprep.mubr.f32.mxu0 0.0
    %2775 = vmatmul.mubr.f32.gmra.mxu0 %v2705
    %v2776 = vpop.f32.mrf.mxu0
    %v2777 = vadd.f32 %v2696, %v2776
    %v2778 = vpop.f32.mrf.mxu0
    %2779 = vmatprep.mubr.f32.mxu0 0.0
    %2780 = vmatmul.mubr.f32.gmra.mxu0 %v2708
    %v2781 = vpop.f32.mrf.mxu0
    %v2782 = vadd.f32 %v2701, %v2781
    %v2783 = vpop.f32.mrf.mxu0
    %2784 = vdwg.mxu0
    %2785 = vxpose.xlu0.b32.start [1/16] %v2114, 128
    %2786 = vxpose.xlu0.b32.cont [2/16] 0.0, 128
    %2787 = vxpose.xlu0.b32.cont [3/16] 0.0, 128
    %2788 = vxpose.xlu0.b32.cont [4/16] 0.0, 128
    %2789 = vxpose.xlu0.b32.cont [5/16] 0.0, 128
    %2790 = vxpose.xlu0.b32.cont [6/16] 0.0, 128
    %2791 = vxpose.xlu0.b32.cont [7/16] 0.0, 128
    %2792 = vxpose.xlu0.b32.cont [8/16] 0.0, 128
    %2793 = vxpose.xlu0.b32.cont [9/16] 0.0, 128
    %2794 = vxpose.xlu0.b32.cont [10/16] 0.0, 128
    %2795 = vxpose.xlu0.b32.cont [11/16] 0.0, 128
    %2796 = vxpose.xlu0.b32.cont [12/16] 0.0, 128
    %2797 = vxpose.xlu0.b32.cont [13/16] 0.0, 128
    %2798 = vxpose.xlu0.b32.cont [14/16] 0.0, 128
    %2799 = vxpose.xlu0.b32.cont [15/16] 0.0, 128
    %2800 = vxpose.xlu0.b32.end [16/16] 0.0, 128
    %v2801 = vpop.trf.xlu0
    %v2802 = vpop.trf.xlu0
    %v2803 = vpop.trf.xlu0
    %v2804 = vpop.trf.xlu0
    %v2805 = vpop.trf.xlu0
    %v2806 = vpop.trf.xlu0
    %v2807 = vpop.trf.xlu0
    %v2808 = vpop.trf.xlu0
    %v2809 = vpop.trf.xlu0
    %v2810 = vpop.trf.xlu0
    %v2811 = vpop.trf.xlu0
    %v2812 = vpop.trf.xlu0
    %v2813 = vpop.trf.xlu0
    %v2814 = vpop.trf.xlu0
    %v2815 = vpop.trf.xlu0
    %v2816 = vpop.trf.xlu0
    %v2818 = vsel %vm451, %v2801, 0
    %v2821 = vsel %vm451, %v2802, 0
    %2823 = vmatprep.subr.mxu0 0.0
    %2824 = vmatpush1.msra.mxu0 0.0
    %2825 = vmatprep.subr.mxu0 0.0
    %2826 = vmatpush1.msra.mxu0 0.0
    %2827 = vmatprep.subr.mxu0 0.0
    %2828 = vmatpush1.msra.mxu0 0.0
    %2829 = vmatprep.subr.mxu0 0.0
    %2830 = vmatpush1.msra.mxu0 0.0
    %2831 = vmatprep.subr.mxu0 0.0
    %2832 = vmatpush1.msra.mxu0 0.0
    %2833 = vmatprep.subr.mxu0 0.0
    %2834 = vmatpush1.msra.mxu0 0.0
    %2835 = vmatprep.subr.mxu0 0.0
    %2836 = vmatpush1.msra.mxu0 0.0
    %2837 = vmatprep.subr.mxu0 0.0
    %2838 = vmatpush1.msra.mxu0 0.0
    %2839 = vmatprep.subr.mxu0 0.0
    %2840 = vmatpush1.msra.mxu0 0.0
    %2841 = vmatprep.subr.mxu0 0.0
    %2842 = vmatpush1.msra.mxu0 0.0
    %2843 = vmatprep.subr.mxu0 0.0
    %2844 = vmatpush1.msra.mxu0 0.0
    %2845 = vmatprep.subr.mxu0 0.0
    %2846 = vmatpush1.msra.mxu0 0.0
    %2847 = vmatprep.subr.mxu0 0.0
    %2848 = vmatpush1.msra.mxu0 0.0
    %2849 = vmatprep.subr.mxu0 0.0
    %2850 = vmatpush1.msra.mxu0 0.0
    %2851 = vmatprep.subr.mxu0 0.0
    %2852 = vmatpush1.msra.mxu0 0.0
    %2853 = vmatprep.subr.mxu0 0.0
    %2854 = vmatpush1.msra.mxu0 %v2134
    %2855 = vmatprep.subr.mxu0 0.0
    %2856 = vmatpush2.msra.mxu0 0.0
    %2857 = vmatprep.subr.mxu0 0.0
    %2858 = vmatpush2.msra.mxu0 0.0
    %2859 = vmatprep.subr.mxu0 0.0
    %2860 = vmatpush2.msra.mxu0 0.0
    %2861 = vmatprep.subr.mxu0 0.0
    %2862 = vmatpush2.msra.mxu0 0.0
    %2863 = vmatprep.subr.mxu0 0.0
    %2864 = vmatpush2.msra.mxu0 0.0
    %2865 = vmatprep.subr.mxu0 0.0
    %2866 = vmatpush2.msra.mxu0 0.0
    %2867 = vmatprep.subr.mxu0 0.0
    %2868 = vmatpush2.msra.mxu0 0.0
    %2869 = vmatprep.subr.mxu0 0.0
    %2870 = vmatpush2.msra.mxu0 0.0
    %2871 = vmatprep.subr.mxu0 0.0
    %2872 = vmatpush2.msra.mxu0 0.0
    %2873 = vmatprep.subr.mxu0 0.0
    %2874 = vmatpush2.msra.mxu0 0.0
    %2875 = vmatprep.subr.mxu0 0.0
    %2876 = vmatpush2.msra.mxu0 0.0
    %2877 = vmatprep.subr.mxu0 0.0
    %2878 = vmatpush2.msra.mxu0 0.0
    %2879 = vmatprep.subr.mxu0 0.0
    %2880 = vmatpush2.msra.mxu0 0.0
    %2881 = vmatprep.subr.mxu0 0.0
    %2882 = vmatpush2.msra.mxu0 0.0
    %2883 = vmatprep.subr.mxu0 0.0
    %2884 = vmatpush2.msra.mxu0 0.0
    %2885 = vmatprep.subr.mxu0 0.0
    %2886 = vmatpush2.msra.mxu0 0.0
    %2887 = vmatprep.mubr.f32.mxu0 0.0
    %2888 = vmatmul.mubr.f32.gmra.mxu0 %v2818
    %v2889 = vpop.f32.mrf.mxu0
    %v2890 = vadd.f32 0.0, %v2889
    %v2891 = vpop.f32.mrf.mxu0
    %2892 = vmatprep.mubr.f32.mxu0 0.0
    %2893 = vmatmul.mubr.f32.gmra.mxu0 %v2821
    %v2894 = vpop.f32.mrf.mxu0
    %v2895 = vadd.f32 0.0, %v2894
    %v2896 = vpop.f32.mrf.mxu0
    %2897 = vdwg.mxu0
    %v2898 = vmul.f32 %v2890, 0.35355338
    %v2899 = vmul.f32 %v2895, 0.35355338
    %v2900 = vadd.f32 %v2898, %v152
    %v2901 = vadd.f32 %v2899, %v153
    %v2902 = vsel %vm537, %v2900, -inf
    %2903 = vmax.xlane.f32.xlu0 %v2902
    %v2904 = vpop.xlane.xlu0 %2903
    %v2905 = vsel %vm537, %v2901, -inf
    %2906 = vmax.xlane.f32.xlu0 %v2905
    %v2907 = vpop.xlane.xlu0 %2906
    %v2908 = vsub.f32 %v2900, %v2904
    %v2909 = vsub.f32 %v2901, %v2907
    %v2910 = vmul.f32 %v2908, 1.442695
    %v2911 = vpow.pop %v2910
    %v2912 = vmul.f32 %v2909, 1.442695
    %v2913 = vpow.pop %v2912
    %v2914 = vsel %vm537, %v2911, 0.0
    %2915 = vadd.xlane.f32.xlu0 %v2914
    %v2916 = vpop.xlane.xlu0 %2915
    %v2917 = vsel %vm537, %v2913, 0.0
    %2918 = vadd.xlane.f32.xlu0 %v2917
    %v2919 = vpop.xlane.xlu0 %2918
    %v2920 = vrcp.pop %v2916
    %v2921 = vrcp.pop %v2919
    %v2922 = vmul.f32 %v2911, %v2920
    %v2923 = vmul.f32 %v2913, %v2921
    %v2925 = vsel %vm537, %v2922, 0
    %v2928 = vsel %vm537, %v2923, 0
    %v2931 = vsel %vm537, %v2154, 0
    %2933 = vmatprep.subr.mxu0 0.0
    %2934 = vmatpush1.xpose.msra.mxu0 0.0
    %2935 = vmatprep.subr.mxu0 0.0
    %2936 = vmatpush1.xpose.msra.mxu0 0.0
    %2937 = vmatprep.subr.mxu0 0.0
    %2938 = vmatpush1.xpose.msra.mxu0 0.0
    %2939 = vmatprep.subr.mxu0 0.0
    %2940 = vmatpush1.xpose.msra.mxu0 0.0
    %2941 = vmatprep.subr.mxu0 0.0
    %2942 = vmatpush1.xpose.msra.mxu0 0.0
    %2943 = vmatprep.subr.mxu0 0.0
    %2944 = vmatpush1.xpose.msra.mxu0 0.0
    %2945 = vmatprep.subr.mxu0 0.0
    %2946 = vmatpush1.xpose.msra.mxu0 0.0
    %2947 = vmatprep.subr.mxu0 0.0
    %2948 = vmatpush1.xpose.msra.mxu0 0.0
    %2949 = vmatprep.subr.mxu0 0.0
    %2950 = vmatpush1.xpose.msra.mxu0 0.0
    %2951 = vmatprep.subr.mxu0 0.0
    %2952 = vmatpush1.xpose.msra.mxu0 0.0
    %2953 = vmatprep.subr.mxu0 0.0
    %2954 = vmatpush1.xpose.msra.mxu0 0.0
    %2955 = vmatprep.subr.mxu0 0.0
    %2956 = vmatpush1.xpose.msra.mxu0 0.0
    %2957 = vmatprep.subr.mxu0 0.0
    %2958 = vmatpush1.xpose.msra.mxu0 0.0
    %2959 = vmatprep.subr.mxu0 0.0
    %2960 = vmatpush1.xpose.msra.mxu0 0.0
    %2961 = vmatprep.subr.mxu0 0.0
    %2962 = vmatpush1.xpose.msra.mxu0 0.0
    %2963 = vmatprep.subr.mxu0 0.0
    %2964 = vmatpush1.xpose.msra.mxu0 %v2931
    %2965 = vmatprep.subr.mxu0 0.0
    %2966 = vmatpush2.xpose.msra.mxu0 0.0
    %2967 = vmatprep.subr.mxu0 0.0
    %2968 = vmatpush2.xpose.msra.mxu0 0.0
    %2969 = vmatprep.subr.mxu0 0.0
    %2970 = vmatpush2.xpose.msra.mxu0 0.0
    %2971 = vmatprep.subr.mxu0 0.0
    %2972 = vmatpush2.xpose.msra.mxu0 0.0
    %2973 = vmatprep.subr.mxu0 0.0
    %2974 = vmatpush2.xpose.msra.mxu0 0.0
    %2975 = vmatprep.subr.mxu0 0.0
    %2976 = vmatpush2.xpose.msra.mxu0 0.0
    %2977 = vmatprep.subr.mxu0 0.0
    %2978 = vmatpush2.xpose.msra.mxu0 0.0
    %2979 = vmatprep.subr.mxu0 0.0
    %2980 = vmatpush2.xpose.msra.mxu0 0.0
    %2981 = vmatprep.subr.mxu0 0.0
    %2982 = vmatpush2.xpose.msra.mxu0 0.0
    %2983 = vmatprep.subr.mxu0 0.0
    %2984 = vmatpush2.xpose.msra.mxu0 0.0
    %2985 = vmatprep.subr.mxu0 0.0
    %2986 = vmatpush2.xpose.msra.mxu0 0.0
    %2987 = vmatprep.subr.mxu0 0.0
    %2988 = vmatpush2.xpose.msra.mxu0 0.0
    %2989 = vmatprep.subr.mxu0 0.0
    %2990 = vmatpush2.xpose.msra.mxu0 0.0
    %2991 = vmatprep.subr.mxu0 0.0
    %2992 = vmatpush2.xpose.msra.mxu0 0.0
    %2993 = vmatprep.subr.mxu0 0.0
    %2994 = vmatpush2.xpose.msra.mxu0 0.0
    %2995 = vmatprep.subr.mxu0 0.0
    %2996 = vmatpush2.xpose.msra.mxu0 0.0
    %2997 = vmatprep.mubr.f32.mxu0 0.0
    %2998 = vmatmul.mubr.f32.gmra.mxu0 %v2925
    %v2999 = vpop.f32.mrf.mxu0
    %v3000 = vadd.f32 0.0, %v2999
    %v3001 = vpop.f32.mrf.mxu0
    %3002 = vmatprep.mubr.f32.mxu0 0.0
    %3003 = vmatmul.mubr.f32.gmra.mxu0 %v2928
    %v3004 = vpop.f32.mrf.mxu0
    %v3005 = vadd.f32 0.0, %v3004
    %v3006 = vpop.f32.mrf.mxu0
    %3007 = vdwg.mxu0
    %v3009 = vsel %vm451, %v3000, 0
    %v3012 = vsel %vm451, %v3005, 0
    %3014 = vmatprep.subr.mxu0 0.0
    %3015 = vmatpush1.msra.mxu0 0.0
    %3016 = vmatprep.subr.mxu0 0.0
    %3017 = vmatpush1.msra.mxu0 0.0
    %3018 = vmatprep.subr.mxu0 0.0
    %3019 = vmatpush1.msra.mxu0 0.0
    %3020 = vmatprep.subr.mxu0 0.0
    %3021 = vmatpush1.msra.mxu0 0.0
    %3022 = vmatprep.subr.mxu0 0.0
    %3023 = vmatpush1.msra.mxu0 0.0
    %3024 = vmatprep.subr.mxu0 0.0
    %3025 = vmatpush1.msra.mxu0 0.0
    %3026 = vmatprep.subr.mxu0 0.0
    %3027 = vmatpush1.msra.mxu0 0.0
    %3028 = vmatprep.subr.mxu0 0.0
    %3029 = vmatpush1.msra.mxu0 0.0
    %3030 = vmatprep.subr.mxu0 0.0
    %3031 = vmatpush1.msra.mxu0 0.0
    %3032 = vmatprep.subr.mxu0 0.0
    %3033 = vmatpush1.msra.mxu0 0.0
    %3034 = vmatprep.subr.mxu0 0.0
    %3035 = vmatpush1.msra.mxu0 0.0
    %3036 = vmatprep.subr.mxu0 0.0
    %3037 = vmatpush1.msra.mxu0 0.0
    %3038 = vmatprep.subr.mxu0 0.0
    %3039 = vmatpush1.msra.mxu0 0.0
    %3040 = vmatprep.subr.mxu0 0.0
    %3041 = vmatpush1.msra.mxu0 0.0
    %3042 = vmatprep.subr.mxu0 0.0
    %3043 = vmatpush1.msra.mxu0 0.0
    %3044 = vmatprep.subr.mxu0 0.0
    %3045 = vmatpush1.msra.mxu0 %v2165
    %3046 = vmatprep.subr.mxu0 0.0
    %3047 = vmatpush2.msra.mxu0 0.0
    %3048 = vmatprep.subr.mxu0 0.0
    %3049 = vmatpush2.msra.mxu0 0.0
    %3050 = vmatprep.subr.mxu0 0.0
    %3051 = vmatpush2.msra.mxu0 0.0
    %3052 = vmatprep.subr.mxu0 0.0
    %3053 = vmatpush2.msra.mxu0 0.0
    %3054 = vmatprep.subr.mxu0 0.0
    %3055 = vmatpush2.msra.mxu0 0.0
    %3056 = vmatprep.subr.mxu0 0.0
    %3057 = vmatpush2.msra.mxu0 0.0
    %3058 = vmatprep.subr.mxu0 0.0
    %3059 = vmatpush2.msra.mxu0 0.0
    %3060 = vmatprep.subr.mxu0 0.0
    %3061 = vmatpush2.msra.mxu0 0.0
    %3062 = vmatprep.subr.mxu0 0.0
    %3063 = vmatpush2.msra.mxu0 0.0
    %3064 = vmatprep.subr.mxu0 0.0
    %3065 = vmatpush2.msra.mxu0 0.0
    %3066 = vmatprep.subr.mxu0 0.0
    %3067 = vmatpush2.msra.mxu0 0.0
    %3068 = vmatprep.subr.mxu0 0.0
    %3069 = vmatpush2.msra.mxu0 0.0
    %3070 = vmatprep.subr.mxu0 0.0
    %3071 = vmatpush2.msra.mxu0 0.0
    %3072 = vmatprep.subr.mxu0 0.0
    %3073 = vmatpush2.msra.mxu0 0.0
    %3074 = vmatprep.subr.mxu0 0.0
    %3075 = vmatpush2.msra.mxu0 0.0
    %3076 = vmatprep.subr.mxu0 0.0
    %3077 = vmatpush2.msra.mxu0 0.0
    %3078 = vmatprep.mubr.f32.mxu0 0.0
    %3079 = vmatmul.mubr.f32.gmra.mxu0 %v3009
    %v3080 = vpop.f32.mrf.mxu0
    %v3081 = vadd.f32 0.0, %v3080
    %v3082 = vpop.f32.mrf.mxu0
    %3083 = vmatprep.mubr.f32.mxu0 0.0
    %3084 = vmatmul.mubr.f32.gmra.mxu0 %v3012
    %v3085 = vpop.f32.mrf.mxu0
    %v3086 = vadd.f32 0.0, %v3085
    %v3087 = vpop.f32.mrf.mxu0
    %3088 = vdwg.mxu0
    %v3089 = vadd.f32 %v2777, %v3081
    %v3090 = vadd.f32 %v2782, %v3086
    %3091 = vxpose.xlu0.b32.start [1/16] %v2119, 128
    %3092 = vxpose.xlu0.b32.cont [2/16] 0.0, 128
    %3093 = vxpose.xlu0.b32.cont [3/16] 0.0, 128
    %3094 = vxpose.xlu0.b32.cont [4/16] 0.0, 128
    %3095 = vxpose.xlu0.b32.cont [5/16] 0.0, 128
    %3096 = vxpose.xlu0.b32.cont [6/16] 0.0, 128
    %3097 = vxpose.xlu0.b32.cont [7/16] 0.0, 128
    %3098 = vxpose.xlu0.b32.cont [8/16] 0.0, 128
    %3099 = vxpose.xlu0.b32.cont [9/16] 0.0, 128
    %3100 = vxpose.xlu0.b32.cont [10/16] 0.0, 128
    %3101 = vxpose.xlu0.b32.cont [11/16] 0.0, 128
    %3102 = vxpose.xlu0.b32.cont [12/16] 0.0, 128
    %3103 = vxpose.xlu0.b32.cont [13/16] 0.0, 128
    %3104 = vxpose.xlu0.b32.cont [14/16] 0.0, 128
    %3105 = vxpose.xlu0.b32.cont [15/16] 0.0, 128
    %3106 = vxpose.xlu0.b32.end [16/16] 0.0, 128
    %v3107 = vpop.trf.xlu0
    %v3108 = vpop.trf.xlu0
    %v3109 = vpop.trf.xlu0
    %v3110 = vpop.trf.xlu0
    %v3111 = vpop.trf.xlu0
    %v3112 = vpop.trf.xlu0
    %v3113 = vpop.trf.xlu0
    %v3114 = vpop.trf.xlu0
    %v3115 = vpop.trf.xlu0
    %v3116 = vpop.trf.xlu0
    %v3117 = vpop.trf.xlu0
    %v3118 = vpop.trf.xlu0
    %v3119 = vpop.trf.xlu0
    %v3120 = vpop.trf.xlu0
    %v3121 = vpop.trf.xlu0
    %v3122 = vpop.trf.xlu0
    %v3124 = vsel %vm451, %v3107, 0
    %v3127 = vsel %vm451, %v3108, 0
    %3129 = vmatprep.subr.mxu0 0.0
    %3130 = vmatpush1.msra.mxu0 0.0
    %3131 = vmatprep.subr.mxu0 0.0
    %3132 = vmatpush1.msra.mxu0 0.0
    %3133 = vmatprep.subr.mxu0 0.0
    %3134 = vmatpush1.msra.mxu0 0.0
    %3135 = vmatprep.subr.mxu0 0.0
    %3136 = vmatpush1.msra.mxu0 0.0
    %3137 = vmatprep.subr.mxu0 0.0
    %3138 = vmatpush1.msra.mxu0 0.0
    %3139 = vmatprep.subr.mxu0 0.0
    %3140 = vmatpush1.msra.mxu0 0.0
    %3141 = vmatprep.subr.mxu0 0.0
    %3142 = vmatpush1.msra.mxu0 0.0
    %3143 = vmatprep.subr.mxu0 0.0
    %3144 = vmatpush1.msra.mxu0 0.0
    %3145 = vmatprep.subr.mxu0 0.0
    %3146 = vmatpush1.msra.mxu0 0.0
    %3147 = vmatprep.subr.mxu0 0.0
    %3148 = vmatpush1.msra.mxu0 0.0
    %3149 = vmatprep.subr.mxu0 0.0
    %3150 = vmatpush1.msra.mxu0 0.0
    %3151 = vmatprep.subr.mxu0 0.0
    %3152 = vmatpush1.msra.mxu0 0.0
    %3153 = vmatprep.subr.mxu0 0.0
    %3154 = vmatpush1.msra.mxu0 0.0
    %3155 = vmatprep.subr.mxu0 0.0
    %3156 = vmatpush1.msra.mxu0 0.0
    %3157 = vmatprep.subr.mxu0 0.0
    %3158 = vmatpush1.msra.mxu0 0.0
    %3159 = vmatprep.subr.mxu0 0.0
    %3160 = vmatpush1.msra.mxu0 %v2139
    %3161 = vmatprep.subr.mxu0 0.0
    %3162 = vmatpush2.msra.mxu0 0.0
    %3163 = vmatprep.subr.mxu0 0.0
    %3164 = vmatpush2.msra.mxu0 0.0
    %3165 = vmatprep.subr.mxu0 0.0
    %3166 = vmatpush2.msra.mxu0 0.0
    %3167 = vmatprep.subr.mxu0 0.0
    %3168 = vmatpush2.msra.mxu0 0.0
    %3169 = vmatprep.subr.mxu0 0.0
    %3170 = vmatpush2.msra.mxu0 0.0
    %3171 = vmatprep.subr.mxu0 0.0
    %3172 = vmatpush2.msra.mxu0 0.0
    %3173 = vmatprep.subr.mxu0 0.0
    %3174 = vmatpush2.msra.mxu0 0.0
    %3175 = vmatprep.subr.mxu0 0.0
    %3176 = vmatpush2.msra.mxu0 0.0
    %3177 = vmatprep.subr.mxu0 0.0
    %3178 = vmatpush2.msra.mxu0 0.0
    %3179 = vmatprep.subr.mxu0 0.0
    %3180 = vmatpush2.msra.mxu0 0.0
    %3181 = vmatprep.subr.mxu0 0.0
    %3182 = vmatpush2.msra.mxu0 0.0
    %3183 = vmatprep.subr.mxu0 0.0
    %3184 = vmatpush2.msra.mxu0 0.0
    %3185 = vmatprep.subr.mxu0 0.0
    %3186 = vmatpush2.msra.mxu0 0.0
    %3187 = vmatprep.subr.mxu0 0.0
    %3188 = vmatpush2.msra.mxu0 0.0
    %3189 = vmatprep.subr.mxu0 0.0
    %3190 = vmatpush2.msra.mxu0 0.0
    %3191 = vmatprep.subr.mxu0 0.0
    %3192 = vmatpush2.msra.mxu0 0.0
    %3193 = vmatprep.mubr.f32.mxu0 0.0
    %3194 = vmatmul.mubr.f32.gmra.mxu0 %v3124
    %v3195 = vpop.f32.mrf.mxu0
    %v3196 = vadd.f32 0.0, %v3195
    %v3197 = vpop.f32.mrf.mxu0
    %3198 = vmatprep.mubr.f32.mxu0 0.0
    %3199 = vmatmul.mubr.f32.gmra.mxu0 %v3127
    %v3200 = vpop.f32.mrf.mxu0
    %v3201 = vadd.f32 0.0, %v3200
    %v3202 = vpop.f32.mrf.mxu0
    %3203 = vdwg.mxu0
    %v3204 = vmul.f32 %v3196, 0.35355338
    %v3205 = vmul.f32 %v3201, 0.35355338
    %v3206 = vadd.f32 %v3204, %v152
    %v3207 = vadd.f32 %v3205, %v153
    %v3208 = vsel %vm537, %v3206, -inf
    %3209 = vmax.xlane.f32.xlu0 %v3208
    %v3210 = vpop.xlane.xlu0 %3209
    %v3211 = vsel %vm537, %v3207, -inf
    %3212 = vmax.xlane.f32.xlu0 %v3211
    %v3213 = vpop.xlane.xlu0 %3212
    %v3214 = vsub.f32 %v3206, %v3210
    %v3215 = vsub.f32 %v3207, %v3213
    %v3216 = vmul.f32 %v3214, 1.442695
    %v3217 = vpow.pop %v3216
    %v3218 = vmul.f32 %v3215, 1.442695
    %v3219 = vpow.pop %v3218
    %v3220 = vsel %vm537, %v3217, 0.0
    %3221 = vadd.xlane.f32.xlu0 %v3220
    %v3222 = vpop.xlane.xlu0 %3221
    %v3223 = vsel %vm537, %v3219, 0.0
    %3224 = vadd.xlane.f32.xlu0 %v3223
    %v3225 = vpop.xlane.xlu0 %3224
    %v3226 = vrcp.pop %v3222
    %v3227 = vrcp.pop %v3225
    %v3228 = vmul.f32 %v3217, %v3226
    %v3229 = vmul.f32 %v3219, %v3227
    %v3231 = vsel %vm537, %v3228, 0
    %v3234 = vsel %vm537, %v3229, 0
    %v3237 = vsel %vm537, %v2159, 0
    %3239 = vmatprep.subr.mxu0 0.0
    %3240 = vmatpush1.xpose.msra.mxu0 0.0
    %3241 = vmatprep.subr.mxu0 0.0
    %3242 = vmatpush1.xpose.msra.mxu0 0.0
    %3243 = vmatprep.subr.mxu0 0.0
    %3244 = vmatpush1.xpose.msra.mxu0 0.0
    %3245 = vmatprep.subr.mxu0 0.0
    %3246 = vmatpush1.xpose.msra.mxu0 0.0
    %3247 = vmatprep.subr.mxu0 0.0
    %3248 = vmatpush1.xpose.msra.mxu0 0.0
    %3249 = vmatprep.subr.mxu0 0.0
    %3250 = vmatpush1.xpose.msra.mxu0 0.0
    %3251 = vmatprep.subr.mxu0 0.0
    %3252 = vmatpush1.xpose.msra.mxu0 0.0
    %3253 = vmatprep.subr.mxu0 0.0
    %3254 = vmatpush1.xpose.msra.mxu0 0.0
    %3255 = vmatprep.subr.mxu0 0.0
    %3256 = vmatpush1.xpose.msra.mxu0 0.0
    %3257 = vmatprep.subr.mxu0 0.0
    %3258 = vmatpush1.xpose.msra.mxu0 0.0
    %3259 = vmatprep.subr.mxu0 0.0
    %3260 = vmatpush1.xpose.msra.mxu0 0.0
    %3261 = vmatprep.subr.mxu0 0.0
    %3262 = vmatpush1.xpose.msra.mxu0 0.0
    %3263 = vmatprep.subr.mxu0 0.0
    %3264 = vmatpush1.xpose.msra.mxu0 0.0
    %3265 = vmatprep.subr.mxu0 0.0
    %3266 = vmatpush1.xpose.msra.mxu0 0.0
    %3267 = vmatprep.subr.mxu0 0.0
    %3268 = vmatpush1.xpose.msra.mxu0 0.0
    %3269 = vmatprep.subr.mxu0 0.0
    %3270 = vmatpush1.xpose.msra.mxu0 %v3237
    %3271 = vmatprep.subr.mxu0 0.0
    %3272 = vmatpush2.xpose.msra.mxu0 0.0
    %3273 = vmatprep.subr.mxu0 0.0
    %3274 = vmatpush2.xpose.msra.mxu0 0.0
    %3275 = vmatprep.subr.mxu0 0.0
    %3276 = vmatpush2.xpose.msra.mxu0 0.0
    %3277 = vmatprep.subr.mxu0 0.0
    %3278 = vmatpush2.xpose.msra.mxu0 0.0
    %3279 = vmatprep.subr.mxu0 0.0
    %3280 = vmatpush2.xpose.msra.mxu0 0.0
    %3281 = vmatprep.subr.mxu0 0.0
    %3282 = vmatpush2.xpose.msra.mxu0 0.0
    %3283 = vmatprep.subr.mxu0 0.0
    %3284 = vmatpush2.xpose.msra.mxu0 0.0
    %3285 = vmatprep.subr.mxu0 0.0
    %3286 = vmatpush2.xpose.msra.mxu0 0.0
    %3287 = vmatprep.subr.mxu0 0.0
    %3288 = vmatpush2.xpose.msra.mxu0 0.0
    %3289 = vmatprep.subr.mxu0 0.0
    %3290 = vmatpush2.xpose.msra.mxu0 0.0
    %3291 = vmatprep.subr.mxu0 0.0
    %3292 = vmatpush2.xpose.msra.mxu0 0.0
    %3293 = vmatprep.subr.mxu0 0.0
    %3294 = vmatpush2.xpose.msra.mxu0 0.0
    %3295 = vmatprep.subr.mxu0 0.0
    %3296 = vmatpush2.xpose.msra.mxu0 0.0
    %3297 = vmatprep.subr.mxu0 0.0
    %3298 = vmatpush2.xpose.msra.mxu0 0.0
    %3299 = vmatprep.subr.mxu0 0.0
    %3300 = vmatpush2.xpose.msra.mxu0 0.0
    %3301 = vmatprep.subr.mxu0 0.0
    %3302 = vmatpush2.xpose.msra.mxu0 0.0
    %3303 = vmatprep.mubr.f32.mxu0 0.0
    %3304 = vmatmul.mubr.f32.gmra.mxu0 %v3231
    %v3305 = vpop.f32.mrf.mxu0
    %v3306 = vadd.f32 0.0, %v3305
    %v3307 = vpop.f32.mrf.mxu0
    %3308 = vmatprep.mubr.f32.mxu0 0.0
    %3309 = vmatmul.mubr.f32.gmra.mxu0 %v3234
    %v3310 = vpop.f32.mrf.mxu0
    %v3311 = vadd.f32 0.0, %v3310
    %v3312 = vpop.f32.mrf.mxu0
    %3313 = vdwg.mxu0
    %v3315 = vsel %vm451, %v3306, 0
    %v3318 = vsel %vm451, %v3311, 0
    %3320 = vmatprep.subr.mxu0 0.0
    %3321 = vmatpush1.msra.mxu0 0.0
    %3322 = vmatprep.subr.mxu0 0.0
    %3323 = vmatpush1.msra.mxu0 0.0
    %3324 = vmatprep.subr.mxu0 0.0
    %3325 = vmatpush1.msra.mxu0 0.0
    %3326 = vmatprep.subr.mxu0 0.0
    %3327 = vmatpush1.msra.mxu0 0.0
    %3328 = vmatprep.subr.mxu0 0.0
    %3329 = vmatpush1.msra.mxu0 0.0
    %3330 = vmatprep.subr.mxu0 0.0
    %3331 = vmatpush1.msra.mxu0 0.0
    %3332 = vmatprep.subr.mxu0 0.0
    %3333 = vmatpush1.msra.mxu0 0.0
    %3334 = vmatprep.subr.mxu0 0.0
    %3335 = vmatpush1.msra.mxu0 0.0
    %3336 = vmatprep.subr.mxu0 0.0
    %3337 = vmatpush1.msra.mxu0 0.0
    %3338 = vmatprep.subr.mxu0 0.0
    %3339 = vmatpush1.msra.mxu0 0.0
    %3340 = vmatprep.subr.mxu0 0.0
    %3341 = vmatpush1.msra.mxu0 0.0
    %3342 = vmatprep.subr.mxu0 0.0
    %3343 = vmatpush1.msra.mxu0 0.0
    %3344 = vmatprep.subr.mxu0 0.0
    %3345 = vmatpush1.msra.mxu0 0.0
    %3346 = vmatprep.subr.mxu0 0.0
    %3347 = vmatpush1.msra.mxu0 0.0
    %3348 = vmatprep.subr.mxu0 0.0
    %3349 = vmatpush1.msra.mxu0 0.0
    %3350 = vmatprep.subr.mxu0 0.0
    %3351 = vmatpush1.msra.mxu0 %v2166
    %3352 = vmatprep.subr.mxu0 0.0
    %3353 = vmatpush2.msra.mxu0 0.0
    %3354 = vmatprep.subr.mxu0 0.0
    %3355 = vmatpush2.msra.mxu0 0.0
    %3356 = vmatprep.subr.mxu0 0.0
    %3357 = vmatpush2.msra.mxu0 0.0
    %3358 = vmatprep.subr.mxu0 0.0
    %3359 = vmatpush2.msra.mxu0 0.0
    %3360 = vmatprep.subr.mxu0 0.0
    %3361 = vmatpush2.msra.mxu0 0.0
    %3362 = vmatprep.subr.mxu0 0.0
    %3363 = vmatpush2.msra.mxu0 0.0
    %3364 = vmatprep.subr.mxu0 0.0
    %3365 = vmatpush2.msra.mxu0 0.0
    %3366 = vmatprep.subr.mxu0 0.0
    %3367 = vmatpush2.msra.mxu0 0.0
    %3368 = vmatprep.subr.mxu0 0.0
    %3369 = vmatpush2.msra.mxu0 0.0
    %3370 = vmatprep.subr.mxu0 0.0
    %3371 = vmatpush2.msra.mxu0 0.0
    %3372 = vmatprep.subr.mxu0 0.0
    %3373 = vmatpush2.msra.mxu0 0.0
    %3374 = vmatprep.subr.mxu0 0.0
    %3375 = vmatpush2.msra.mxu0 0.0
    %3376 = vmatprep.subr.mxu0 0.0
    %3377 = vmatpush2.msra.mxu0 0.0
    %3378 = vmatprep.subr.mxu0 0.0
    %3379 = vmatpush2.msra.mxu0 0.0
    %3380 = vmatprep.subr.mxu0 0.0
    %3381 = vmatpush2.msra.mxu0 0.0
    %3382 = vmatprep.subr.mxu0 0.0
    %3383 = vmatpush2.msra.mxu0 0.0
    %3384 = vmatprep.mubr.f32.mxu0 0.0
    %3385 = vmatmul.mubr.f32.gmra.mxu0 %v3315
    %v3386 = vpop.f32.mrf.mxu0
    %v3387 = vadd.f32 0.0, %v3386
    %v3388 = vpop.f32.mrf.mxu0
    %3389 = vmatprep.mubr.f32.mxu0 0.0
    %3390 = vmatmul.mubr.f32.gmra.mxu0 %v3318
    %v3391 = vpop.f32.mrf.mxu0
    %v3392 = vadd.f32 0.0, %v3391
    %v3393 = vpop.f32.mrf.mxu0
    %3394 = vdwg.mxu0
    %v3395 = vadd.f32 %v3089, %v3387
    %v3396 = vadd.f32 %v3090, %v3392
    %v3397 = vlaneseq
    %v3398 = vshrl.u32 %v3397, 7
    %v3399 = vsub.s32 1, %v3398
    %v3400 = vrot.slane %v2176, %v3399
    %v3401 = vadd.f32 %v3395, %v3400
    %v3402 = vadd.f32 %v3396, %v3400
    %v3403 = vadd.f32 %v3401, %v1907
    %v3404 = vadd.f32 %v3402, %v1908
    %v3405 = vsel %vm238, %v3403, 0.0
    %3406 = vadd.xlane.f32.xlu0 %v3405
    %v3407 = vpop.xlane.xlu0 %3406
    %v3408 = vsel %vm238, %v3404, 0.0
    %3409 = vadd.xlane.f32.xlu0 %v3408
    %v3410 = vpop.xlane.xlu0 %3409
    %v3411 = vmul.f32 %v3407, %v1655
    %v3412 = vmul.f32 %v3410, %v1655
    %v3413 = vsub.f32 %v3403, %v3411
    %v3414 = vsub.f32 %v3404, %v3412
    %v3415 = vmul.f32 %v3413, %v3413
    %v3416 = vmul.f32 %v3414, %v3414
    %v3417 = vsel %vm238, %v3415, 0.0
    %3418 = vadd.xlane.f32.xlu0 %v3417
    %v3419 = vpop.xlane.xlu0 %3418
    %v3420 = vsel %vm238, %v3416, 0.0
    %3421 = vadd.xlane.f32.xlu0 %v3420
    %v3422 = vpop.xlane.xlu0 %3421
    %v3423 = vmul.f32 %v3419, %v1655
    %v3424 = vmul.f32 %v3422, %v1655
    %v3425 = vadd.f32 %v3423, 1e-05
    %v3426 = vadd.f32 %v3424, 1e-05
    %v3427 = vrsqrt.pop %v3425
    %v3428 = vrsqrt.pop %v3426
    %v3429 = vmul.f32 %v3413, %v3427
    %v3430 = vmul.f32 %v3414, %v3428
    %v3431 = vlaneseq
    %v3432 = vshrl.u32 %v3431, 7
    %v3433 = vsub.s32 2, %v3432
    %v3434 = vrot.slane %v2176, %v3433
    %v3435 = vmul.f32 %v3429, %v3434
    %v3436 = vmul.f32 %v3430, %v3434
    %v3437 = vlaneseq
    %v3438 = vshrl.u32 %v3437, 7
    %v3439 = vsub.s32 3, %v3438
    %v3440 = vrot.slane %v2176, %v3439
    %v3441 = vadd.f32 %v3435, %v3440
    %v3442 = vadd.f32 %v3436, %v3440
    %v3443 = vmul.f32 %v3441, %v143
    %v3444 = vmul.f32 %v3442, %v148
    %s3445 = scalar_lea.vmem %s5, 32
    %v3446 = vld [vmem:[%s3445] sm:$0xff]
    %v3447 = vld [vmem:[%s3445 + $0x8] sm:$0xff]
    %v3448 = vld [vmem:[%s3445 + $0x10] sm:$0xff]
    %v3449 = vld [vmem:[%s3445 + $0x18] sm:$0xff]
    %v3450 = vlaneseq
    %v3451 = vshrl.u32 %v3450, 7
    %v3452 = vsub.s32 0, %v3451
    %v3453 = vrot.slane %v2176, %v3452
    %v3455 = vsel %vm238, %v3443, 0
    %v3458 = vsel %vm238, %v3444, 0
    %3460 = vmatprep.subr.mxu0 0.0
    %3461 = vmatpush1.msra.mxu0 0.0
    %3462 = vmatprep.subr.mxu0 0.0
    %3463 = vmatpush1.msra.mxu0 0.0
    %3464 = vmatprep.subr.mxu0 0.0
    %3465 = vmatpush1.msra.mxu0 0.0
    %3466 = vmatprep.subr.mxu0 0.0
    %3467 = vmatpush1.msra.mxu0 0.0
    %3468 = vmatprep.subr.mxu0 0.0
    %3469 = vmatpush1.msra.mxu0 0.0
    %3470 = vmatprep.subr.mxu0 0.0
    %3471 = vmatpush1.msra.mxu0 0.0
    %3472 = vmatprep.subr.mxu0 0.0
    %3473 = vmatpush1.msra.mxu0 0.0
    %3474 = vmatprep.subr.mxu0 0.0
    %3475 = vmatpush1.msra.mxu0 0.0
    %3476 = vmatprep.subr.mxu0 0.0
    %3477 = vmatpush1.msra.mxu0 0.0
    %3478 = vmatprep.subr.mxu0 0.0
    %3479 = vmatpush1.msra.mxu0 0.0
    %3480 = vmatprep.subr.mxu0 0.0
    %3481 = vmatpush1.msra.mxu0 0.0
    %3482 = vmatprep.subr.mxu0 0.0
    %3483 = vmatpush1.msra.mxu0 0.0
    %3484 = vmatprep.subr.mxu0 0.0
    %3485 = vmatpush1.msra.mxu0 %v3449
    %3486 = vmatprep.subr.mxu0 0.0
    %3487 = vmatpush1.msra.mxu0 %v3448
    %3488 = vmatprep.subr.mxu0 0.0
    %3489 = vmatpush1.msra.mxu0 %v3447
    %3490 = vmatprep.subr.mxu0 0.0
    %3491 = vmatpush1.msra.mxu0 %v3446
    %3492 = vmatprep.subr.mxu0 0.0
    %3493 = vmatpush2.msra.mxu0 0.0
    %3494 = vmatprep.subr.mxu0 0.0
    %3495 = vmatpush2.msra.mxu0 0.0
    %3496 = vmatprep.subr.mxu0 0.0
    %3497 = vmatpush2.msra.mxu0 0.0
    %3498 = vmatprep.subr.mxu0 0.0
    %3499 = vmatpush2.msra.mxu0 0.0
    %3500 = vmatprep.subr.mxu0 0.0
    %3501 = vmatpush2.msra.mxu0 0.0
    %3502 = vmatprep.subr.mxu0 0.0
    %3503 = vmatpush2.msra.mxu0 0.0
    %3504 = vmatprep.subr.mxu0 0.0
    %3505 = vmatpush2.msra.mxu0 0.0
    %3506 = vmatprep.subr.mxu0 0.0
    %3507 = vmatpush2.msra.mxu0 0.0
    %3508 = vmatprep.subr.mxu0 0.0
    %3509 = vmatpush2.msra.mxu0 0.0
    %3510 = vmatprep.subr.mxu0 0.0
    %3511 = vmatpush2.msra.mxu0 0.0
    %3512 = vmatprep.subr.mxu0 0.0
    %3513 = vmatpush2.msra.mxu0 0.0
    %3514 = vmatprep.subr.mxu0 0.0
    %3515 = vmatpush2.msra.mxu0 0.0
    %3516 = vmatprep.subr.mxu0 0.0
    %3517 = vmatpush2.msra.mxu0 0.0
    %3518 = vmatprep.subr.mxu0 0.0
    %3519 = vmatpush2.msra.mxu0 0.0
    %3520 = vmatprep.subr.mxu0 0.0
    %3521 = vmatpush2.msra.mxu0 0.0
    %3522 = vmatprep.subr.mxu0 0.0
    %3523 = vmatpush2.msra.mxu0 0.0
    %3524 = vmatprep.mubr.f32.mxu0 0.0
    %3525 = vmatmul.mubr.f32.gmra.mxu0 %v3455
    %v3526 = vpop.f32.mrf.mxu0
    %v3527 = vadd.f32 %v3453, %v3526
    %v3528 = vpop.f32.mrf.mxu0
    %3529 = vmatprep.mubr.f32.mxu0 0.0
    %3530 = vmatmul.mubr.f32.gmra.mxu0 %v3458
    %v3531 = vpop.f32.mrf.mxu0
    %v3532 = vadd.f32 %v3453, %v3531
    %v3533 = vpop.f32.mrf.mxu0
    %3534 = vdwg.mxu0
    %v3535 = vmax.f32 %v3527, 0.0
    %v3536 = vmax.f32 %v3532, 0.0
    %v3537 = vlaneseq
    %v3538 = vshrl.u32 %v3537, 7
    %v3539 = vsub.s32 4, %v3538
    %v3540 = vrot.slane %v2176, %v3539
    %v3542 = vsel %vm1785, %v3535, 0
    %v3545 = vsel %vm1785, %v3536, 0
    %3547 = vmatprep.subr.mxu0 0.0
    %3548 = vmatpush1.msra.mxu0 0.0
    %3549 = vmatprep.subr.mxu0 0.0
    %3550 = vmatpush1.msra.mxu0 0.0
    %3551 = vmatprep.subr.mxu0 0.0
    %3552 = vmatpush1.msra.mxu0 0.0
    %3553 = vmatprep.subr.mxu0 0.0
    %3554 = vmatpush1.msra.mxu0 0.0
    %3555 = vmatprep.subr.mxu0 0.0
    %3556 = vmatpush1.msra.mxu0 0.0
    %3557 = vmatprep.subr.mxu0 0.0
    %3558 = vmatpush1.msra.mxu0 0.0
    %3559 = vmatprep.subr.mxu0 0.0
    %3560 = vmatpush1.msra.mxu0 0.0
    %3561 = vmatprep.subr.mxu0 0.0
    %3562 = vmatpush1.msra.mxu0 0.0
    %3563 = vmatprep.subr.mxu0 0.0
    %3564 = vmatpush1.msra.mxu0 %v2174
    %3565 = vmatprep.subr.mxu0 0.0
    %3566 = vmatpush1.msra.mxu0 %v2173
    %3567 = vmatprep.subr.mxu0 0.0
    %3568 = vmatpush1.msra.mxu0 %v2172
    %3569 = vmatprep.subr.mxu0 0.0
    %3570 = vmatpush1.msra.mxu0 %v2171
    %3571 = vmatprep.subr.mxu0 0.0
    %3572 = vmatpush1.msra.mxu0 %v2170
    %3573 = vmatprep.subr.mxu0 0.0
    %3574 = vmatpush1.msra.mxu0 %v2169
    %3575 = vmatprep.subr.mxu0 0.0
    %3576 = vmatpush1.msra.mxu0 %v2168
    %3577 = vmatprep.subr.mxu0 0.0
    %3578 = vmatpush1.msra.mxu0 %v2167
    %3579 = vmatprep.subr.mxu0 0.0
    %3580 = vmatpush2.msra.mxu0 0.0
    %3581 = vmatprep.subr.mxu0 0.0
    %3582 = vmatpush2.msra.mxu0 0.0
    %3583 = vmatprep.subr.mxu0 0.0
    %3584 = vmatpush2.msra.mxu0 0.0
    %3585 = vmatprep.subr.mxu0 0.0
    %3586 = vmatpush2.msra.mxu0 0.0
    %3587 = vmatprep.subr.mxu0 0.0
    %3588 = vmatpush2.msra.mxu0 0.0
    %3589 = vmatprep.subr.mxu0 0.0
    %3590 = vmatpush2.msra.mxu0 0.0
    %3591 = vmatprep.subr.mxu0 0.0
    %3592 = vmatpush2.msra.mxu0 0.0
    %3593 = vmatprep.subr.mxu0 0.0
    %3594 = vmatpush2.msra.mxu0 0.0
    %3595 = vmatprep.subr.mxu0 0.0
    %3596 = vmatpush2.msra.mxu0 0.0
    %3597 = vmatprep.subr.mxu0 0.0
    %3598 = vmatpush2.msra.mxu0 0.0
    %3599 = vmatprep.subr.mxu0 0.0
    %3600 = vmatpush2.msra.mxu0 0.0
    %3601 = vmatprep.subr.mxu0 0.0
    %3602 = vmatpush2.msra.mxu0 0.0
    %3603 = vmatprep.subr.mxu0 0.0
    %3604 = vmatpush2.msra.mxu0 0.0
    %3605 = vmatprep.subr.mxu0 0.0
    %3606 = vmatpush2.msra.mxu0 0.0
    %3607 = vmatprep.subr.mxu0 0.0
    %3608 = vmatpush2.msra.mxu0 0.0
    %3609 = vmatprep.subr.mxu0 0.0
    %3610 = vmatpush2.msra.mxu0 0.0
    %3611 = vmatprep.mubr.f32.mxu0 0.0
    %3612 = vmatmul.mubr.f32.gmra.mxu0 %v3542
    %v3613 = vpop.f32.mrf.mxu0
    %v3614 = vadd.f32 %v3540, %v3613
    %v3615 = vpop.f32.mrf.mxu0
    %3616 = vmatprep.mubr.f32.mxu0 0.0
    %3617 = vmatmul.mubr.f32.gmra.mxu0 %v3545
    %v3618 = vpop.f32.mrf.mxu0
    %v3619 = vadd.f32 %v3540, %v3618
    %v3620 = vpop.f32.mrf.mxu0
    %3621 = vdwg.mxu0
    %v3622 = vadd.f32 %v3614, %v3443
    %v3623 = vadd.f32 %v3619, %v3444
    %v3624 = vsel %vm238, %v3622, 0.0
    %3625 = vadd.xlane.f32.xlu0 %v3624
    %v3626 = vpop.xlane.xlu0 %3625
    %v3627 = vsel %vm238, %v3623, 0.0
    %3628 = vadd.xlane.f32.xlu0 %v3627
    %v3629 = vpop.xlane.xlu0 %3628
    %v3630 = vmul.f32 %v3626, %v1655
    %v3631 = vmul.f32 %v3629, %v1655
    %v3632 = vsub.f32 %v3622, %v3630
    %v3633 = vsub.f32 %v3623, %v3631
    %v3634 = vmul.f32 %v3632, %v3632
    %v3635 = vmul.f32 %v3633, %v3633
    %v3636 = vsel %vm238, %v3634, 0.0
    %3637 = vadd.xlane.f32.xlu0 %v3636
    %v3638 = vpop.xlane.xlu0 %3637
    %v3639 = vsel %vm238, %v3635, 0.0
    %3640 = vadd.xlane.f32.xlu0 %v3639
    %v3641 = vpop.xlane.xlu0 %3640
    %v3642 = vmul.f32 %v3638, %v1655
    %v3643 = vmul.f32 %v3641, %v1655
    %v3644 = vadd.f32 %v3642, 1e-05
    %v3645 = vadd.f32 %v3643, 1e-05
    %v3646 = vrsqrt.pop %v3644
    %v3647 = vrsqrt.pop %v3645
    %v3648 = vmul.f32 %v3632, %v3646
    %v3649 = vmul.f32 %v3633, %v3647
    %v3650 = vlaneseq
    %v3651 = vshrl.u32 %v3650, 7
    %v3652 = vsub.s32 5, %v3651
    %v3653 = vrot.slane %v2176, %v3652
    %v3654 = vmul.f32 %v3648, %v3653
    %v3655 = vmul.f32 %v3649, %v3653
    %v3656 = vlaneseq
    %v3657 = vshrl.u32 %v3656, 7
    %v3658 = vsub.s32 6, %v3657
    %v3659 = vrot.slane %v2176, %v3658
    %v3660 = vadd.f32 %v3654, %v3659
    %v3661 = vadd.f32 %v3655, %v3659
    %v3662 = vmul.f32 %v3660, %v143
    %v3663 = vmul.f32 %v3661, %v148
    %3664 = vst.msk [vmem:[#allocation2] sm:$0xff] %vm238, %v3662
    %3665 = vst.msk [vmem:[#allocation2 + $0x8] sm:$0xff] %vm238, %v3663
    // Predicated region
    $region34: #{tpu_custom_call.1} parent=1 // pred_check
      _
    $region35: #{tpu_custom_call.1} parent=1 // pred_check_branch
      %3667 = sbr.rel (0) target = $region37
    $region36: #{tpu_custom_call.1} parent=1 // pred_region
      %s3669 = ssub.s32 256, 256
      %3670 = vsyncadd [#allocation3], %s3669
      %s3671 = sshll.u32 [#allocation2], 4
      %s3672 = int_to_ptr.vmem [resolvable:$true] %s3671
      %3677 = dma.vmem_to_hbm [thread:$0]  %s3672, 256, %s8, [#allocation3], 128, 128, 8
    $region37: #{tpu_custom_call.1} parent=1 // pred_fallthru
      _
    // Predicated region
    $region38: #{tpu_custom_call.1} parent=1 // pred_check
      _
    $region39: #{tpu_custom_call.1} parent=1 // pred_check_branch
      %3679 = sbr.rel (0) target = $region41
    $region40: #{tpu_custom_call.1} parent=1 // pred_region
      %3680 = dma.done [#allocation3], 256
    $region41: #{tpu_custom_call.1} parent=1 // pred_fallthru
      _
    %3681 = vsyncpa [#allocation3], 1

</llo_original>
